<compile_context>
chip_gen: v6e
topology: v6e:2x2x1
jax: 0.10.0
libtpu: 0.0.40
codegen_flags: <defaults>
</compile_context>

<pallas_src>
import jax
import jax.numpy as jnp
from jax.experimental import pallas as pl
from jax.experimental.pallas import tpu as pltpu


def _grid_split(batch):
    """Return (num_grid_steps, batch_per_step).

    Dual-TensorCore chips (v4 / v5p / v7x) keep >=2 parallel grid steps so both cores are
    used; single-TC chips (v5e / v6e) fold the whole batch into one grid step.
    """
    try:
        kind = jax.devices()[0].device_kind.lower()
    except Exception:  # pragma: no cover - defensive
        kind = ""
    dual_core = any(tag in kind for tag in ("v4", "v5p", "v7"))
    if dual_core and batch > 1:
        if batch % 2 == 0 and batch // 2 <= 8:
            return 2, batch // 2
        return batch, 1
    if batch <= 8:
        return 1, batch
    return batch, 1


def make_conv1_kernel(bblk, hpool, wpool, wstrip=512):
    """Conv2d(1->Cout,k=2,s=1,p=1)+BN(eval, folded)+ReLU+MaxPool2d(2,stride=1), fully fused.

    x_ref  : (bblk, Hpad, Wpad)          zero-padded input planes
    w_ref  : (Cout, 4)                   BN-folded conv taps, column = kh*2 + kw (Cin == 1)
    b_ref  : (Cout, 1)                   BN-folded bias
    out_ref: (bblk, Hpool, Cout, Wpool)  sublane-dense (Cout on sublanes, W on lanes)
    """
    # Lane-aligned pooled-output strips: (start, width).  Start is a multiple of 512 so both
    # the input row loads and the output stores begin on a lane-tile boundary.
    strips = [(s0, min(wstrip, wpool - s0)) for s0 in range(0, wpool, wstrip)]

    def kernel(x_ref, w_ref, b_ref, out_ref):
        w00 = w_ref[:, 0:1]
        w01 = w_ref[:, 1:2]
        w10 = w_ref[:, 2:3]
        w11 = w_ref[:, 3:4]
        bias = b_ref[...]

        for b in range(bblk):                       # static unroll over the batch block
            for (s0, ws) in strips:                 # static unroll over W strips
                wloc = ws + 2                       # padded input columns needed by strip

                def load(h, _b=b, _s0=s0, _ws=ws, _wloc=wloc):
                    # One VMEM load per padded row per strip; both conv taps are derived
                    # in-register from the same row value.
                    r = x_ref[_b, h:h + 1, _s0:_s0 + _wloc]      # (1, ws+2)
                    return r[:, 0:_ws + 1], r[:, 1:_ws + 2]      # left tap, right tap

                def conv_bn_relu(top, bot):
                    t0, t1 = top
                    b0, b1 = bot
                    acc = w00 * t0 + w01 * t1 + w10 * b0 + w11 * b1   # (Cout, ws+1), VPU
                    return jnp.maximum(acc + bias, 0.0)               # folded BN + ReLU

                top = load(0)
                bot = load(1)
                prev = conv_bn_relu(top, bot)                    # conv row 0
                for ho in range(hpool):                          # streaming 2x2/s1 max pool
                    top, bot = bot, load(ho + 2)                 # carry rows: 1 load/row
                    cur = conv_bn_relu(top, bot)                 # conv row ho+1
                    rm = jnp.maximum(prev, cur)                  # pool over H
                    out_ref[b, ho, :, s0:s0 + ws] = jnp.maximum( # pool over W, dense store
                        rm[:, 0:ws], rm[:, 1:ws + 1])
                    prev = cur

    return kernel


def cnn_forward(params, x):
    """Forward of the PyTorch CNN module (conv1 branch). x is NCHW (B, 1, H, W) -> NCHW."""
    B, Cin, H, W = x.shape
    assert Cin == 1
    Cout = params["w"].shape[0]
    Hpad, Wpad = H + 2, W + 2            # Conv2d padding=1
    Hpool, Wpool = H, W                  # conv (H+1, W+1) -> MaxPool2d(2, stride=1)

    xpad = jnp.pad(x[:, 0], ((0, 0), (1, 1), (1, 1)))            # (B, Hpad, Wpad)

    # Fold eval-mode BatchNorm into the conv taps / bias (64 scalars, done once in wrapper).
    scale = params["bn_scale"].reshape(Cout, 1)
    w_taps = params["w"].reshape(Cout, 4) * scale                # OIHW -> (co, kh*2+kw)
    bias = params["b"].reshape(Cout, 1) * scale + params["bn_shift"].reshape(Cout, 1)

    nb, bblk = _grid_split(B)
    kernel = make_conv1_kernel(bblk, Hpool, Wpool)

    out = pl.pallas_call(
        kernel,
        grid=(nb,),
        in_specs=[
            pl.BlockSpec((bblk, Hpad, Wpad), lambda i: (i, 0, 0)),
            pl.BlockSpec((Cout, 4), lambda i: (0, 0)),
            pl.BlockSpec((Cout, 1), lambda i: (0, 0)),
        ],
        out_specs=pl.BlockSpec((bblk, Hpool, Cout, Wpool), lambda i: (i, 0, 0, 0)),
        out_shape=jax.ShapeDtypeStruct((B, Hpool, Cout, Wpool), jnp.float32),
        compiler_params=pltpu.CompilerParams(dimension_semantics=("parallel",)),
    )(xpad, w_taps, bias)

    # Layout plumbing back to NCHW (kernel stores sublane/lane-dense (B, Hpool, Cout, Wpool)).
    return jnp.transpose(out, (0, 2, 1, 3))


# ------------------------------ parameters -----------------------------------
# TODO(synk): BatchNorm2d is folded in eval/inference mode (running stats, gamma=1, beta=0,
#             mean=0, var=1), not training-mode batch statistics.
def init_params(key, Cout=16):
    kw, kb = jax.random.split(key)
    w = jax.random.normal(kw, (Cout, 1, 2, 2), dtype=jnp.float32) * 0.05  # torch OIHW
    b = jax.random.normal(kb, (Cout,), dtype=jnp.float32) * 0.05
    eps = 1e-5
    gamma = jnp.ones((Cout,), jnp.float32)
    beta = jnp.zeros((Cout,), jnp.float32)
    mean = jnp.zeros((Cout,), jnp.float32)
    var = jnp.ones((Cout,), jnp.float32)
    scale = gamma / jnp.sqrt(var + eps)
    shift = beta - mean * scale
    return {"w": w, "b": b, "bn_scale": scale, "bn_shift": shift}


# --------------------------- pure-JAX reference -------------------------------
def reference_forward(params, x):
    y = jax.lax.conv_general_dilated(
        x, params["w"], window_strides=(1, 1), padding=((1, 1), (1, 1)),
        dimension_numbers=("NCHW", "OIHW", "NCHW"),
        precision=jax.lax.Precision.HIGHEST)
    y = y + params["b"].reshape(1, -1, 1, 1)
    y = y * params["bn_scale"].reshape(1, -1, 1, 1) + params["bn_shift"].reshape(1, -1, 1, 1)
    y = jnp.maximum(y, 0.0)
    y = jax.lax.reduce_window(y, -jnp.inf, jax.lax.max,
                              window_dimensions=(1, 1, 2, 2),
                              window_strides=(1, 1, 1, 1),
                              padding="VALID")
    return y


if __name__ == "__main__":
    key = jax.random.PRNGKey(0)
    kx, kp = jax.random.split(key)
    B, H, W = 2, 2, 1140                      # the CNNLDA test feeds NCHW (B, 1, 2, 1140)
    x = jax.random.normal(kx, (B, 1, H, W), dtype=jnp.float32)
    params = init_params(kp, Cout=16)

    fwd = jax.jit(cnn_forward)
    out = jax.block_until_ready(fwd(params, x))

    assert out.shape == (B, 16, H, W)
    assert bool(jnp.all(jnp.isfinite(out)))

    ref = jax.block_until_ready(reference_forward(params, x))
    max_err = float(jnp.max(jnp.abs(out - ref)))
    assert max_err < 1e-4, max_err

    print("KERNEL_OK")
</pallas_src>

<mosaic_0001>
module attributes {stable_mosaic.version = 11 : i64} {
  func.func @kernel(%arg0: i32, %arg1: memref<2x4x1142xf32, #tpu.memory_space<vmem>>, %arg2: memref<16x4xf32, #tpu.memory_space<vmem>>, %arg3: memref<16x1xf32, #tpu.memory_space<vmem>>, %arg4: memref<2x2x16x1140xf32, #tpu.memory_space<vmem>>) attributes {dimension_semantics = [#tpu.dimension_semantics<parallel>], iteration_bounds = array<i64: 1>, scalar_prefetch = 0 : i64, scratch_operands = 0 : i64, tpu.core_type = #tpu.core_type<tc>, window_params = [{transform_indices = @transform_0, window_bounds = array<i64: 2, 4, 1142>}, {pipeline_mode = #tpu.pipeline_mode<synchronous>, transform_indices = @transform_1, window_bounds = array<i64: 16, 4>}, {pipeline_mode = #tpu.pipeline_mode<synchronous>, transform_indices = @transform_2, window_bounds = array<i64: 16, 1>}, {transform_indices = @transform_3, window_bounds = array<i64: 2, 2, 16, 1140>}]} {
    %c0 = arith.constant 0 : index
    %c0_0 = arith.constant 0 : index
    %0 = vector.load %arg2[%c0, %c0_0] : memref<16x4xf32, #tpu.memory_space<vmem>>, vector<16x1xf32>
    %c0_1 = arith.constant 0 : index
    %c1 = arith.constant 1 : index
    %1 = vector.load %arg2[%c0_1, %c1] : memref<16x4xf32, #tpu.memory_space<vmem>>, vector<16x1xf32>
    %c0_2 = arith.constant 0 : index
    %c2 = arith.constant 2 : index
    %2 = vector.load %arg2[%c0_2, %c2] : memref<16x4xf32, #tpu.memory_space<vmem>>, vector<16x1xf32>
    %c0_3 = arith.constant 0 : index
    %c3 = arith.constant 3 : index
    %3 = vector.load %arg2[%c0_3, %c3] : memref<16x4xf32, #tpu.memory_space<vmem>>, vector<16x1xf32>
    %c0_4 = arith.constant 0 : index
    %c0_5 = arith.constant 0 : index
    %4 = vector.load %arg3[%c0_4, %c0_5] : memref<16x1xf32, #tpu.memory_space<vmem>>, vector<16x1xf32>
    %c0_6 = arith.constant 0 : index
    %c0_7 = arith.constant 0 : index
    %c0_8 = arith.constant 0 : index
    %5 = vector.load %arg1[%c0_6, %c0_7, %c0_8] : memref<2x4x1142xf32, #tpu.memory_space<vmem>>, vector<1x1x514xf32>
    %6 = vector.shape_cast %5 : vector<1x1x514xf32> to vector<1x514xf32>
    %7 = vector.extract_strided_slice %6 {offsets = [0, 0], sizes = [1, 513], strides = [1, 1]} : vector<1x514xf32> to vector<1x513xf32>
    %8 = vector.extract_strided_slice %6 {offsets = [0, 1], sizes = [1, 513], strides = [1, 1]} : vector<1x514xf32> to vector<1x513xf32>
    %c0_9 = arith.constant 0 : index
    %c1_10 = arith.constant 1 : index
    %c0_11 = arith.constant 0 : index
    %9 = vector.load %arg1[%c0_9, %c1_10, %c0_11] : memref<2x4x1142xf32, #tpu.memory_space<vmem>>, vector<1x1x514xf32>
    %10 = vector.shape_cast %9 : vector<1x1x514xf32> to vector<1x514xf32>
    %11 = vector.extract_strided_slice %10 {offsets = [0, 0], sizes = [1, 513], strides = [1, 1]} : vector<1x514xf32> to vector<1x513xf32>
    %12 = vector.extract_strided_slice %10 {offsets = [0, 1], sizes = [1, 513], strides = [1, 1]} : vector<1x514xf32> to vector<1x513xf32>
    %13 = vector.broadcast %0 : vector<16x1xf32> to vector<16x513xf32>
    %14 = vector.broadcast %7 : vector<1x513xf32> to vector<16x513xf32>
    %15 = arith.mulf %13, %14 : vector<16x513xf32>
    %16 = vector.broadcast %1 : vector<16x1xf32> to vector<16x513xf32>
    %17 = vector.broadcast %8 : vector<1x513xf32> to vector<16x513xf32>
    %18 = arith.mulf %16, %17 : vector<16x513xf32>
    %19 = arith.addf %15, %18 : vector<16x513xf32>
    %20 = vector.broadcast %2 : vector<16x1xf32> to vector<16x513xf32>
    %21 = vector.broadcast %11 : vector<1x513xf32> to vector<16x513xf32>
    %22 = arith.mulf %20, %21 : vector<16x513xf32>
    %23 = arith.addf %19, %22 : vector<16x513xf32>
    %24 = vector.broadcast %3 : vector<16x1xf32> to vector<16x513xf32>
    %25 = vector.broadcast %12 : vector<1x513xf32> to vector<16x513xf32>
    %26 = arith.mulf %24, %25 : vector<16x513xf32>
    %27 = arith.addf %23, %26 : vector<16x513xf32>
    %28 = vector.broadcast %4 : vector<16x1xf32> to vector<16x513xf32>
    %29 = arith.addf %27, %28 : vector<16x513xf32>
    %cst = arith.constant 0.000000e+00 : f32
    %30 = vector.broadcast %cst : f32 to vector<16x513xf32>
    %31 = arith.maximumf %29, %30 : vector<16x513xf32>
    %c0_12 = arith.constant 0 : index
    %c2_13 = arith.constant 2 : index
    %c0_14 = arith.constant 0 : index
    %32 = vector.load %arg1[%c0_12, %c2_13, %c0_14] : memref<2x4x1142xf32, #tpu.memory_space<vmem>>, vector<1x1x514xf32>
    %33 = vector.shape_cast %32 : vector<1x1x514xf32> to vector<1x514xf32>
    %34 = vector.extract_strided_slice %33 {offsets = [0, 0], sizes = [1, 513], strides = [1, 1]} : vector<1x514xf32> to vector<1x513xf32>
    %35 = vector.extract_strided_slice %33 {offsets = [0, 1], sizes = [1, 513], strides = [1, 1]} : vector<1x514xf32> to vector<1x513xf32>
    %36 = vector.broadcast %0 : vector<16x1xf32> to vector<16x513xf32>
    %37 = vector.broadcast %11 : vector<1x513xf32> to vector<16x513xf32>
    %38 = arith.mulf %36, %37 : vector<16x513xf32>
    %39 = vector.broadcast %1 : vector<16x1xf32> to vector<16x513xf32>
    %40 = vector.broadcast %12 : vector<1x513xf32> to vector<16x513xf32>
    %41 = arith.mulf %39, %40 : vector<16x513xf32>
    %42 = arith.addf %38, %41 : vector<16x513xf32>
    %43 = vector.broadcast %2 : vector<16x1xf32> to vector<16x513xf32>
    %44 = vector.broadcast %34 : vector<1x513xf32> to vector<16x513xf32>
    %45 = arith.mulf %43, %44 : vector<16x513xf32>
    %46 = arith.addf %42, %45 : vector<16x513xf32>
    %47 = vector.broadcast %3 : vector<16x1xf32> to vector<16x513xf32>
    %48 = vector.broadcast %35 : vector<1x513xf32> to vector<16x513xf32>
    %49 = arith.mulf %47, %48 : vector<16x513xf32>
    %50 = arith.addf %46, %49 : vector<16x513xf32>
    %51 = vector.broadcast %4 : vector<16x1xf32> to vector<16x513xf32>
    %52 = arith.addf %50, %51 : vector<16x513xf32>
    %cst_15 = arith.constant 0.000000e+00 : f32
    %53 = vector.broadcast %cst_15 : f32 to vector<16x513xf32>
    %54 = arith.maximumf %52, %53 : vector<16x513xf32>
    %55 = arith.maximumf %31, %54 : vector<16x513xf32>
    %56 = vector.extract_strided_slice %55 {offsets = [0, 0], sizes = [16, 512], strides = [1, 1]} : vector<16x513xf32> to vector<16x512xf32>
    %57 = vector.extract_strided_slice %55 {offsets = [0, 1], sizes = [16, 512], strides = [1, 1]} : vector<16x513xf32> to vector<16x512xf32>
    %58 = arith.maximumf %56, %57 : vector<16x512xf32>
    %c0_16 = arith.constant 0 : index
    %c0_17 = arith.constant 0 : index
    %c0_18 = arith.constant 0 : index
    %c0_19 = arith.constant 0 : index
    %59 = vector.load %arg4[%c0_16, %c0_17, %c0_18, %c0_19] : memref<2x2x16x1140xf32, #tpu.memory_space<vmem>>, vector<1x1x16x512xf32>
    %60 = vector.shape_cast %59 : vector<1x1x16x512xf32> to vector<16x512xf32>
    %61 = vector.shape_cast %58 : vector<16x512xf32> to vector<1x1x16x512xf32>
    tpu.vector_store %arg4[%c0_16, %c0_17, %c0_18, %c0_19], %61 {strides = array<i32>} : memref<2x2x16x1140xf32, #tpu.memory_space<vmem>>, vector<1x1x16x512xf32>,
    %c0_20 = arith.constant 0 : index
    %c3_21 = arith.constant 3 : index
    %c0_22 = arith.constant 0 : index
    %62 = vector.load %arg1[%c0_20, %c3_21, %c0_22] : memref<2x4x1142xf32, #tpu.memory_space<vmem>>, vector<1x1x514xf32>
    %63 = vector.shape_cast %62 : vector<1x1x514xf32> to vector<1x514xf32>
    %64 = vector.extract_strided_slice %63 {offsets = [0, 0], sizes = [1, 513], strides = [1, 1]} : vector<1x514xf32> to vector<1x513xf32>
    %65 = vector.extract_strided_slice %63 {offsets = [0, 1], sizes = [1, 513], strides = [1, 1]} : vector<1x514xf32> to vector<1x513xf32>
    %66 = vector.broadcast %0 : vector<16x1xf32> to vector<16x513xf32>
    %67 = vector.broadcast %34 : vector<1x513xf32> to vector<16x513xf32>
    %68 = arith.mulf %66, %67 : vector<16x513xf32>
    %69 = vector.broadcast %1 : vector<16x1xf32> to vector<16x513xf32>
    %70 = vector.broadcast %35 : vector<1x513xf32> to vector<16x513xf32>
    %71 = arith.mulf %69, %70 : vector<16x513xf32>
    %72 = arith.addf %68, %71 : vector<16x513xf32>
    %73 = vector.broadcast %2 : vector<16x1xf32> to vector<16x513xf32>
    %74 = vector.broadcast %64 : vector<1x513xf32> to vector<16x513xf32>
    %75 = arith.mulf %73, %74 : vector<16x513xf32>
    %76 = arith.addf %72, %75 : vector<16x513xf32>
    %77 = vector.broadcast %3 : vector<16x1xf32> to vector<16x513xf32>
    %78 = vector.broadcast %65 : vector<1x513xf32> to vector<16x513xf32>
    %79 = arith.mulf %77, %78 : vector<16x513xf32>
    %80 = arith.addf %76, %79 : vector<16x513xf32>
    %81 = vector.broadcast %4 : vector<16x1xf32> to vector<16x513xf32>
    %82 = arith.addf %80, %81 : vector<16x513xf32>
    %cst_23 = arith.constant 0.000000e+00 : f32
    %83 = vector.broadcast %cst_23 : f32 to vector<16x513xf32>
    %84 = arith.maximumf %82, %83 : vector<16x513xf32>
    %85 = arith.maximumf %54, %84 : vector<16x513xf32>
    %86 = vector.extract_strided_slice %85 {offsets = [0, 0], sizes = [16, 512], strides = [1, 1]} : vector<16x513xf32> to vector<16x512xf32>
    %87 = vector.extract_strided_slice %85 {offsets = [0, 1], sizes = [16, 512], strides = [1, 1]} : vector<16x513xf32> to vector<16x512xf32>
    %88 = arith.maximumf %86, %87 : vector<16x512xf32>
    %c0_24 = arith.constant 0 : index
    %c1_25 = arith.constant 1 : index
    %c0_26 = arith.constant 0 : index
    %c0_27 = arith.constant 0 : index
    %89 = vector.load %arg4[%c0_24, %c1_25, %c0_26, %c0_27] : memref<2x2x16x1140xf32, #tpu.memory_space<vmem>>, vector<1x1x16x512xf32>
    %90 = vector.shape_cast %89 : vector<1x1x16x512xf32> to vector<16x512xf32>
    %91 = vector.shape_cast %88 : vector<16x512xf32> to vector<1x1x16x512xf32>
    tpu.vector_store %arg4[%c0_24, %c1_25, %c0_26, %c0_27], %91 {strides = array<i32>} : memref<2x2x16x1140xf32, #tpu.memory_space<vmem>>, vector<1x1x16x512xf32>,
    %c0_28 = arith.constant 0 : index
    %c0_29 = arith.constant 0 : index
    %c512 = arith.constant 512 : index
    %92 = vector.load %arg1[%c0_28, %c0_29, %c512] : memref<2x4x1142xf32, #tpu.memory_space<vmem>>, vector<1x1x514xf32>
    %93 = vector.shape_cast %92 : vector<1x1x514xf32> to vector<1x514xf32>
    %94 = vector.extract_strided_slice %93 {offsets = [0, 0], sizes = [1, 513], strides = [1, 1]} : vector<1x514xf32> to vector<1x513xf32>
    %95 = vector.extract_strided_slice %93 {offsets = [0, 1], sizes = [1, 513], strides = [1, 1]} : vector<1x514xf32> to vector<1x513xf32>
    %c0_30 = arith.constant 0 : index
    %c1_31 = arith.constant 1 : index
    %c512_32 = arith.constant 512 : index
    %96 = vector.load %arg1[%c0_30, %c1_31, %c512_32] : memref<2x4x1142xf32, #tpu.memory_space<vmem>>, vector<1x1x514xf32>
    %97 = vector.shape_cast %96 : vector<1x1x514xf32> to vector<1x514xf32>
    %98 = vector.extract_strided_slice %97 {offsets = [0, 0], sizes = [1, 513], strides = [1, 1]} : vector<1x514xf32> to vector<1x513xf32>
    %99 = vector.extract_strided_slice %97 {offsets = [0, 1], sizes = [1, 513], strides = [1, 1]} : vector<1x514xf32> to vector<1x513xf32>
    %100 = vector.broadcast %0 : vector<16x1xf32> to vector<16x513xf32>
    %101 = vector.broadcast %94 : vector<1x513xf32> to vector<16x513xf32>
    %102 = arith.mulf %100, %101 : vector<16x513xf32>
    %103 = vector.broadcast %1 : vector<16x1xf32> to vector<16x513xf32>
    %104 = vector.broadcast %95 : vector<1x513xf32> to vector<16x513xf32>
    %105 = arith.mulf %103, %104 : vector<16x513xf32>
    %106 = arith.addf %102, %105 : vector<16x513xf32>
    %107 = vector.broadcast %2 : vector<16x1xf32> to vector<16x513xf32>
    %108 = vector.broadcast %98 : vector<1x513xf32> to vector<16x513xf32>
    %109 = arith.mulf %107, %108 : vector<16x513xf32>
    %110 = arith.addf %106, %109 : vector<16x513xf32>
    %111 = vector.broadcast %3 : vector<16x1xf32> to vector<16x513xf32>
    %112 = vector.broadcast %99 : vector<1x513xf32> to vector<16x513xf32>
    %113 = arith.mulf %111, %112 : vector<16x513xf32>
    %114 = arith.addf %110, %113 : vector<16x513xf32>
    %115 = vector.broadcast %4 : vector<16x1xf32> to vector<16x513xf32>
    %116 = arith.addf %114, %115 : vector<16x513xf32>
    %cst_33 = arith.constant 0.000000e+00 : f32
    %117 = vector.broadcast %cst_33 : f32 to vector<16x513xf32>
    %118 = arith.maximumf %116, %117 : vector<16x513xf32>
    %c0_34 = arith.constant 0 : index
    %c2_35 = arith.constant 2 : index
    %c512_36 = arith.constant 512 : index
    %119 = vector.load %arg1[%c0_34, %c2_35, %c512_36] : memref<2x4x1142xf32, #tpu.memory_space<vmem>>, vector<1x1x514xf32>
    %120 = vector.shape_cast %119 : vector<1x1x514xf32> to vector<1x514xf32>
    %121 = vector.extract_strided_slice %120 {offsets = [0, 0], sizes = [1, 513], strides = [1, 1]} : vector<1x514xf32> to vector<1x513xf32>
    %122 = vector.extract_strided_slice %120 {offsets = [0, 1], sizes = [1, 513], strides = [1, 1]} : vector<1x514xf32> to vector<1x513xf32>
    %123 = vector.broadcast %0 : vector<16x1xf32> to vector<16x513xf32>
    %124 = vector.broadcast %98 : vector<1x513xf32> to vector<16x513xf32>
    %125 = arith.mulf %123, %124 : vector<16x513xf32>
    %126 = vector.broadcast %1 : vector<16x1xf32> to vector<16x513xf32>
    %127 = vector.broadcast %99 : vector<1x513xf32> to vector<16x513xf32>
    %128 = arith.mulf %126, %127 : vector<16x513xf32>
    %129 = arith.addf %125, %128 : vector<16x513xf32>
    %130 = vector.broadcast %2 : vector<16x1xf32> to vector<16x513xf32>
    %131 = vector.broadcast %121 : vector<1x513xf32> to vector<16x513xf32>
    %132 = arith.mulf %130, %131 : vector<16x513xf32>
    %133 = arith.addf %129, %132 : vector<16x513xf32>
    %134 = vector.broadcast %3 : vector<16x1xf32> to vector<16x513xf32>
    %135 = vector.broadcast %122 : vector<1x513xf32> to vector<16x513xf32>
    %136 = arith.mulf %134, %135 : vector<16x513xf32>
    %137 = arith.addf %133, %136 : vector<16x513xf32>
    %138 = vector.broadcast %4 : vector<16x1xf32> to vector<16x513xf32>
    %139 = arith.addf %137, %138 : vector<16x513xf32>
    %cst_37 = arith.constant 0.000000e+00 : f32
    %140 = vector.broadcast %cst_37 : f32 to vector<16x513xf32>
    %141 = arith.maximumf %139, %140 : vector<16x513xf32>
    %142 = arith.maximumf %118, %141 : vector<16x513xf32>
    %143 = vector.extract_strided_slice %142 {offsets = [0, 0], sizes = [16, 512], strides = [1, 1]} : vector<16x513xf32> to vector<16x512xf32>
    %144 = vector.extract_strided_slice %142 {offsets = [0, 1], sizes = [16, 512], strides = [1, 1]} : vector<16x513xf32> to vector<16x512xf32>
    %145 = arith.maximumf %143, %144 : vector<16x512xf32>
    %c0_38 = arith.constant 0 : index
    %c0_39 = arith.constant 0 : index
    %c0_40 = arith.constant 0 : index
    %c512_41 = arith.constant 512 : index
    %146 = vector.load %arg4[%c0_38, %c0_39, %c0_40, %c512_41] : memref<2x2x16x1140xf32, #tpu.memory_space<vmem>>, vector<1x1x16x512xf32>
    %147 = vector.shape_cast %146 : vector<1x1x16x512xf32> to vector<16x512xf32>
    %148 = vector.shape_cast %145 : vector<16x512xf32> to vector<1x1x16x512xf32>
    tpu.vector_store %arg4[%c0_38, %c0_39, %c0_40, %c512_41], %148 {strides = array<i32>} : memref<2x2x16x1140xf32, #tpu.memory_space<vmem>>, vector<1x1x16x512xf32>,
    %c0_42 = arith.constant 0 : index
    %c3_43 = arith.constant 3 : index
    %c512_44 = arith.constant 512 : index
    %149 = vector.load %arg1[%c0_42, %c3_43, %c512_44] : memref<2x4x1142xf32, #tpu.memory_space<vmem>>, vector<1x1x514xf32>
    %150 = vector.shape_cast %149 : vector<1x1x514xf32> to vector<1x514xf32>
    %151 = vector.extract_strided_slice %150 {offsets = [0, 0], sizes = [1, 513], strides = [1, 1]} : vector<1x514xf32> to vector<1x513xf32>
    %152 = vector.extract_strided_slice %150 {offsets = [0, 1], sizes = [1, 513], strides = [1, 1]} : vector<1x514xf32> to vector<1x513xf32>
    %153 = vector.broadcast %0 : vector<16x1xf32> to vector<16x513xf32>
    %154 = vector.broadcast %121 : vector<1x513xf32> to vector<16x513xf32>
    %155 = arith.mulf %153, %154 : vector<16x513xf32>
    %156 = vector.broadcast %1 : vector<16x1xf32> to vector<16x513xf32>
    %157 = vector.broadcast %122 : vector<1x513xf32> to vector<16x513xf32>
    %158 = arith.mulf %156, %157 : vector<16x513xf32>
    %159 = arith.addf %155, %158 : vector<16x513xf32>
    %160 = vector.broadcast %2 : vector<16x1xf32> to vector<16x513xf32>
    %161 = vector.broadcast %151 : vector<1x513xf32> to vector<16x513xf32>
    %162 = arith.mulf %160, %161 : vector<16x513xf32>
    %163 = arith.addf %159, %162 : vector<16x513xf32>
    %164 = vector.broadcast %3 : vector<16x1xf32> to vector<16x513xf32>
    %165 = vector.broadcast %152 : vector<1x513xf32> to vector<16x513xf32>
    %166 = arith.mulf %164, %165 : vector<16x513xf32>
    %167 = arith.addf %163, %166 : vector<16x513xf32>
    %168 = vector.broadcast %4 : vector<16x1xf32> to vector<16x513xf32>
    %169 = arith.addf %167, %168 : vector<16x513xf32>
    %cst_45 = arith.constant 0.000000e+00 : f32
    %170 = vector.broadcast %cst_45 : f32 to vector<16x513xf32>
    %171 = arith.maximumf %169, %170 : vector<16x513xf32>
    %172 = arith.maximumf %141, %171 : vector<16x513xf32>
    %173 = vector.extract_strided_slice %172 {offsets = [0, 0], sizes = [16, 512], strides = [1, 1]} : vector<16x513xf32> to vector<16x512xf32>
    %174 = vector.extract_strided_slice %172 {offsets = [0, 1], sizes = [16, 512], strides = [1, 1]} : vector<16x513xf32> to vector<16x512xf32>
    %175 = arith.maximumf %173, %174 : vector<16x512xf32>
    %c0_46 = arith.constant 0 : index
    %c1_47 = arith.constant 1 : index
    %c0_48 = arith.constant 0 : index
    %c512_49 = arith.constant 512 : index
    %176 = vector.load %arg4[%c0_46, %c1_47, %c0_48, %c512_49] : memref<2x2x16x1140xf32, #tpu.memory_space<vmem>>, vector<1x1x16x512xf32>
    %177 = vector.shape_cast %176 : vector<1x1x16x512xf32> to vector<16x512xf32>
    %178 = vector.shape_cast %175 : vector<16x512xf32> to vector<1x1x16x512xf32>
    tpu.vector_store %arg4[%c0_46, %c1_47, %c0_48, %c512_49], %178 {strides = array<i32>} : memref<2x2x16x1140xf32, #tpu.memory_space<vmem>>, vector<1x1x16x512xf32>,
    %c0_50 = arith.constant 0 : index
    %c0_51 = arith.constant 0 : index
    %c1024 = arith.constant 1024 : index
    %179 = vector.load %arg1[%c0_50, %c0_51, %c1024] : memref<2x4x1142xf32, #tpu.memory_space<vmem>>, vector<1x1x118xf32>
    %180 = vector.shape_cast %179 : vector<1x1x118xf32> to vector<1x118xf32>
    %181 = vector.extract_strided_slice %180 {offsets = [0, 0], sizes = [1, 117], strides = [1, 1]} : vector<1x118xf32> to vector<1x117xf32>
    %182 = vector.extract_strided_slice %180 {offsets = [0, 1], sizes = [1, 117], strides = [1, 1]} : vector<1x118xf32> to vector<1x117xf32>
    %c0_52 = arith.constant 0 : index
    %c1_53 = arith.constant 1 : index
    %c1024_54 = arith.constant 1024 : index
    %183 = vector.load %arg1[%c0_52, %c1_53, %c1024_54] : memref<2x4x1142xf32, #tpu.memory_space<vmem>>, vector<1x1x118xf32>
    %184 = vector.shape_cast %183 : vector<1x1x118xf32> to vector<1x118xf32>
    %185 = vector.extract_strided_slice %184 {offsets = [0, 0], sizes = [1, 117], strides = [1, 1]} : vector<1x118xf32> to vector<1x117xf32>
    %186 = vector.extract_strided_slice %184 {offsets = [0, 1], sizes = [1, 117], strides = [1, 1]} : vector<1x118xf32> to vector<1x117xf32>
    %187 = vector.broadcast %0 : vector<16x1xf32> to vector<16x117xf32>
    %188 = vector.broadcast %181 : vector<1x117xf32> to vector<16x117xf32>
    %189 = arith.mulf %187, %188 : vector<16x117xf32>
    %190 = vector.broadcast %1 : vector<16x1xf32> to vector<16x117xf32>
    %191 = vector.broadcast %182 : vector<1x117xf32> to vector<16x117xf32>
    %192 = arith.mulf %190, %191 : vector<16x117xf32>
    %193 = arith.addf %189, %192 : vector<16x117xf32>
    %194 = vector.broadcast %2 : vector<16x1xf32> to vector<16x117xf32>
    %195 = vector.broadcast %185 : vector<1x117xf32> to vector<16x117xf32>
    %196 = arith.mulf %194, %195 : vector<16x117xf32>
    %197 = arith.addf %193, %196 : vector<16x117xf32>
    %198 = vector.broadcast %3 : vector<16x1xf32> to vector<16x117xf32>
    %199 = vector.broadcast %186 : vector<1x117xf32> to vector<16x117xf32>
    %200 = arith.mulf %198, %199 : vector<16x117xf32>
    %201 = arith.addf %197, %200 : vector<16x117xf32>
    %202 = vector.broadcast %4 : vector<16x1xf32> to vector<16x117xf32>
    %203 = arith.addf %201, %202 : vector<16x117xf32>
    %cst_55 = arith.constant 0.000000e+00 : f32
    %204 = vector.broadcast %cst_55 : f32 to vector<16x117xf32>
    %205 = arith.maximumf %203, %204 : vector<16x117xf32>
    %c0_56 = arith.constant 0 : index
    %c2_57 = arith.constant 2 : index
    %c1024_58 = arith.constant 1024 : index
    %206 = vector.load %arg1[%c0_56, %c2_57, %c1024_58] : memref<2x4x1142xf32, #tpu.memory_space<vmem>>, vector<1x1x118xf32>
    %207 = vector.shape_cast %206 : vector<1x1x118xf32> to vector<1x118xf32>
    %208 = vector.extract_strided_slice %207 {offsets = [0, 0], sizes = [1, 117], strides = [1, 1]} : vector<1x118xf32> to vector<1x117xf32>
    %209 = vector.extract_strided_slice %207 {offsets = [0, 1], sizes = [1, 117], strides = [1, 1]} : vector<1x118xf32> to vector<1x117xf32>
    %210 = vector.broadcast %0 : vector<16x1xf32> to vector<16x117xf32>
    %211 = vector.broadcast %185 : vector<1x117xf32> to vector<16x117xf32>
    %212 = arith.mulf %210, %211 : vector<16x117xf32>
    %213 = vector.broadcast %1 : vector<16x1xf32> to vector<16x117xf32>
    %214 = vector.broadcast %186 : vector<1x117xf32> to vector<16x117xf32>
    %215 = arith.mulf %213, %214 : vector<16x117xf32>
    %216 = arith.addf %212, %215 : vector<16x117xf32>
    %217 = vector.broadcast %2 : vector<16x1xf32> to vector<16x117xf32>
    %218 = vector.broadcast %208 : vector<1x117xf32> to vector<16x117xf32>
    %219 = arith.mulf %217, %218 : vector<16x117xf32>
    %220 = arith.addf %216, %219 : vector<16x117xf32>
    %221 = vector.broadcast %3 : vector<16x1xf32> to vector<16x117xf32>
    %222 = vector.broadcast %209 : vector<1x117xf32> to vector<16x117xf32>
    %223 = arith.mulf %221, %222 : vector<16x117xf32>
    %224 = arith.addf %220, %223 : vector<16x117xf32>
    %225 = vector.broadcast %4 : vector<16x1xf32> to vector<16x117xf32>
    %226 = arith.addf %224, %225 : vector<16x117xf32>
    %cst_59 = arith.constant 0.000000e+00 : f32
    %227 = vector.broadcast %cst_59 : f32 to vector<16x117xf32>
    %228 = arith.maximumf %226, %227 : vector<16x117xf32>
    %229 = arith.maximumf %205, %228 : vector<16x117xf32>
    %230 = vector.extract_strided_slice %229 {offsets = [0, 0], sizes = [16, 116], strides = [1, 1]} : vector<16x117xf32> to vector<16x116xf32>
    %231 = vector.extract_strided_slice %229 {offsets = [0, 1], sizes = [16, 116], strides = [1, 1]} : vector<16x117xf32> to vector<16x116xf32>
    %232 = arith.maximumf %230, %231 : vector<16x116xf32>
    %c0_60 = arith.constant 0 : index
    %c0_61 = arith.constant 0 : index
    %c0_62 = arith.constant 0 : index
    %c1024_63 = arith.constant 1024 : index
    %233 = vector.load %arg4[%c0_60, %c0_61, %c0_62, %c1024_63] : memref<2x2x16x1140xf32, #tpu.memory_space<vmem>>, vector<1x1x16x116xf32>
    %234 = vector.shape_cast %233 : vector<1x1x16x116xf32> to vector<16x116xf32>
    %235 = vector.shape_cast %232 : vector<16x116xf32> to vector<1x1x16x116xf32>
    tpu.vector_store %arg4[%c0_60, %c0_61, %c0_62, %c1024_63], %235 {strides = array<i32>} : memref<2x2x16x1140xf32, #tpu.memory_space<vmem>>, vector<1x1x16x116xf32>,
    %c0_64 = arith.constant 0 : index
    %c3_65 = arith.constant 3 : index
    %c1024_66 = arith.constant 1024 : index
    %236 = vector.load %arg1[%c0_64, %c3_65, %c1024_66] : memref<2x4x1142xf32, #tpu.memory_space<vmem>>, vector<1x1x118xf32>
    %237 = vector.shape_cast %236 : vector<1x1x118xf32> to vector<1x118xf32>
    %238 = vector.extract_strided_slice %237 {offsets = [0, 0], sizes = [1, 117], strides = [1, 1]} : vector<1x118xf32> to vector<1x117xf32>
    %239 = vector.extract_strided_slice %237 {offsets = [0, 1], sizes = [1, 117], strides = [1, 1]} : vector<1x118xf32> to vector<1x117xf32>
    %240 = vector.broadcast %0 : vector<16x1xf32> to vector<16x117xf32>
    %241 = vector.broadcast %208 : vector<1x117xf32> to vector<16x117xf32>
    %242 = arith.mulf %240, %241 : vector<16x117xf32>
    %243 = vector.broadcast %1 : vector<16x1xf32> to vector<16x117xf32>
    %244 = vector.broadcast %209 : vector<1x117xf32> to vector<16x117xf32>
    %245 = arith.mulf %243, %244 : vector<16x117xf32>
    %246 = arith.addf %242, %245 : vector<16x117xf32>
    %247 = vector.broadcast %2 : vector<16x1xf32> to vector<16x117xf32>
    %248 = vector.broadcast %238 : vector<1x117xf32> to vector<16x117xf32>
    %249 = arith.mulf %247, %248 : vector<16x117xf32>
    %250 = arith.addf %246, %249 : vector<16x117xf32>
    %251 = vector.broadcast %3 : vector<16x1xf32> to vector<16x117xf32>
    %252 = vector.broadcast %239 : vector<1x117xf32> to vector<16x117xf32>
    %253 = arith.mulf %251, %252 : vector<16x117xf32>
    %254 = arith.addf %250, %253 : vector<16x117xf32>
    %255 = vector.broadcast %4 : vector<16x1xf32> to vector<16x117xf32>
    %256 = arith.addf %254, %255 : vector<16x117xf32>
    %cst_67 = arith.constant 0.000000e+00 : f32
    %257 = vector.broadcast %cst_67 : f32 to vector<16x117xf32>
    %258 = arith.maximumf %256, %257 : vector<16x117xf32>
    %259 = arith.maximumf %228, %258 : vector<16x117xf32>
    %260 = vector.extract_strided_slice %259 {offsets = [0, 0], sizes = [16, 116], strides = [1, 1]} : vector<16x117xf32> to vector<16x116xf32>
    %261 = vector.extract_strided_slice %259 {offsets = [0, 1], sizes = [16, 116], strides = [1, 1]} : vector<16x117xf32> to vector<16x116xf32>
    %262 = arith.maximumf %260, %261 : vector<16x116xf32>
    %c0_68 = arith.constant 0 : index
    %c1_69 = arith.constant 1 : index
    %c0_70 = arith.constant 0 : index
    %c1024_71 = arith.constant 1024 : index
    %263 = vector.load %arg4[%c0_68, %c1_69, %c0_70, %c1024_71] : memref<2x2x16x1140xf32, #tpu.memory_space<vmem>>, vector<1x1x16x116xf32>
    %264 = vector.shape_cast %263 : vector<1x1x16x116xf32> to vector<16x116xf32>
    %265 = vector.shape_cast %262 : vector<16x116xf32> to vector<1x1x16x116xf32>
    tpu.vector_store %arg4[%c0_68, %c1_69, %c0_70, %c1024_71], %265 {strides = array<i32>} : memref<2x2x16x1140xf32, #tpu.memory_space<vmem>>, vector<1x1x16x116xf32>,
    %c1_72 = arith.constant 1 : index
    %c0_73 = arith.constant 0 : index
    %c0_74 = arith.constant 0 : index
    %266 = vector.load %arg1[%c1_72, %c0_73, %c0_74] : memref<2x4x1142xf32, #tpu.memory_space<vmem>>, vector<1x1x514xf32>
    %267 = vector.shape_cast %266 : vector<1x1x514xf32> to vector<1x514xf32>
    %268 = vector.extract_strided_slice %267 {offsets = [0, 0], sizes = [1, 513], strides = [1, 1]} : vector<1x514xf32> to vector<1x513xf32>
    %269 = vector.extract_strided_slice %267 {offsets = [0, 1], sizes = [1, 513], strides = [1, 1]} : vector<1x514xf32> to vector<1x513xf32>
    %c1_75 = arith.constant 1 : index
    %c1_76 = arith.constant 1 : index
    %c0_77 = arith.constant 0 : index
    %270 = vector.load %arg1[%c1_75, %c1_76, %c0_77] : memref<2x4x1142xf32, #tpu.memory_space<vmem>>, vector<1x1x514xf32>
    %271 = vector.shape_cast %270 : vector<1x1x514xf32> to vector<1x514xf32>
    %272 = vector.extract_strided_slice %271 {offsets = [0, 0], sizes = [1, 513], strides = [1, 1]} : vector<1x514xf32> to vector<1x513xf32>
    %273 = vector.extract_strided_slice %271 {offsets = [0, 1], sizes = [1, 513], strides = [1, 1]} : vector<1x514xf32> to vector<1x513xf32>
    %274 = vector.broadcast %0 : vector<16x1xf32> to vector<16x513xf32>
    %275 = vector.broadcast %268 : vector<1x513xf32> to vector<16x513xf32>
    %276 = arith.mulf %274, %275 : vector<16x513xf32>
    %277 = vector.broadcast %1 : vector<16x1xf32> to vector<16x513xf32>
    %278 = vector.broadcast %269 : vector<1x513xf32> to vector<16x513xf32>
    %279 = arith.mulf %277, %278 : vector<16x513xf32>
    %280 = arith.addf %276, %279 : vector<16x513xf32>
    %281 = vector.broadcast %2 : vector<16x1xf32> to vector<16x513xf32>
    %282 = vector.broadcast %272 : vector<1x513xf32> to vector<16x513xf32>
    %283 = arith.mulf %281, %282 : vector<16x513xf32>
    %284 = arith.addf %280, %283 : vector<16x513xf32>
    %285 = vector.broadcast %3 : vector<16x1xf32> to vector<16x513xf32>
    %286 = vector.broadcast %273 : vector<1x513xf32> to vector<16x513xf32>
    %287 = arith.mulf %285, %286 : vector<16x513xf32>
    %288 = arith.addf %284, %287 : vector<16x513xf32>
    %289 = vector.broadcast %4 : vector<16x1xf32> to vector<16x513xf32>
    %290 = arith.addf %288, %289 : vector<16x513xf32>
    %cst_78 = arith.constant 0.000000e+00 : f32
    %291 = vector.broadcast %cst_78 : f32 to vector<16x513xf32>
    %292 = arith.maximumf %290, %291 : vector<16x513xf32>
    %c1_79 = arith.constant 1 : index
    %c2_80 = arith.constant 2 : index
    %c0_81 = arith.constant 0 : index
    %293 = vector.load %arg1[%c1_79, %c2_80, %c0_81] : memref<2x4x1142xf32, #tpu.memory_space<vmem>>, vector<1x1x514xf32>
    %294 = vector.shape_cast %293 : vector<1x1x514xf32> to vector<1x514xf32>
    %295 = vector.extract_strided_slice %294 {offsets = [0, 0], sizes = [1, 513], strides = [1, 1]} : vector<1x514xf32> to vector<1x513xf32>
    %296 = vector.extract_strided_slice %294 {offsets = [0, 1], sizes = [1, 513], strides = [1, 1]} : vector<1x514xf32> to vector<1x513xf32>
    %297 = vector.broadcast %0 : vector<16x1xf32> to vector<16x513xf32>
    %298 = vector.broadcast %272 : vector<1x513xf32> to vector<16x513xf32>
    %299 = arith.mulf %297, %298 : vector<16x513xf32>
    %300 = vector.broadcast %1 : vector<16x1xf32> to vector<16x513xf32>
    %301 = vector.broadcast %273 : vector<1x513xf32> to vector<16x513xf32>
    %302 = arith.mulf %300, %301 : vector<16x513xf32>
    %303 = arith.addf %299, %302 : vector<16x513xf32>
    %304 = vector.broadcast %2 : vector<16x1xf32> to vector<16x513xf32>
    %305 = vector.broadcast %295 : vector<1x513xf32> to vector<16x513xf32>
    %306 = arith.mulf %304, %305 : vector<16x513xf32>
    %307 = arith.addf %303, %306 : vector<16x513xf32>
    %308 = vector.broadcast %3 : vector<16x1xf32> to vector<16x513xf32>
    %309 = vector.broadcast %296 : vector<1x513xf32> to vector<16x513xf32>
    %310 = arith.mulf %308, %309 : vector<16x513xf32>
    %311 = arith.addf %307, %310 : vector<16x513xf32>
    %312 = vector.broadcast %4 : vector<16x1xf32> to vector<16x513xf32>
    %313 = arith.addf %311, %312 : vector<16x513xf32>
    %cst_82 = arith.constant 0.000000e+00 : f32
    %314 = vector.broadcast %cst_82 : f32 to vector<16x513xf32>
    %315 = arith.maximumf %313, %314 : vector<16x513xf32>
    %316 = arith.maximumf %292, %315 : vector<16x513xf32>
    %317 = vector.extract_strided_slice %316 {offsets = [0, 0], sizes = [16, 512], strides = [1, 1]} : vector<16x513xf32> to vector<16x512xf32>
    %318 = vector.extract_strided_slice %316 {offsets = [0, 1], sizes = [16, 512], strides = [1, 1]} : vector<16x513xf32> to vector<16x512xf32>
    %319 = arith.maximumf %317, %318 : vector<16x512xf32>
    %c1_83 = arith.constant 1 : index
    %c0_84 = arith.constant 0 : index
    %c0_85 = arith.constant 0 : index
    %c0_86 = arith.constant 0 : index
    %320 = vector.load %arg4[%c1_83, %c0_84, %c0_85, %c0_86] : memref<2x2x16x1140xf32, #tpu.memory_space<vmem>>, vector<1x1x16x512xf32>
    %321 = vector.shape_cast %320 : vector<1x1x16x512xf32> to vector<16x512xf32>
    %322 = vector.shape_cast %319 : vector<16x512xf32> to vector<1x1x16x512xf32>
    tpu.vector_store %arg4[%c1_83, %c0_84, %c0_85, %c0_86], %322 {strides = array<i32>} : memref<2x2x16x1140xf32, #tpu.memory_space<vmem>>, vector<1x1x16x512xf32>,
    %c1_87 = arith.constant 1 : index
    %c3_88 = arith.constant 3 : index
    %c0_89 = arith.constant 0 : index
    %323 = vector.load %arg1[%c1_87, %c3_88, %c0_89] : memref<2x4x1142xf32, #tpu.memory_space<vmem>>, vector<1x1x514xf32>
    %324 = vector.shape_cast %323 : vector<1x1x514xf32> to vector<1x514xf32>
    %325 = vector.extract_strided_slice %324 {offsets = [0, 0], sizes = [1, 513], strides = [1, 1]} : vector<1x514xf32> to vector<1x513xf32>
    %326 = vector.extract_strided_slice %324 {offsets = [0, 1], sizes = [1, 513], strides = [1, 1]} : vector<1x514xf32> to vector<1x513xf32>
    %327 = vector.broadcast %0 : vector<16x1xf32> to vector<16x513xf32>
    %328 = vector.broadcast %295 : vector<1x513xf32> to vector<16x513xf32>
    %329 = arith.mulf %327, %328 : vector<16x513xf32>
    %330 = vector.broadcast %1 : vector<16x1xf32> to vector<16x513xf32>
    %331 = vector.broadcast %296 : vector<1x513xf32> to vector<16x513xf32>
    %332 = arith.mulf %330, %331 : vector<16x513xf32>
    %333 = arith.addf %329, %332 : vector<16x513xf32>
    %334 = vector.broadcast %2 : vector<16x1xf32> to vector<16x513xf32>
    %335 = vector.broadcast %325 : vector<1x513xf32> to vector<16x513xf32>
    %336 = arith.mulf %334, %335 : vector<16x513xf32>
    %337 = arith.addf %333, %336 : vector<16x513xf32>
    %338 = vector.broadcast %3 : vector<16x1xf32> to vector<16x513xf32>
    %339 = vector.broadcast %326 : vector<1x513xf32> to vector<16x513xf32>
    %340 = arith.mulf %338, %339 : vector<16x513xf32>
    %341 = arith.addf %337, %340 : vector<16x513xf32>
    %342 = vector.broadcast %4 : vector<16x1xf32> to vector<16x513xf32>
    %343 = arith.addf %341, %342 : vector<16x513xf32>
    %cst_90 = arith.constant 0.000000e+00 : f32
    %344 = vector.broadcast %cst_90 : f32 to vector<16x513xf32>
    %345 = arith.maximumf %343, %344 : vector<16x513xf32>
    %346 = arith.maximumf %315, %345 : vector<16x513xf32>
    %347 = vector.extract_strided_slice %346 {offsets = [0, 0], sizes = [16, 512], strides = [1, 1]} : vector<16x513xf32> to vector<16x512xf32>
    %348 = vector.extract_strided_slice %346 {offsets = [0, 1], sizes = [16, 512], strides = [1, 1]} : vector<16x513xf32> to vector<16x512xf32>
    %349 = arith.maximumf %347, %348 : vector<16x512xf32>
    %c1_91 = arith.constant 1 : index
    %c1_92 = arith.constant 1 : index
    %c0_93 = arith.constant 0 : index
    %c0_94 = arith.constant 0 : index
    %350 = vector.load %arg4[%c1_91, %c1_92, %c0_93, %c0_94] : memref<2x2x16x1140xf32, #tpu.memory_space<vmem>>, vector<1x1x16x512xf32>
    %351 = vector.shape_cast %350 : vector<1x1x16x512xf32> to vector<16x512xf32>
    %352 = vector.shape_cast %349 : vector<16x512xf32> to vector<1x1x16x512xf32>
    tpu.vector_store %arg4[%c1_91, %c1_92, %c0_93, %c0_94], %352 {strides = array<i32>} : memref<2x2x16x1140xf32, #tpu.memory_space<vmem>>, vector<1x1x16x512xf32>,
    %c1_95 = arith.constant 1 : index
    %c0_96 = arith.constant 0 : index
    %c512_97 = arith.constant 512 : index
    %353 = vector.load %arg1[%c1_95, %c0_96, %c512_97] : memref<2x4x1142xf32, #tpu.memory_space<vmem>>, vector<1x1x514xf32>
    %354 = vector.shape_cast %353 : vector<1x1x514xf32> to vector<1x514xf32>
    %355 = vector.extract_strided_slice %354 {offsets = [0, 0], sizes = [1, 513], strides = [1, 1]} : vector<1x514xf32> to vector<1x513xf32>
    %356 = vector.extract_strided_slice %354 {offsets = [0, 1], sizes = [1, 513], strides = [1, 1]} : vector<1x514xf32> to vector<1x513xf32>
    %c1_98 = arith.constant 1 : index
    %c1_99 = arith.constant 1 : index
    %c512_100 = arith.constant 512 : index
    %357 = vector.load %arg1[%c1_98, %c1_99, %c512_100] : memref<2x4x1142xf32, #tpu.memory_space<vmem>>, vector<1x1x514xf32>
    %358 = vector.shape_cast %357 : vector<1x1x514xf32> to vector<1x514xf32>
    %359 = vector.extract_strided_slice %358 {offsets = [0, 0], sizes = [1, 513], strides = [1, 1]} : vector<1x514xf32> to vector<1x513xf32>
    %360 = vector.extract_strided_slice %358 {offsets = [0, 1], sizes = [1, 513], strides = [1, 1]} : vector<1x514xf32> to vector<1x513xf32>
    %361 = vector.broadcast %0 : vector<16x1xf32> to vector<16x513xf32>
    %362 = vector.broadcast %355 : vector<1x513xf32> to vector<16x513xf32>
    %363 = arith.mulf %361, %362 : vector<16x513xf32>
    %364 = vector.broadcast %1 : vector<16x1xf32> to vector<16x513xf32>
    %365 = vector.broadcast %356 : vector<1x513xf32> to vector<16x513xf32>
    %366 = arith.mulf %364, %365 : vector<16x513xf32>
    %367 = arith.addf %363, %366 : vector<16x513xf32>
    %368 = vector.broadcast %2 : vector<16x1xf32> to vector<16x513xf32>
    %369 = vector.broadcast %359 : vector<1x513xf32> to vector<16x513xf32>
    %370 = arith.mulf %368, %369 : vector<16x513xf32>
    %371 = arith.addf %367, %370 : vector<16x513xf32>
    %372 = vector.broadcast %3 : vector<16x1xf32> to vector<16x513xf32>
    %373 = vector.broadcast %360 : vector<1x513xf32> to vector<16x513xf32>
    %374 = arith.mulf %372, %373 : vector<16x513xf32>
    %375 = arith.addf %371, %374 : vector<16x513xf32>
    %376 = vector.broadcast %4 : vector<16x1xf32> to vector<16x513xf32>
    %377 = arith.addf %375, %376 : vector<16x513xf32>
    %cst_101 = arith.constant 0.000000e+00 : f32
    %378 = vector.broadcast %cst_101 : f32 to vector<16x513xf32>
    %379 = arith.maximumf %377, %378 : vector<16x513xf32>
    %c1_102 = arith.constant 1 : index
    %c2_103 = arith.constant 2 : index
    %c512_104 = arith.constant 512 : index
    %380 = vector.load %arg1[%c1_102, %c2_103, %c512_104] : memref<2x4x1142xf32, #tpu.memory_space<vmem>>, vector<1x1x514xf32>
    %381 = vector.shape_cast %380 : vector<1x1x514xf32> to vector<1x514xf32>
    %382 = vector.extract_strided_slice %381 {offsets = [0, 0], sizes = [1, 513], strides = [1, 1]} : vector<1x514xf32> to vector<1x513xf32>
    %383 = vector.extract_strided_slice %381 {offsets = [0, 1], sizes = [1, 513], strides = [1, 1]} : vector<1x514xf32> to vector<1x513xf32>
    %384 = vector.broadcast %0 : vector<16x1xf32> to vector<16x513xf32>
    %385 = vector.broadcast %359 : vector<1x513xf32> to vector<16x513xf32>
    %386 = arith.mulf %384, %385 : vector<16x513xf32>
    %387 = vector.broadcast %1 : vector<16x1xf32> to vector<16x513xf32>
    %388 = vector.broadcast %360 : vector<1x513xf32> to vector<16x513xf32>
    %389 = arith.mulf %387, %388 : vector<16x513xf32>
    %390 = arith.addf %386, %389 : vector<16x513xf32>
    %391 = vector.broadcast %2 : vector<16x1xf32> to vector<16x513xf32>
    %392 = vector.broadcast %382 : vector<1x513xf32> to vector<16x513xf32>
    %393 = arith.mulf %391, %392 : vector<16x513xf32>
    %394 = arith.addf %390, %393 : vector<16x513xf32>
    %395 = vector.broadcast %3 : vector<16x1xf32> to vector<16x513xf32>
    %396 = vector.broadcast %383 : vector<1x513xf32> to vector<16x513xf32>
    %397 = arith.mulf %395, %396 : vector<16x513xf32>
    %398 = arith.addf %394, %397 : vector<16x513xf32>
    %399 = vector.broadcast %4 : vector<16x1xf32> to vector<16x513xf32>
    %400 = arith.addf %398, %399 : vector<16x513xf32>
    %cst_105 = arith.constant 0.000000e+00 : f32
    %401 = vector.broadcast %cst_105 : f32 to vector<16x513xf32>
    %402 = arith.maximumf %400, %401 : vector<16x513xf32>
    %403 = arith.maximumf %379, %402 : vector<16x513xf32>
    %404 = vector.extract_strided_slice %403 {offsets = [0, 0], sizes = [16, 512], strides = [1, 1]} : vector<16x513xf32> to vector<16x512xf32>
    %405 = vector.extract_strided_slice %403 {offsets = [0, 1], sizes = [16, 512], strides = [1, 1]} : vector<16x513xf32> to vector<16x512xf32>
    %406 = arith.maximumf %404, %405 : vector<16x512xf32>
    %c1_106 = arith.constant 1 : index
    %c0_107 = arith.constant 0 : index
    %c0_108 = arith.constant 0 : index
    %c512_109 = arith.constant 512 : index
    %407 = vector.load %arg4[%c1_106, %c0_107, %c0_108, %c512_109] : memref<2x2x16x1140xf32, #tpu.memory_space<vmem>>, vector<1x1x16x512xf32>
    %408 = vector.shape_cast %407 : vector<1x1x16x512xf32> to vector<16x512xf32>
    %409 = vector.shape_cast %406 : vector<16x512xf32> to vector<1x1x16x512xf32>
    tpu.vector_store %arg4[%c1_106, %c0_107, %c0_108, %c512_109], %409 {strides = array<i32>} : memref<2x2x16x1140xf32, #tpu.memory_space<vmem>>, vector<1x1x16x512xf32>,
    %c1_110 = arith.constant 1 : index
    %c3_111 = arith.constant 3 : index
    %c512_112 = arith.constant 512 : index
    %410 = vector.load %arg1[%c1_110, %c3_111, %c512_112] : memref<2x4x1142xf32, #tpu.memory_space<vmem>>, vector<1x1x514xf32>
    %411 = vector.shape_cast %410 : vector<1x1x514xf32> to vector<1x514xf32>
    %412 = vector.extract_strided_slice %411 {offsets = [0, 0], sizes = [1, 513], strides = [1, 1]} : vector<1x514xf32> to vector<1x513xf32>
    %413 = vector.extract_strided_slice %411 {offsets = [0, 1], sizes = [1, 513], strides = [1, 1]} : vector<1x514xf32> to vector<1x513xf32>
    %414 = vector.broadcast %0 : vector<16x1xf32> to vector<16x513xf32>
    %415 = vector.broadcast %382 : vector<1x513xf32> to vector<16x513xf32>
    %416 = arith.mulf %414, %415 : vector<16x513xf32>
    %417 = vector.broadcast %1 : vector<16x1xf32> to vector<16x513xf32>
    %418 = vector.broadcast %383 : vector<1x513xf32> to vector<16x513xf32>
    %419 = arith.mulf %417, %418 : vector<16x513xf32>
    %420 = arith.addf %416, %419 : vector<16x513xf32>
    %421 = vector.broadcast %2 : vector<16x1xf32> to vector<16x513xf32>
    %422 = vector.broadcast %412 : vector<1x513xf32> to vector<16x513xf32>
    %423 = arith.mulf %421, %422 : vector<16x513xf32>
    %424 = arith.addf %420, %423 : vector<16x513xf32>
    %425 = vector.broadcast %3 : vector<16x1xf32> to vector<16x513xf32>
    %426 = vector.broadcast %413 : vector<1x513xf32> to vector<16x513xf32>
    %427 = arith.mulf %425, %426 : vector<16x513xf32>
    %428 = arith.addf %424, %427 : vector<16x513xf32>
    %429 = vector.broadcast %4 : vector<16x1xf32> to vector<16x513xf32>
    %430 = arith.addf %428, %429 : vector<16x513xf32>
    %cst_113 = arith.constant 0.000000e+00 : f32
    %431 = vector.broadcast %cst_113 : f32 to vector<16x513xf32>
    %432 = arith.maximumf %430, %431 : vector<16x513xf32>
    %433 = arith.maximumf %402, %432 : vector<16x513xf32>
    %434 = vector.extract_strided_slice %433 {offsets = [0, 0], sizes = [16, 512], strides = [1, 1]} : vector<16x513xf32> to vector<16x512xf32>
    %435 = vector.extract_strided_slice %433 {offsets = [0, 1], sizes = [16, 512], strides = [1, 1]} : vector<16x513xf32> to vector<16x512xf32>
    %436 = arith.maximumf %434, %435 : vector<16x512xf32>
    %c1_114 = arith.constant 1 : index
    %c1_115 = arith.constant 1 : index
    %c0_116 = arith.constant 0 : index
    %c512_117 = arith.constant 512 : index
    %437 = vector.load %arg4[%c1_114, %c1_115, %c0_116, %c512_117] : memref<2x2x16x1140xf32, #tpu.memory_space<vmem>>, vector<1x1x16x512xf32>
    %438 = vector.shape_cast %437 : vector<1x1x16x512xf32> to vector<16x512xf32>
    %439 = vector.shape_cast %436 : vector<16x512xf32> to vector<1x1x16x512xf32>
    tpu.vector_store %arg4[%c1_114, %c1_115, %c0_116, %c512_117], %439 {strides = array<i32>} : memref<2x2x16x1140xf32, #tpu.memory_space<vmem>>, vector<1x1x16x512xf32>,
    %c1_118 = arith.constant 1 : index
    %c0_119 = arith.constant 0 : index
    %c1024_120 = arith.constant 1024 : index
    %440 = vector.load %arg1[%c1_118, %c0_119, %c1024_120] : memref<2x4x1142xf32, #tpu.memory_space<vmem>>, vector<1x1x118xf32>
    %441 = vector.shape_cast %440 : vector<1x1x118xf32> to vector<1x118xf32>
    %442 = vector.extract_strided_slice %441 {offsets = [0, 0], sizes = [1, 117], strides = [1, 1]} : vector<1x118xf32> to vector<1x117xf32>
    %443 = vector.extract_strided_slice %441 {offsets = [0, 1], sizes = [1, 117], strides = [1, 1]} : vector<1x118xf32> to vector<1x117xf32>
    %c1_121 = arith.constant 1 : index
    %c1_122 = arith.constant 1 : index
    %c1024_123 = arith.constant 1024 : index
    %444 = vector.load %arg1[%c1_121, %c1_122, %c1024_123] : memref<2x4x1142xf32, #tpu.memory_space<vmem>>, vector<1x1x118xf32>
    %445 = vector.shape_cast %444 : vector<1x1x118xf32> to vector<1x118xf32>
    %446 = vector.extract_strided_slice %445 {offsets = [0, 0], sizes = [1, 117], strides = [1, 1]} : vector<1x118xf32> to vector<1x117xf32>
    %447 = vector.extract_strided_slice %445 {offsets = [0, 1], sizes = [1, 117], strides = [1, 1]} : vector<1x118xf32> to vector<1x117xf32>
    %448 = vector.broadcast %0 : vector<16x1xf32> to vector<16x117xf32>
    %449 = vector.broadcast %442 : vector<1x117xf32> to vector<16x117xf32>
    %450 = arith.mulf %448, %449 : vector<16x117xf32>
    %451 = vector.broadcast %1 : vector<16x1xf32> to vector<16x117xf32>
    %452 = vector.broadcast %443 : vector<1x117xf32> to vector<16x117xf32>
    %453 = arith.mulf %451, %452 : vector<16x117xf32>
    %454 = arith.addf %450, %453 : vector<16x117xf32>
    %455 = vector.broadcast %2 : vector<16x1xf32> to vector<16x117xf32>
    %456 = vector.broadcast %446 : vector<1x117xf32> to vector<16x117xf32>
    %457 = arith.mulf %455, %456 : vector<16x117xf32>
    %458 = arith.addf %454, %457 : vector<16x117xf32>
    %459 = vector.broadcast %3 : vector<16x1xf32> to vector<16x117xf32>
    %460 = vector.broadcast %447 : vector<1x117xf32> to vector<16x117xf32>
    %461 = arith.mulf %459, %460 : vector<16x117xf32>
    %462 = arith.addf %458, %461 : vector<16x117xf32>
    %463 = vector.broadcast %4 : vector<16x1xf32> to vector<16x117xf32>
    %464 = arith.addf %462, %463 : vector<16x117xf32>
    %cst_124 = arith.constant 0.000000e+00 : f32
    %465 = vector.broadcast %cst_124 : f32 to vector<16x117xf32>
    %466 = arith.maximumf %464, %465 : vector<16x117xf32>
    %c1_125 = arith.constant 1 : index
    %c2_126 = arith.constant 2 : index
    %c1024_127 = arith.constant 1024 : index
    %467 = vector.load %arg1[%c1_125, %c2_126, %c1024_127] : memref<2x4x1142xf32, #tpu.memory_space<vmem>>, vector<1x1x118xf32>
    %468 = vector.shape_cast %467 : vector<1x1x118xf32> to vector<1x118xf32>
    %469 = vector.extract_strided_slice %468 {offsets = [0, 0], sizes = [1, 117], strides = [1, 1]} : vector<1x118xf32> to vector<1x117xf32>
    %470 = vector.extract_strided_slice %468 {offsets = [0, 1], sizes = [1, 117], strides = [1, 1]} : vector<1x118xf32> to vector<1x117xf32>
    %471 = vector.broadcast %0 : vector<16x1xf32> to vector<16x117xf32>
    %472 = vector.broadcast %446 : vector<1x117xf32> to vector<16x117xf32>
    %473 = arith.mulf %471, %472 : vector<16x117xf32>
    %474 = vector.broadcast %1 : vector<16x1xf32> to vector<16x117xf32>
    %475 = vector.broadcast %447 : vector<1x117xf32> to vector<16x117xf32>
    %476 = arith.mulf %474, %475 : vector<16x117xf32>
    %477 = arith.addf %473, %476 : vector<16x117xf32>
    %478 = vector.broadcast %2 : vector<16x1xf32> to vector<16x117xf32>
    %479 = vector.broadcast %469 : vector<1x117xf32> to vector<16x117xf32>
    %480 = arith.mulf %478, %479 : vector<16x117xf32>
    %481 = arith.addf %477, %480 : vector<16x117xf32>
    %482 = vector.broadcast %3 : vector<16x1xf32> to vector<16x117xf32>
    %483 = vector.broadcast %470 : vector<1x117xf32> to vector<16x117xf32>
    %484 = arith.mulf %482, %483 : vector<16x117xf32>
    %485 = arith.addf %481, %484 : vector<16x117xf32>
    %486 = vector.broadcast %4 : vector<16x1xf32> to vector<16x117xf32>
    %487 = arith.addf %485, %486 : vector<16x117xf32>
    %cst_128 = arith.constant 0.000000e+00 : f32
    %488 = vector.broadcast %cst_128 : f32 to vector<16x117xf32>
    %489 = arith.maximumf %487, %488 : vector<16x117xf32>
    %490 = arith.maximumf %466, %489 : vector<16x117xf32>
    %491 = vector.extract_strided_slice %490 {offsets = [0, 0], sizes = [16, 116], strides = [1, 1]} : vector<16x117xf32> to vector<16x116xf32>
    %492 = vector.extract_strided_slice %490 {offsets = [0, 1], sizes = [16, 116], strides = [1, 1]} : vector<16x117xf32> to vector<16x116xf32>
    %493 = arith.maximumf %491, %492 : vector<16x116xf32>
    %c1_129 = arith.constant 1 : index
    %c0_130 = arith.constant 0 : index
    %c0_131 = arith.constant 0 : index
    %c1024_132 = arith.constant 1024 : index
    %494 = vector.load %arg4[%c1_129, %c0_130, %c0_131, %c1024_132] : memref<2x2x16x1140xf32, #tpu.memory_space<vmem>>, vector<1x1x16x116xf32>
    %495 = vector.shape_cast %494 : vector<1x1x16x116xf32> to vector<16x116xf32>
    %496 = vector.shape_cast %493 : vector<16x116xf32> to vector<1x1x16x116xf32>
    tpu.vector_store %arg4[%c1_129, %c0_130, %c0_131, %c1024_132], %496 {strides = array<i32>} : memref<2x2x16x1140xf32, #tpu.memory_space<vmem>>, vector<1x1x16x116xf32>,
    %c1_133 = arith.constant 1 : index
    %c3_134 = arith.constant 3 : index
    %c1024_135 = arith.constant 1024 : index
    %497 = vector.load %arg1[%c1_133, %c3_134, %c1024_135] : memref<2x4x1142xf32, #tpu.memory_space<vmem>>, vector<1x1x118xf32>
    %498 = vector.shape_cast %497 : vector<1x1x118xf32> to vector<1x118xf32>
    %499 = vector.extract_strided_slice %498 {offsets = [0, 0], sizes = [1, 117], strides = [1, 1]} : vector<1x118xf32> to vector<1x117xf32>
    %500 = vector.extract_strided_slice %498 {offsets = [0, 1], sizes = [1, 117], strides = [1, 1]} : vector<1x118xf32> to vector<1x117xf32>
    %501 = vector.broadcast %0 : vector<16x1xf32> to vector<16x117xf32>
    %502 = vector.broadcast %469 : vector<1x117xf32> to vector<16x117xf32>
    %503 = arith.mulf %501, %502 : vector<16x117xf32>
    %504 = vector.broadcast %1 : vector<16x1xf32> to vector<16x117xf32>
    %505 = vector.broadcast %470 : vector<1x117xf32> to vector<16x117xf32>
    %506 = arith.mulf %504, %505 : vector<16x117xf32>
    %507 = arith.addf %503, %506 : vector<16x117xf32>
    %508 = vector.broadcast %2 : vector<16x1xf32> to vector<16x117xf32>
    %509 = vector.broadcast %499 : vector<1x117xf32> to vector<16x117xf32>
    %510 = arith.mulf %508, %509 : vector<16x117xf32>
    %511 = arith.addf %507, %510 : vector<16x117xf32>
    %512 = vector.broadcast %3 : vector<16x1xf32> to vector<16x117xf32>
    %513 = vector.broadcast %500 : vector<1x117xf32> to vector<16x117xf32>
    %514 = arith.mulf %512, %513 : vector<16x117xf32>
    %515 = arith.addf %511, %514 : vector<16x117xf32>
    %516 = vector.broadcast %4 : vector<16x1xf32> to vector<16x117xf32>
    %517 = arith.addf %515, %516 : vector<16x117xf32>
    %cst_136 = arith.constant 0.000000e+00 : f32
    %518 = vector.broadcast %cst_136 : f32 to vector<16x117xf32>
    %519 = arith.maximumf %517, %518 : vector<16x117xf32>
    %520 = arith.maximumf %489, %519 : vector<16x117xf32>
    %521 = vector.extract_strided_slice %520 {offsets = [0, 0], sizes = [16, 116], strides = [1, 1]} : vector<16x117xf32> to vector<16x116xf32>
    %522 = vector.extract_strided_slice %520 {offsets = [0, 1], sizes = [16, 116], strides = [1, 1]} : vector<16x117xf32> to vector<16x116xf32>
    %523 = arith.maximumf %521, %522 : vector<16x116xf32>
    %c1_137 = arith.constant 1 : index
    %c1_138 = arith.constant 1 : index
    %c0_139 = arith.constant 0 : index
    %c1024_140 = arith.constant 1024 : index
    %524 = vector.load %arg4[%c1_137, %c1_138, %c0_139, %c1024_140] : memref<2x2x16x1140xf32, #tpu.memory_space<vmem>>, vector<1x1x16x116xf32>
    %525 = vector.shape_cast %524 : vector<1x1x16x116xf32> to vector<16x116xf32>
    %526 = vector.shape_cast %523 : vector<16x116xf32> to vector<1x1x16x116xf32>
    tpu.vector_store %arg4[%c1_137, %c1_138, %c0_139, %c1024_140], %526 {strides = array<i32>} : memref<2x2x16x1140xf32, #tpu.memory_space<vmem>>, vector<1x1x16x116xf32>,
    return
  }
  func.func @transform_0(%arg0: i32) -> (i32, i32, i32) {
    %c0_i32 = arith.constant 0 : i32
    %c0_i32_0 = arith.constant 0 : i32
    %c0_i32_1 = arith.constant 0 : i32
    return %arg0, %c0_i32, %c0_i32_0 : i32, i32, i32
  }
  func.func @transform_1(%arg0: i32) -> (i32, i32) {
    %c0_i32 = arith.constant 0 : i32
    %c0_i32_0 = arith.constant 0 : i32
    %c0_i32_1 = arith.constant 0 : i32
    return %c0_i32, %c0_i32_0 : i32, i32
  }
  func.func @transform_2(%arg0: i32) -> (i32, i32) {
    %c0_i32 = arith.constant 0 : i32
    %c0_i32_0 = arith.constant 0 : i32
    %c0_i32_1 = arith.constant 0 : i32
    return %c0_i32, %c0_i32_0 : i32, i32
  }
  func.func @transform_3(%arg0: i32) -> (i32, i32, i32, i32) {
    %c0_i32 = arith.constant 0 : i32
    %c0_i32_0 = arith.constant 0 : i32
    %c0_i32_1 = arith.constant 0 : i32
    %c0_i32_2 = arith.constant 0 : i32
    return %arg0, %c0_i32, %c0_i32_0, %c0_i32_1 : i32, i32, i32, i32
  }
}

</mosaic_0001>

<llo_original>
// kernel: cnn_forward.1
$region0: #{cnn_forward.1}
  #allocation0 [shape = 'u32[]', space=smem, size = 0x4, offset = 0x4, fixed_abs, tag = 'smem constant byte address 0x4 - core index']
  #allocation1 [shape = 'u32[144,128]{1,0:T(1,128)}', space=vmem, size = 0x12000, scoped, tag = 'internal scratch']
  %s0 = inlined_call_operand.vmem [shape: f32[2,4,1142], index: 0, kind: input, shape index: {}]
  %s1 = inlined_call_operand.vmem [shape: f32[16,4], index: 1, kind: input, shape index: {}]
  %s2 = inlined_call_operand.vmem [shape: f32[16,1], index: 2, kind: input, shape index: {}]
  %s3 = inlined_call_operand.vmem [shape: f32[2,2,16,1140], index: 3, kind: output, shape index: {}]
  %s4 = sld [smem:[#allocation0]]
  $region22: #{cnn_forward.1} parent=0
    _
  %s6 = ssub.s32 1, %s4
  %s7 = scalar_select 0, %s6, %s4
  // Predicated region
  $region2: #{cnn_forward.1} parent=0 // pred_check
    _
  $region3: #{cnn_forward.1} parent=0 // pred_check_branch
    %9 = sbr.rel (0) target = $region5
  $region4: #{cnn_forward.1} parent=0 // pred_region
    _
  $region5: #{cnn_forward.1} parent=0 // pred_fallthru
    _
  // Predicated region
  $region6: #{cnn_forward.1} parent=0 // pred_check
    _
  $region7: #{cnn_forward.1} parent=0 // pred_check_branch
    %11 = sbr.rel (0) target = $region9
  $region8: #{cnn_forward.1} parent=0 // pred_region
    _
  $region9: #{cnn_forward.1} parent=0 // pred_fallthru
    _
  // Predicated region
  $region10: #{cnn_forward.1} parent=0 // pred_check
    _
  $region11: #{cnn_forward.1} parent=0 // pred_check_branch
    %13 = sbr.rel (0) target = $region13
  $region12: #{cnn_forward.1} parent=0 // pred_region
    _
  $region13: #{cnn_forward.1} parent=0 // pred_fallthru
    _
  %v14 = vld [vmem:[%s1] sm:$0xff]
  %v15 = vld [vmem:[%s1 + $0x8] sm:$0xff]
  %v16 = vld [vmem:[%s2] sm:$0xff]
  %v17 = vld [vmem:[%s2 + $0x8] sm:$0xff]
  %v18 = vld [vmem:[%s0] ss:$4 sm:$0x1f]
  %s19 = scalar_lea.vmem %s0, 1
  %v20 = vld [vmem:[%s19] ss:$4 sm:$0x1f]
  %22 = vset.pattern.permute.xlu0 0
  %23 = vperm.xlu0 %22, %v14
  %v24 = vpop.permute.xlu0 %23
  %27 = vset.pattern.permute.xlu0 0
  %28 = vperm.xlu0 %27, %v15
  %v29 = vpop.permute.xlu0 %28
  %v32 = vlaneseq
  %v33 = vshrl.u32 %v32, 7
  %v34 = vsub.s32 0, %v33
  %v35 = vrot.slane %v18, %v34
  %v36 = vlaneseq
  %v37 = vshrl.u32 %v36, 7
  %v38 = vsub.s32 1, %v37
  %v39 = vrot.slane %v18, %v38
  %v40 = vlaneseq
  %v41 = vshrl.u32 %v40, 7
  %v42 = vsub.s32 2, %v41
  %v43 = vrot.slane %v18, %v42
  %v44 = vlaneseq
  %v45 = vshrl.u32 %v44, 7
  %v46 = vsub.s32 3, %v45
  %v47 = vrot.slane %v18, %v46
  %v48 = vlaneseq
  %v49 = vshrl.u32 %v48, 7
  %v50 = vsub.s32 4, %v49
  %v51 = vrot.slane %v18, %v50
  %v57 = vmul.f32 %v24, %v35
  %v58 = vmul.f32 %v24, %v39
  %v59 = vmul.f32 %v24, %v43
  %v60 = vmul.f32 %v24, %v47
  %v61 = vmul.f32 %v24, %v51
  %v62 = vmul.f32 %v29, %v35
  %v63 = vmul.f32 %v29, %v39
  %v64 = vmul.f32 %v29, %v43
  %v65 = vmul.f32 %v29, %v47
  %v66 = vmul.f32 %v29, %v51
  %67 = vset.pattern.permute.xlu0 1
  %68 = vperm.xlu0 %67, %v14
  %v69 = vpop.permute.xlu0 %68
  %71 = vset.pattern.permute.xlu0 1
  %72 = vperm.xlu0 %71, %v15
  %v73 = vpop.permute.xlu0 %72
  %v75 = vmul.f32 %v69, %v35
  %v76 = vmul.f32 %v69, %v39
  %v77 = vmul.f32 %v69, %v43
  %v78 = vmul.f32 %v69, %v47
  %v79 = vmul.f32 %v69, %v51
  %v80 = vmul.f32 %v73, %v35
  %v81 = vmul.f32 %v73, %v39
  %v82 = vmul.f32 %v73, %v43
  %v83 = vmul.f32 %v73, %v47
  %v84 = vmul.f32 %v73, %v51
  %95 = vrot.lane.b32.xlu0 %v75, 127
  %v96 = vpop.permute.xlu0 %95
  %97 = vrot.lane.b32.xlu0 %v76, 127
  %v98 = vpop.permute.xlu0 %97
  %99 = vrot.lane.b32.xlu0 %v77, 127
  %v100 = vpop.permute.xlu0 %99
  %101 = vrot.lane.b32.xlu0 %v78, 127
  %v102 = vpop.permute.xlu0 %101
  %103 = vrot.lane.b32.xlu0 %v79, 127
  %v104 = vpop.permute.xlu0 %103
  %105 = vrot.lane.b32.xlu0 %v80, 127
  %v106 = vpop.permute.xlu0 %105
  %107 = vrot.lane.b32.xlu0 %v81, 127
  %v108 = vpop.permute.xlu0 %107
  %109 = vrot.lane.b32.xlu0 %v82, 127
  %v110 = vpop.permute.xlu0 %109
  %111 = vrot.lane.b32.xlu0 %v83, 127
  %v112 = vpop.permute.xlu0 %111
  %113 = vrot.lane.b32.xlu0 %v84, 127
  %v114 = vpop.permute.xlu0 %113
  %vm115 = vcmask 1039360
  %v116 = vsel %vm115, %v96, %v98
  %v117 = vsel %vm115, %v98, %v100
  %v118 = vsel %vm115, %v100, %v102
  %v119 = vsel %vm115, %v102, %v104
  %v120 = vsel %vm115, %v106, %v108
  %v121 = vsel %vm115, %v108, %v110
  %v122 = vsel %vm115, %v110, %v112
  %v123 = vsel %vm115, %v112, %v114
  %v134 = vadd.f32 %v57, %v116
  %v135 = vadd.f32 %v58, %v117
  %v136 = vadd.f32 %v59, %v118
  %v137 = vadd.f32 %v60, %v119
  %v138 = vadd.f32 %v61, %v104
  %v139 = vadd.f32 %v62, %v120
  %v140 = vadd.f32 %v63, %v121
  %v141 = vadd.f32 %v64, %v122
  %v142 = vadd.f32 %v65, %v123
  %v143 = vadd.f32 %v66, %v114
  %144 = vset.pattern.permute.xlu0 2
  %145 = vperm.xlu0 %144, %v14
  %v146 = vpop.permute.xlu0 %145
  %148 = vset.pattern.permute.xlu0 2
  %149 = vperm.xlu0 %148, %v15
  %v150 = vpop.permute.xlu0 %149
  %v153 = vlaneseq
  %v154 = vshrl.u32 %v153, 7
  %v155 = vsub.s32 0, %v154
  %v156 = vrot.slane %v20, %v155
  %v157 = vlaneseq
  %v158 = vshrl.u32 %v157, 7
  %v159 = vsub.s32 1, %v158
  %v160 = vrot.slane %v20, %v159
  %v161 = vlaneseq
  %v162 = vshrl.u32 %v161, 7
  %v163 = vsub.s32 2, %v162
  %v164 = vrot.slane %v20, %v163
  %v165 = vlaneseq
  %v166 = vshrl.u32 %v165, 7
  %v167 = vsub.s32 3, %v166
  %v168 = vrot.slane %v20, %v167
  %v169 = vlaneseq
  %v170 = vshrl.u32 %v169, 7
  %v171 = vsub.s32 4, %v170
  %v172 = vrot.slane %v20, %v171
  %v178 = vmul.f32 %v146, %v156
  %v179 = vmul.f32 %v146, %v160
  %v180 = vmul.f32 %v146, %v164
  %v181 = vmul.f32 %v146, %v168
  %v182 = vmul.f32 %v146, %v172
  %v183 = vmul.f32 %v150, %v156
  %v184 = vmul.f32 %v150, %v160
  %v185 = vmul.f32 %v150, %v164
  %v186 = vmul.f32 %v150, %v168
  %v187 = vmul.f32 %v150, %v172
  %v188 = vadd.f32 %v134, %v178
  %v189 = vadd.f32 %v135, %v179
  %v190 = vadd.f32 %v136, %v180
  %v191 = vadd.f32 %v137, %v181
  %v192 = vadd.f32 %v138, %v182
  %v193 = vadd.f32 %v139, %v183
  %v194 = vadd.f32 %v140, %v184
  %v195 = vadd.f32 %v141, %v185
  %v196 = vadd.f32 %v142, %v186
  %v197 = vadd.f32 %v143, %v187
  %198 = vset.pattern.permute.xlu0 3
  %199 = vperm.xlu0 %198, %v14
  %v200 = vpop.permute.xlu0 %199
  %202 = vset.pattern.permute.xlu0 3
  %203 = vperm.xlu0 %202, %v15
  %v204 = vpop.permute.xlu0 %203
  %v206 = vmul.f32 %v200, %v156
  %v207 = vmul.f32 %v200, %v160
  %v208 = vmul.f32 %v200, %v164
  %v209 = vmul.f32 %v200, %v168
  %v210 = vmul.f32 %v200, %v172
  %v211 = vmul.f32 %v204, %v156
  %v212 = vmul.f32 %v204, %v160
  %v213 = vmul.f32 %v204, %v164
  %v214 = vmul.f32 %v204, %v168
  %v215 = vmul.f32 %v204, %v172
  %226 = vrot.lane.b32.xlu0 %v206, 127
  %v227 = vpop.permute.xlu0 %226
  %228 = vrot.lane.b32.xlu0 %v207, 127
  %v229 = vpop.permute.xlu0 %228
  %230 = vrot.lane.b32.xlu0 %v208, 127
  %v231 = vpop.permute.xlu0 %230
  %232 = vrot.lane.b32.xlu0 %v209, 127
  %v233 = vpop.permute.xlu0 %232
  %234 = vrot.lane.b32.xlu0 %v210, 127
  %v235 = vpop.permute.xlu0 %234
  %236 = vrot.lane.b32.xlu0 %v211, 127
  %v237 = vpop.permute.xlu0 %236
  %238 = vrot.lane.b32.xlu0 %v212, 127
  %v239 = vpop.permute.xlu0 %238
  %240 = vrot.lane.b32.xlu0 %v213, 127
  %v241 = vpop.permute.xlu0 %240
  %242 = vrot.lane.b32.xlu0 %v214, 127
  %v243 = vpop.permute.xlu0 %242
  %244 = vrot.lane.b32.xlu0 %v215, 127
  %v245 = vpop.permute.xlu0 %244
  %v246 = vsel %vm115, %v227, %v229
  %v247 = vsel %vm115, %v229, %v231
  %v248 = vsel %vm115, %v231, %v233
  %v249 = vsel %vm115, %v233, %v235
  %v250 = vsel %vm115, %v237, %v239
  %v251 = vsel %vm115, %v239, %v241
  %v252 = vsel %vm115, %v241, %v243
  %v253 = vsel %vm115, %v243, %v245
  %v264 = vadd.f32 %v188, %v246
  %v265 = vadd.f32 %v189, %v247
  %v266 = vadd.f32 %v190, %v248
  %v267 = vadd.f32 %v191, %v249
  %v268 = vadd.f32 %v192, %v235
  %v269 = vadd.f32 %v193, %v250
  %v270 = vadd.f32 %v194, %v251
  %v271 = vadd.f32 %v195, %v252
  %v272 = vadd.f32 %v196, %v253
  %v273 = vadd.f32 %v197, %v245
  %275 = vset.pattern.permute.xlu0 0
  %276 = vperm.xlu0 %275, %v16
  %v277 = vpop.permute.xlu0 %276
  %280 = vset.pattern.permute.xlu0 0
  %281 = vperm.xlu0 %280, %v17
  %v282 = vpop.permute.xlu0 %281
  %v284 = vadd.f32 %v264, %v277
  %v285 = vadd.f32 %v265, %v277
  %v286 = vadd.f32 %v266, %v277
  %v287 = vadd.f32 %v267, %v277
  %v288 = vadd.f32 %v268, %v277
  %v289 = vadd.f32 %v269, %v282
  %v290 = vadd.f32 %v270, %v282
  %v291 = vadd.f32 %v271, %v282
  %v292 = vadd.f32 %v272, %v282
  %v293 = vadd.f32 %v273, %v282
  %v294 = vmax.f32 %v284, 0.0
  %v295 = vmax.f32 %v285, 0.0
  %v296 = vmax.f32 %v286, 0.0
  %v297 = vmax.f32 %v287, 0.0
  %v298 = vmax.f32 %v288, 0.0
  %v299 = vmax.f32 %v289, 0.0
  %v300 = vmax.f32 %v290, 0.0
  %v301 = vmax.f32 %v291, 0.0
  %v302 = vmax.f32 %v292, 0.0
  %v303 = vmax.f32 %v293, 0.0
  %s304 = scalar_lea.vmem %s0, 2
  %v305 = vld [vmem:[%s304] ss:$4 sm:$0x1f]
  %v306 = vmul.f32 %v24, %v156
  %v307 = vmul.f32 %v24, %v160
  %v308 = vmul.f32 %v24, %v164
  %v309 = vmul.f32 %v24, %v168
  %v310 = vmul.f32 %v24, %v172
  %v311 = vmul.f32 %v29, %v156
  %v312 = vmul.f32 %v29, %v160
  %v313 = vmul.f32 %v29, %v164
  %v314 = vmul.f32 %v29, %v168
  %v315 = vmul.f32 %v29, %v172
  %v316 = vmul.f32 %v69, %v156
  %v317 = vmul.f32 %v69, %v160
  %v318 = vmul.f32 %v69, %v164
  %v319 = vmul.f32 %v69, %v168
  %v320 = vmul.f32 %v69, %v172
  %v321 = vmul.f32 %v73, %v156
  %v322 = vmul.f32 %v73, %v160
  %v323 = vmul.f32 %v73, %v164
  %v324 = vmul.f32 %v73, %v168
  %v325 = vmul.f32 %v73, %v172
  %336 = vrot.lane.b32.xlu0 %v316, 127
  %v337 = vpop.permute.xlu0 %336
  %338 = vrot.lane.b32.xlu0 %v317, 127
  %v339 = vpop.permute.xlu0 %338
  %340 = vrot.lane.b32.xlu0 %v318, 127
  %v341 = vpop.permute.xlu0 %340
  %342 = vrot.lane.b32.xlu0 %v319, 127
  %v343 = vpop.permute.xlu0 %342
  %344 = vrot.lane.b32.xlu0 %v320, 127
  %v345 = vpop.permute.xlu0 %344
  %346 = vrot.lane.b32.xlu0 %v321, 127
  %v347 = vpop.permute.xlu0 %346
  %348 = vrot.lane.b32.xlu0 %v322, 127
  %v349 = vpop.permute.xlu0 %348
  %350 = vrot.lane.b32.xlu0 %v323, 127
  %v351 = vpop.permute.xlu0 %350
  %352 = vrot.lane.b32.xlu0 %v324, 127
  %v353 = vpop.permute.xlu0 %352
  %354 = vrot.lane.b32.xlu0 %v325, 127
  %v355 = vpop.permute.xlu0 %354
  %v356 = vsel %vm115, %v337, %v339
  %v357 = vsel %vm115, %v339, %v341
  %v358 = vsel %vm115, %v341, %v343
  %v359 = vsel %vm115, %v343, %v345
  %v360 = vsel %vm115, %v347, %v349
  %v361 = vsel %vm115, %v349, %v351
  %v362 = vsel %vm115, %v351, %v353
  %v363 = vsel %vm115, %v353, %v355
  %v374 = vadd.f32 %v306, %v356
  %v375 = vadd.f32 %v307, %v357
  %v376 = vadd.f32 %v308, %v358
  %v377 = vadd.f32 %v309, %v359
  %v378 = vadd.f32 %v310, %v345
  %v379 = vadd.f32 %v311, %v360
  %v380 = vadd.f32 %v312, %v361
  %v381 = vadd.f32 %v313, %v362
  %v382 = vadd.f32 %v314, %v363
  %v383 = vadd.f32 %v315, %v355
  %v385 = vlaneseq
  %v386 = vshrl.u32 %v385, 7
  %v387 = vsub.s32 0, %v386
  %v388 = vrot.slane %v305, %v387
  %v389 = vlaneseq
  %v390 = vshrl.u32 %v389, 7
  %v391 = vsub.s32 1, %v390
  %v392 = vrot.slane %v305, %v391
  %v393 = vlaneseq
  %v394 = vshrl.u32 %v393, 7
  %v395 = vsub.s32 2, %v394
  %v396 = vrot.slane %v305, %v395
  %v397 = vlaneseq
  %v398 = vshrl.u32 %v397, 7
  %v399 = vsub.s32 3, %v398
  %v400 = vrot.slane %v305, %v399
  %v401 = vlaneseq
  %v402 = vshrl.u32 %v401, 7
  %v403 = vsub.s32 4, %v402
  %v404 = vrot.slane %v305, %v403
  %v410 = vmul.f32 %v146, %v388
  %v411 = vmul.f32 %v146, %v392
  %v412 = vmul.f32 %v146, %v396
  %v413 = vmul.f32 %v146, %v400
  %v414 = vmul.f32 %v146, %v404
  %v415 = vmul.f32 %v150, %v388
  %v416 = vmul.f32 %v150, %v392
  %v417 = vmul.f32 %v150, %v396
  %v418 = vmul.f32 %v150, %v400
  %v419 = vmul.f32 %v150, %v404
  %v420 = vadd.f32 %v374, %v410
  %v421 = vadd.f32 %v375, %v411
  %v422 = vadd.f32 %v376, %v412
  %v423 = vadd.f32 %v377, %v413
  %v424 = vadd.f32 %v378, %v414
  %v425 = vadd.f32 %v379, %v415
  %v426 = vadd.f32 %v380, %v416
  %v427 = vadd.f32 %v381, %v417
  %v428 = vadd.f32 %v382, %v418
  %v429 = vadd.f32 %v383, %v419
  %v430 = vmul.f32 %v200, %v388
  %v431 = vmul.f32 %v200, %v392
  %v432 = vmul.f32 %v200, %v396
  %v433 = vmul.f32 %v200, %v400
  %v434 = vmul.f32 %v200, %v404
  %v435 = vmul.f32 %v204, %v388
  %v436 = vmul.f32 %v204, %v392
  %v437 = vmul.f32 %v204, %v396
  %v438 = vmul.f32 %v204, %v400
  %v439 = vmul.f32 %v204, %v404
  %450 = vrot.lane.b32.xlu0 %v430, 127
  %v451 = vpop.permute.xlu0 %450
  %452 = vrot.lane.b32.xlu0 %v431, 127
  %v453 = vpop.permute.xlu0 %452
  %454 = vrot.lane.b32.xlu0 %v432, 127
  %v455 = vpop.permute.xlu0 %454
  %456 = vrot.lane.b32.xlu0 %v433, 127
  %v457 = vpop.permute.xlu0 %456
  %458 = vrot.lane.b32.xlu0 %v434, 127
  %v459 = vpop.permute.xlu0 %458
  %460 = vrot.lane.b32.xlu0 %v435, 127
  %v461 = vpop.permute.xlu0 %460
  %462 = vrot.lane.b32.xlu0 %v436, 127
  %v463 = vpop.permute.xlu0 %462
  %464 = vrot.lane.b32.xlu0 %v437, 127
  %v465 = vpop.permute.xlu0 %464
  %466 = vrot.lane.b32.xlu0 %v438, 127
  %v467 = vpop.permute.xlu0 %466
  %468 = vrot.lane.b32.xlu0 %v439, 127
  %v469 = vpop.permute.xlu0 %468
  %v470 = vsel %vm115, %v451, %v453
  %v471 = vsel %vm115, %v453, %v455
  %v472 = vsel %vm115, %v455, %v457
  %v473 = vsel %vm115, %v457, %v459
  %v474 = vsel %vm115, %v461, %v463
  %v475 = vsel %vm115, %v463, %v465
  %v476 = vsel %vm115, %v465, %v467
  %v477 = vsel %vm115, %v467, %v469
  %v488 = vadd.f32 %v420, %v470
  %v489 = vadd.f32 %v421, %v471
  %v490 = vadd.f32 %v422, %v472
  %v491 = vadd.f32 %v423, %v473
  %v492 = vadd.f32 %v424, %v459
  %v493 = vadd.f32 %v425, %v474
  %v494 = vadd.f32 %v426, %v475
  %v495 = vadd.f32 %v427, %v476
  %v496 = vadd.f32 %v428, %v477
  %v497 = vadd.f32 %v429, %v469
  %v498 = vadd.f32 %v488, %v277
  %v499 = vadd.f32 %v489, %v277
  %v500 = vadd.f32 %v490, %v277
  %v501 = vadd.f32 %v491, %v277
  %v502 = vadd.f32 %v492, %v277
  %v503 = vadd.f32 %v493, %v282
  %v504 = vadd.f32 %v494, %v282
  %v505 = vadd.f32 %v495, %v282
  %v506 = vadd.f32 %v496, %v282
  %v507 = vadd.f32 %v497, %v282
  %v508 = vmax.f32 %v498, 0.0
  %v509 = vmax.f32 %v499, 0.0
  %v510 = vmax.f32 %v500, 0.0
  %v511 = vmax.f32 %v501, 0.0
  %v512 = vmax.f32 %v502, 0.0
  %v513 = vmax.f32 %v503, 0.0
  %v514 = vmax.f32 %v504, 0.0
  %v515 = vmax.f32 %v505, 0.0
  %v516 = vmax.f32 %v506, 0.0
  %v517 = vmax.f32 %v507, 0.0
  %v518 = vmax.f32 %v294, %v508
  %v519 = vmax.f32 %v295, %v509
  %v520 = vmax.f32 %v296, %v510
  %v521 = vmax.f32 %v297, %v511
  %v522 = vmax.f32 %v298, %v512
  %v523 = vmax.f32 %v299, %v513
  %v524 = vmax.f32 %v300, %v514
  %v525 = vmax.f32 %v301, %v515
  %v526 = vmax.f32 %v302, %v516
  %v527 = vmax.f32 %v303, %v517
  %538 = vrot.lane.b32.xlu0 %v518, 127
  %v539 = vpop.permute.xlu0 %538
  %540 = vrot.lane.b32.xlu0 %v519, 127
  %v541 = vpop.permute.xlu0 %540
  %542 = vrot.lane.b32.xlu0 %v520, 127
  %v543 = vpop.permute.xlu0 %542
  %544 = vrot.lane.b32.xlu0 %v521, 127
  %v545 = vpop.permute.xlu0 %544
  %546 = vrot.lane.b32.xlu0 %v522, 127
  %v547 = vpop.permute.xlu0 %546
  %548 = vrot.lane.b32.xlu0 %v523, 127
  %v549 = vpop.permute.xlu0 %548
  %550 = vrot.lane.b32.xlu0 %v524, 127
  %v551 = vpop.permute.xlu0 %550
  %552 = vrot.lane.b32.xlu0 %v525, 127
  %v553 = vpop.permute.xlu0 %552
  %554 = vrot.lane.b32.xlu0 %v526, 127
  %v555 = vpop.permute.xlu0 %554
  %556 = vrot.lane.b32.xlu0 %v527, 127
  %v557 = vpop.permute.xlu0 %556
  %v558 = vsel %vm115, %v539, %v541
  %v559 = vsel %vm115, %v541, %v543
  %v560 = vsel %vm115, %v543, %v545
  %v561 = vsel %vm115, %v545, %v547
  %v562 = vsel %vm115, %v549, %v551
  %v563 = vsel %vm115, %v551, %v553
  %v564 = vsel %vm115, %v553, %v555
  %v565 = vsel %vm115, %v555, %v557
  %v574 = vmax.f32 %v518, %v558
  %v575 = vmax.f32 %v519, %v559
  %v576 = vmax.f32 %v520, %v560
  %v577 = vmax.f32 %v521, %v561
  %v578 = vmax.f32 %v523, %v562
  %v579 = vmax.f32 %v524, %v563
  %v580 = vmax.f32 %v525, %v564
  %v581 = vmax.f32 %v526, %v565
  %582 = vst [vmem:[%s3] sm:$0xff] %v574
  %583 = vst [vmem:[%s3 + $0x8] sm:$0xff] %v575
  %584 = vst [vmem:[%s3 + $0x10] sm:$0xff] %v576
  %585 = vst [vmem:[%s3 + $0x18] sm:$0xff] %v577
  %586 = vst [vmem:[%s3 + $0x48] sm:$0xff] %v578
  %587 = vst [vmem:[%s3 + $0x50] sm:$0xff] %v579
  %588 = vst [vmem:[%s3 + $0x58] sm:$0xff] %v580
  %589 = vst [vmem:[%s3 + $0x60] sm:$0xff] %v581
  %s590 = scalar_lea.vmem %s0, 3
  %v591 = vld [vmem:[%s590] ss:$4 sm:$0x1f]
  %v592 = vmul.f32 %v24, %v388
  %v593 = vmul.f32 %v24, %v392
  %v594 = vmul.f32 %v24, %v396
  %v595 = vmul.f32 %v24, %v400
  %v596 = vmul.f32 %v24, %v404
  %v597 = vmul.f32 %v29, %v388
  %v598 = vmul.f32 %v29, %v392
  %v599 = vmul.f32 %v29, %v396
  %v600 = vmul.f32 %v29, %v400
  %v601 = vmul.f32 %v29, %v404
  %v602 = vmul.f32 %v69, %v388
  %v603 = vmul.f32 %v69, %v392
  %v604 = vmul.f32 %v69, %v396
  %v605 = vmul.f32 %v69, %v400
  %v606 = vmul.f32 %v69, %v404
  %v607 = vmul.f32 %v73, %v388
  %v608 = vmul.f32 %v73, %v392
  %v609 = vmul.f32 %v73, %v396
  %v610 = vmul.f32 %v73, %v400
  %v611 = vmul.f32 %v73, %v404
  %622 = vrot.lane.b32.xlu0 %v602, 127
  %v623 = vpop.permute.xlu0 %622
  %624 = vrot.lane.b32.xlu0 %v603, 127
  %v625 = vpop.permute.xlu0 %624
  %626 = vrot.lane.b32.xlu0 %v604, 127
  %v627 = vpop.permute.xlu0 %626
  %628 = vrot.lane.b32.xlu0 %v605, 127
  %v629 = vpop.permute.xlu0 %628
  %630 = vrot.lane.b32.xlu0 %v606, 127
  %v631 = vpop.permute.xlu0 %630
  %632 = vrot.lane.b32.xlu0 %v607, 127
  %v633 = vpop.permute.xlu0 %632
  %634 = vrot.lane.b32.xlu0 %v608, 127
  %v635 = vpop.permute.xlu0 %634
  %636 = vrot.lane.b32.xlu0 %v609, 127
  %v637 = vpop.permute.xlu0 %636
  %638 = vrot.lane.b32.xlu0 %v610, 127
  %v639 = vpop.permute.xlu0 %638
  %640 = vrot.lane.b32.xlu0 %v611, 127
  %v641 = vpop.permute.xlu0 %640
  %v642 = vsel %vm115, %v623, %v625
  %v643 = vsel %vm115, %v625, %v627
  %v644 = vsel %vm115, %v627, %v629
  %v645 = vsel %vm115, %v629, %v631
  %v646 = vsel %vm115, %v633, %v635
  %v647 = vsel %vm115, %v635, %v637
  %v648 = vsel %vm115, %v637, %v639
  %v649 = vsel %vm115, %v639, %v641
  %v660 = vadd.f32 %v592, %v642
  %v661 = vadd.f32 %v593, %v643
  %v662 = vadd.f32 %v594, %v644
  %v663 = vadd.f32 %v595, %v645
  %v664 = vadd.f32 %v596, %v631
  %v665 = vadd.f32 %v597, %v646
  %v666 = vadd.f32 %v598, %v647
  %v667 = vadd.f32 %v599, %v648
  %v668 = vadd.f32 %v600, %v649
  %v669 = vadd.f32 %v601, %v641
  %v671 = vlaneseq
  %v672 = vshrl.u32 %v671, 7
  %v673 = vsub.s32 0, %v672
  %v674 = vrot.slane %v591, %v673
  %v675 = vlaneseq
  %v676 = vshrl.u32 %v675, 7
  %v677 = vsub.s32 1, %v676
  %v678 = vrot.slane %v591, %v677
  %v679 = vlaneseq
  %v680 = vshrl.u32 %v679, 7
  %v681 = vsub.s32 2, %v680
  %v682 = vrot.slane %v591, %v681
  %v683 = vlaneseq
  %v684 = vshrl.u32 %v683, 7
  %v685 = vsub.s32 3, %v684
  %v686 = vrot.slane %v591, %v685
  %v687 = vlaneseq
  %v688 = vshrl.u32 %v687, 7
  %v689 = vsub.s32 4, %v688
  %v690 = vrot.slane %v591, %v689
  %v696 = vmul.f32 %v146, %v674
  %v697 = vmul.f32 %v146, %v678
  %v698 = vmul.f32 %v146, %v682
  %v699 = vmul.f32 %v146, %v686
  %v700 = vmul.f32 %v146, %v690
  %v701 = vmul.f32 %v150, %v674
  %v702 = vmul.f32 %v150, %v678
  %v703 = vmul.f32 %v150, %v682
  %v704 = vmul.f32 %v150, %v686
  %v705 = vmul.f32 %v150, %v690
  %v706 = vadd.f32 %v660, %v696
  %v707 = vadd.f32 %v661, %v697
  %v708 = vadd.f32 %v662, %v698
  %v709 = vadd.f32 %v663, %v699
  %v710 = vadd.f32 %v664, %v700
  %v711 = vadd.f32 %v665, %v701
  %v712 = vadd.f32 %v666, %v702
  %v713 = vadd.f32 %v667, %v703
  %v714 = vadd.f32 %v668, %v704
  %v715 = vadd.f32 %v669, %v705
  %v716 = vmul.f32 %v200, %v674
  %v717 = vmul.f32 %v200, %v678
  %v718 = vmul.f32 %v200, %v682
  %v719 = vmul.f32 %v200, %v686
  %v720 = vmul.f32 %v200, %v690
  %v721 = vmul.f32 %v204, %v674
  %v722 = vmul.f32 %v204, %v678
  %v723 = vmul.f32 %v204, %v682
  %v724 = vmul.f32 %v204, %v686
  %v725 = vmul.f32 %v204, %v690
  %736 = vrot.lane.b32.xlu0 %v716, 127
  %v737 = vpop.permute.xlu0 %736
  %738 = vrot.lane.b32.xlu0 %v717, 127
  %v739 = vpop.permute.xlu0 %738
  %740 = vrot.lane.b32.xlu0 %v718, 127
  %v741 = vpop.permute.xlu0 %740
  %742 = vrot.lane.b32.xlu0 %v719, 127
  %v743 = vpop.permute.xlu0 %742
  %744 = vrot.lane.b32.xlu0 %v720, 127
  %v745 = vpop.permute.xlu0 %744
  %746 = vrot.lane.b32.xlu0 %v721, 127
  %v747 = vpop.permute.xlu0 %746
  %748 = vrot.lane.b32.xlu0 %v722, 127
  %v749 = vpop.permute.xlu0 %748
  %750 = vrot.lane.b32.xlu0 %v723, 127
  %v751 = vpop.permute.xlu0 %750
  %752 = vrot.lane.b32.xlu0 %v724, 127
  %v753 = vpop.permute.xlu0 %752
  %754 = vrot.lane.b32.xlu0 %v725, 127
  %v755 = vpop.permute.xlu0 %754
  %v756 = vsel %vm115, %v737, %v739
  %v757 = vsel %vm115, %v739, %v741
  %v758 = vsel %vm115, %v741, %v743
  %v759 = vsel %vm115, %v743, %v745
  %v760 = vsel %vm115, %v747, %v749
  %v761 = vsel %vm115, %v749, %v751
  %v762 = vsel %vm115, %v751, %v753
  %v763 = vsel %vm115, %v753, %v755
  %v774 = vadd.f32 %v706, %v756
  %v775 = vadd.f32 %v707, %v757
  %v776 = vadd.f32 %v708, %v758
  %v777 = vadd.f32 %v709, %v759
  %v778 = vadd.f32 %v710, %v745
  %v779 = vadd.f32 %v711, %v760
  %v780 = vadd.f32 %v712, %v761
  %v781 = vadd.f32 %v713, %v762
  %v782 = vadd.f32 %v714, %v763
  %v783 = vadd.f32 %v715, %v755
  %v784 = vadd.f32 %v774, %v277
  %v785 = vadd.f32 %v775, %v277
  %v786 = vadd.f32 %v776, %v277
  %v787 = vadd.f32 %v777, %v277
  %v788 = vadd.f32 %v778, %v277
  %v789 = vadd.f32 %v779, %v282
  %v790 = vadd.f32 %v780, %v282
  %v791 = vadd.f32 %v781, %v282
  %v792 = vadd.f32 %v782, %v282
  %v793 = vadd.f32 %v783, %v282
  %v794 = vmax.f32 %v784, 0.0
  %v795 = vmax.f32 %v785, 0.0
  %v796 = vmax.f32 %v786, 0.0
  %v797 = vmax.f32 %v787, 0.0
  %v798 = vmax.f32 %v788, 0.0
  %v799 = vmax.f32 %v789, 0.0
  %v800 = vmax.f32 %v790, 0.0
  %v801 = vmax.f32 %v791, 0.0
  %v802 = vmax.f32 %v792, 0.0
  %v803 = vmax.f32 %v793, 0.0
  %v804 = vmax.f32 %v508, %v794
  %v805 = vmax.f32 %v509, %v795
  %v806 = vmax.f32 %v510, %v796
  %v807 = vmax.f32 %v511, %v797
  %v808 = vmax.f32 %v512, %v798
  %v809 = vmax.f32 %v513, %v799
  %v810 = vmax.f32 %v514, %v800
  %v811 = vmax.f32 %v515, %v801
  %v812 = vmax.f32 %v516, %v802
  %v813 = vmax.f32 %v517, %v803
  %824 = vrot.lane.b32.xlu0 %v804, 127
  %v825 = vpop.permute.xlu0 %824
  %826 = vrot.lane.b32.xlu0 %v805, 127
  %v827 = vpop.permute.xlu0 %826
  %828 = vrot.lane.b32.xlu0 %v806, 127
  %v829 = vpop.permute.xlu0 %828
  %830 = vrot.lane.b32.xlu0 %v807, 127
  %v831 = vpop.permute.xlu0 %830
  %832 = vrot.lane.b32.xlu0 %v808, 127
  %v833 = vpop.permute.xlu0 %832
  %834 = vrot.lane.b32.xlu0 %v809, 127
  %v835 = vpop.permute.xlu0 %834
  %836 = vrot.lane.b32.xlu0 %v810, 127
  %v837 = vpop.permute.xlu0 %836
  %838 = vrot.lane.b32.xlu0 %v811, 127
  %v839 = vpop.permute.xlu0 %838
  %840 = vrot.lane.b32.xlu0 %v812, 127
  %v841 = vpop.permute.xlu0 %840
  %842 = vrot.lane.b32.xlu0 %v813, 127
  %v843 = vpop.permute.xlu0 %842
  %v844 = vsel %vm115, %v825, %v827
  %v845 = vsel %vm115, %v827, %v829
  %v846 = vsel %vm115, %v829, %v831
  %v847 = vsel %vm115, %v831, %v833
  %v848 = vsel %vm115, %v835, %v837
  %v849 = vsel %vm115, %v837, %v839
  %v850 = vsel %vm115, %v839, %v841
  %v851 = vsel %vm115, %v841, %v843
  %v860 = vmax.f32 %v804, %v844
  %v861 = vmax.f32 %v805, %v845
  %v862 = vmax.f32 %v806, %v846
  %v863 = vmax.f32 %v807, %v847
  %v864 = vmax.f32 %v809, %v848
  %v865 = vmax.f32 %v810, %v849
  %v866 = vmax.f32 %v811, %v850
  %v867 = vmax.f32 %v812, %v851
  %s868 = scalar_lea.vmem %s3, 144
  %869 = vst [vmem:[%s868] sm:$0xff] %v860
  %870 = vst [vmem:[%s868 + $0x8] sm:$0xff] %v861
  %871 = vst [vmem:[%s868 + $0x10] sm:$0xff] %v862
  %872 = vst [vmem:[%s868 + $0x18] sm:$0xff] %v863
  %873 = vst [vmem:[%s868 + $0x48] sm:$0xff] %v864
  %874 = vst [vmem:[%s868 + $0x50] sm:$0xff] %v865
  %875 = vst [vmem:[%s868 + $0x58] sm:$0xff] %v866
  %876 = vst [vmem:[%s868 + $0x60] sm:$0xff] %v867
  %s877 = scalar_lea.vmem %s0, 16
  %v878 = vld [vmem:[%s877] ss:$4 sm:$0x1f]
  %s879 = scalar_lea.vmem %s0, 17
  %v880 = vld [vmem:[%s879] ss:$4 sm:$0x1f]
  %v882 = vlaneseq
  %v883 = vshrl.u32 %v882, 7
  %v884 = vsub.s32 0, %v883
  %v885 = vrot.slane %v878, %v884
  %v886 = vlaneseq
  %v887 = vshrl.u32 %v886, 7
  %v888 = vsub.s32 1, %v887
  %v889 = vrot.slane %v878, %v888
  %v890 = vlaneseq
  %v891 = vshrl.u32 %v890, 7
  %v892 = vsub.s32 2, %v891
  %v893 = vrot.slane %v878, %v892
  %v894 = vlaneseq
  %v895 = vshrl.u32 %v894, 7
  %v896 = vsub.s32 3, %v895
  %v897 = vrot.slane %v878, %v896
  %v898 = vlaneseq
  %v899 = vshrl.u32 %v898, 7
  %v900 = vsub.s32 4, %v899
  %v901 = vrot.slane %v878, %v900
  %v907 = vmul.f32 %v24, %v885
  %v908 = vmul.f32 %v24, %v889
  %v909 = vmul.f32 %v24, %v893
  %v910 = vmul.f32 %v24, %v897
  %v911 = vmul.f32 %v24, %v901
  %v912 = vmul.f32 %v29, %v885
  %v913 = vmul.f32 %v29, %v889
  %v914 = vmul.f32 %v29, %v893
  %v915 = vmul.f32 %v29, %v897
  %v916 = vmul.f32 %v29, %v901
  %v917 = vmul.f32 %v69, %v885
  %v918 = vmul.f32 %v69, %v889
  %v919 = vmul.f32 %v69, %v893
  %v920 = vmul.f32 %v69, %v897
  %v921 = vmul.f32 %v69, %v901
  %v922 = vmul.f32 %v73, %v885
  %v923 = vmul.f32 %v73, %v889
  %v924 = vmul.f32 %v73, %v893
  %v925 = vmul.f32 %v73, %v897
  %v926 = vmul.f32 %v73, %v901
  %937 = vrot.lane.b32.xlu0 %v917, 127
  %v938 = vpop.permute.xlu0 %937
  %939 = vrot.lane.b32.xlu0 %v918, 127
  %v940 = vpop.permute.xlu0 %939
  %941 = vrot.lane.b32.xlu0 %v919, 127
  %v942 = vpop.permute.xlu0 %941
  %943 = vrot.lane.b32.xlu0 %v920, 127
  %v944 = vpop.permute.xlu0 %943
  %945 = vrot.lane.b32.xlu0 %v921, 127
  %v946 = vpop.permute.xlu0 %945
  %947 = vrot.lane.b32.xlu0 %v922, 127
  %v948 = vpop.permute.xlu0 %947
  %949 = vrot.lane.b32.xlu0 %v923, 127
  %v950 = vpop.permute.xlu0 %949
  %951 = vrot.lane.b32.xlu0 %v924, 127
  %v952 = vpop.permute.xlu0 %951
  %953 = vrot.lane.b32.xlu0 %v925, 127
  %v954 = vpop.permute.xlu0 %953
  %955 = vrot.lane.b32.xlu0 %v926, 127
  %v956 = vpop.permute.xlu0 %955
  %v957 = vsel %vm115, %v938, %v940
  %v958 = vsel %vm115, %v940, %v942
  %v959 = vsel %vm115, %v942, %v944
  %v960 = vsel %vm115, %v944, %v946
  %v961 = vsel %vm115, %v948, %v950
  %v962 = vsel %vm115, %v950, %v952
  %v963 = vsel %vm115, %v952, %v954
  %v964 = vsel %vm115, %v954, %v956
  %v975 = vadd.f32 %v907, %v957
  %v976 = vadd.f32 %v908, %v958
  %v977 = vadd.f32 %v909, %v959
  %v978 = vadd.f32 %v910, %v960
  %v979 = vadd.f32 %v911, %v946
  %v980 = vadd.f32 %v912, %v961
  %v981 = vadd.f32 %v913, %v962
  %v982 = vadd.f32 %v914, %v963
  %v983 = vadd.f32 %v915, %v964
  %v984 = vadd.f32 %v916, %v956
  %v986 = vlaneseq
  %v987 = vshrl.u32 %v986, 7
  %v988 = vsub.s32 0, %v987
  %v989 = vrot.slane %v880, %v988
  %v990 = vlaneseq
  %v991 = vshrl.u32 %v990, 7
  %v992 = vsub.s32 1, %v991
  %v993 = vrot.slane %v880, %v992
  %v994 = vlaneseq
  %v995 = vshrl.u32 %v994, 7
  %v996 = vsub.s32 2, %v995
  %v997 = vrot.slane %v880, %v996
  %v998 = vlaneseq
  %v999 = vshrl.u32 %v998, 7
  %v1000 = vsub.s32 3, %v999
  %v1001 = vrot.slane %v880, %v1000
  %v1002 = vlaneseq
  %v1003 = vshrl.u32 %v1002, 7
  %v1004 = vsub.s32 4, %v1003
  %v1005 = vrot.slane %v880, %v1004
  %v1011 = vmul.f32 %v146, %v989
  %v1012 = vmul.f32 %v146, %v993
  %v1013 = vmul.f32 %v146, %v997
  %v1014 = vmul.f32 %v146, %v1001
  %v1015 = vmul.f32 %v146, %v1005
  %v1016 = vmul.f32 %v150, %v989
  %v1017 = vmul.f32 %v150, %v993
  %v1018 = vmul.f32 %v150, %v997
  %v1019 = vmul.f32 %v150, %v1001
  %v1020 = vmul.f32 %v150, %v1005
  %v1021 = vadd.f32 %v975, %v1011
  %v1022 = vadd.f32 %v976, %v1012
  %v1023 = vadd.f32 %v977, %v1013
  %v1024 = vadd.f32 %v978, %v1014
  %v1025 = vadd.f32 %v979, %v1015
  %v1026 = vadd.f32 %v980, %v1016
  %v1027 = vadd.f32 %v981, %v1017
  %v1028 = vadd.f32 %v982, %v1018
  %v1029 = vadd.f32 %v983, %v1019
  %v1030 = vadd.f32 %v984, %v1020
  %v1031 = vmul.f32 %v200, %v989
  %v1032 = vmul.f32 %v200, %v993
  %v1033 = vmul.f32 %v200, %v997
  %v1034 = vmul.f32 %v200, %v1001
  %v1035 = vmul.f32 %v200, %v1005
  %v1036 = vmul.f32 %v204, %v989
  %v1037 = vmul.f32 %v204, %v993
  %v1038 = vmul.f32 %v204, %v997
  %v1039 = vmul.f32 %v204, %v1001
  %v1040 = vmul.f32 %v204, %v1005
  %1051 = vrot.lane.b32.xlu0 %v1031, 127
  %v1052 = vpop.permute.xlu0 %1051
  %1053 = vrot.lane.b32.xlu0 %v1032, 127
  %v1054 = vpop.permute.xlu0 %1053
  %1055 = vrot.lane.b32.xlu0 %v1033, 127
  %v1056 = vpop.permute.xlu0 %1055
  %1057 = vrot.lane.b32.xlu0 %v1034, 127
  %v1058 = vpop.permute.xlu0 %1057
  %1059 = vrot.lane.b32.xlu0 %v1035, 127
  %v1060 = vpop.permute.xlu0 %1059
  %1061 = vrot.lane.b32.xlu0 %v1036, 127
  %v1062 = vpop.permute.xlu0 %1061
  %1063 = vrot.lane.b32.xlu0 %v1037, 127
  %v1064 = vpop.permute.xlu0 %1063
  %1065 = vrot.lane.b32.xlu0 %v1038, 127
  %v1066 = vpop.permute.xlu0 %1065
  %1067 = vrot.lane.b32.xlu0 %v1039, 127
  %v1068 = vpop.permute.xlu0 %1067
  %1069 = vrot.lane.b32.xlu0 %v1040, 127
  %v1070 = vpop.permute.xlu0 %1069
  %v1071 = vsel %vm115, %v1052, %v1054
  %v1072 = vsel %vm115, %v1054, %v1056
  %v1073 = vsel %vm115, %v1056, %v1058
  %v1074 = vsel %vm115, %v1058, %v1060
  %v1075 = vsel %vm115, %v1062, %v1064
  %v1076 = vsel %vm115, %v1064, %v1066
  %v1077 = vsel %vm115, %v1066, %v1068
  %v1078 = vsel %vm115, %v1068, %v1070
  %v1089 = vadd.f32 %v1021, %v1071
  %v1090 = vadd.f32 %v1022, %v1072
  %v1091 = vadd.f32 %v1023, %v1073
  %v1092 = vadd.f32 %v1024, %v1074
  %v1093 = vadd.f32 %v1025, %v1060
  %v1094 = vadd.f32 %v1026, %v1075
  %v1095 = vadd.f32 %v1027, %v1076
  %v1096 = vadd.f32 %v1028, %v1077
  %v1097 = vadd.f32 %v1029, %v1078
  %v1098 = vadd.f32 %v1030, %v1070
  %v1099 = vadd.f32 %v1089, %v277
  %v1100 = vadd.f32 %v1090, %v277
  %v1101 = vadd.f32 %v1091, %v277
  %v1102 = vadd.f32 %v1092, %v277
  %v1103 = vadd.f32 %v1093, %v277
  %v1104 = vadd.f32 %v1094, %v282
  %v1105 = vadd.f32 %v1095, %v282
  %v1106 = vadd.f32 %v1096, %v282
  %v1107 = vadd.f32 %v1097, %v282
  %v1108 = vadd.f32 %v1098, %v282
  %v1109 = vmax.f32 %v1099, 0.0
  %v1110 = vmax.f32 %v1100, 0.0
  %v1111 = vmax.f32 %v1101, 0.0
  %v1112 = vmax.f32 %v1102, 0.0
  %v1113 = vmax.f32 %v1103, 0.0
  %v1114 = vmax.f32 %v1104, 0.0
  %v1115 = vmax.f32 %v1105, 0.0
  %v1116 = vmax.f32 %v1106, 0.0
  %v1117 = vmax.f32 %v1107, 0.0
  %v1118 = vmax.f32 %v1108, 0.0
  %s1119 = scalar_lea.vmem %s0, 18
  %v1120 = vld [vmem:[%s1119] ss:$4 sm:$0x1f]
  %v1121 = vmul.f32 %v24, %v989
  %v1122 = vmul.f32 %v24, %v993
  %v1123 = vmul.f32 %v24, %v997
  %v1124 = vmul.f32 %v24, %v1001
  %v1125 = vmul.f32 %v24, %v1005
  %v1126 = vmul.f32 %v29, %v989
  %v1127 = vmul.f32 %v29, %v993
  %v1128 = vmul.f32 %v29, %v997
  %v1129 = vmul.f32 %v29, %v1001
  %v1130 = vmul.f32 %v29, %v1005
  %v1131 = vmul.f32 %v69, %v989
  %v1132 = vmul.f32 %v69, %v993
  %v1133 = vmul.f32 %v69, %v997
  %v1134 = vmul.f32 %v69, %v1001
  %v1135 = vmul.f32 %v69, %v1005
  %v1136 = vmul.f32 %v73, %v989
  %v1137 = vmul.f32 %v73, %v993
  %v1138 = vmul.f32 %v73, %v997
  %v1139 = vmul.f32 %v73, %v1001
  %v1140 = vmul.f32 %v73, %v1005
  %1151 = vrot.lane.b32.xlu0 %v1131, 127
  %v1152 = vpop.permute.xlu0 %1151
  %1153 = vrot.lane.b32.xlu0 %v1132, 127
  %v1154 = vpop.permute.xlu0 %1153
  %1155 = vrot.lane.b32.xlu0 %v1133, 127
  %v1156 = vpop.permute.xlu0 %1155
  %1157 = vrot.lane.b32.xlu0 %v1134, 127
  %v1158 = vpop.permute.xlu0 %1157
  %1159 = vrot.lane.b32.xlu0 %v1135, 127
  %v1160 = vpop.permute.xlu0 %1159
  %1161 = vrot.lane.b32.xlu0 %v1136, 127
  %v1162 = vpop.permute.xlu0 %1161
  %1163 = vrot.lane.b32.xlu0 %v1137, 127
  %v1164 = vpop.permute.xlu0 %1163
  %1165 = vrot.lane.b32.xlu0 %v1138, 127
  %v1166 = vpop.permute.xlu0 %1165
  %1167 = vrot.lane.b32.xlu0 %v1139, 127
  %v1168 = vpop.permute.xlu0 %1167
  %1169 = vrot.lane.b32.xlu0 %v1140, 127
  %v1170 = vpop.permute.xlu0 %1169
  %v1171 = vsel %vm115, %v1152, %v1154
  %v1172 = vsel %vm115, %v1154, %v1156
  %v1173 = vsel %vm115, %v1156, %v1158
  %v1174 = vsel %vm115, %v1158, %v1160
  %v1175 = vsel %vm115, %v1162, %v1164
  %v1176 = vsel %vm115, %v1164, %v1166
  %v1177 = vsel %vm115, %v1166, %v1168
  %v1178 = vsel %vm115, %v1168, %v1170
  %v1189 = vadd.f32 %v1121, %v1171
  %v1190 = vadd.f32 %v1122, %v1172
  %v1191 = vadd.f32 %v1123, %v1173
  %v1192 = vadd.f32 %v1124, %v1174
  %v1193 = vadd.f32 %v1125, %v1160
  %v1194 = vadd.f32 %v1126, %v1175
  %v1195 = vadd.f32 %v1127, %v1176
  %v1196 = vadd.f32 %v1128, %v1177
  %v1197 = vadd.f32 %v1129, %v1178
  %v1198 = vadd.f32 %v1130, %v1170
  %v1200 = vlaneseq
  %v1201 = vshrl.u32 %v1200, 7
  %v1202 = vsub.s32 0, %v1201
  %v1203 = vrot.slane %v1120, %v1202
  %v1204 = vlaneseq
  %v1205 = vshrl.u32 %v1204, 7
  %v1206 = vsub.s32 1, %v1205
  %v1207 = vrot.slane %v1120, %v1206
  %v1208 = vlaneseq
  %v1209 = vshrl.u32 %v1208, 7
  %v1210 = vsub.s32 2, %v1209
  %v1211 = vrot.slane %v1120, %v1210
  %v1212 = vlaneseq
  %v1213 = vshrl.u32 %v1212, 7
  %v1214 = vsub.s32 3, %v1213
  %v1215 = vrot.slane %v1120, %v1214
  %v1216 = vlaneseq
  %v1217 = vshrl.u32 %v1216, 7
  %v1218 = vsub.s32 4, %v1217
  %v1219 = vrot.slane %v1120, %v1218
  %v1225 = vmul.f32 %v146, %v1203
  %v1226 = vmul.f32 %v146, %v1207
  %v1227 = vmul.f32 %v146, %v1211
  %v1228 = vmul.f32 %v146, %v1215
  %v1229 = vmul.f32 %v146, %v1219
  %v1230 = vmul.f32 %v150, %v1203
  %v1231 = vmul.f32 %v150, %v1207
  %v1232 = vmul.f32 %v150, %v1211
  %v1233 = vmul.f32 %v150, %v1215
  %v1234 = vmul.f32 %v150, %v1219
  %v1235 = vadd.f32 %v1189, %v1225
  %v1236 = vadd.f32 %v1190, %v1226
  %v1237 = vadd.f32 %v1191, %v1227
  %v1238 = vadd.f32 %v1192, %v1228
  %v1239 = vadd.f32 %v1193, %v1229
  %v1240 = vadd.f32 %v1194, %v1230
  %v1241 = vadd.f32 %v1195, %v1231
  %v1242 = vadd.f32 %v1196, %v1232
  %v1243 = vadd.f32 %v1197, %v1233
  %v1244 = vadd.f32 %v1198, %v1234
  %v1245 = vmul.f32 %v200, %v1203
  %v1246 = vmul.f32 %v200, %v1207
  %v1247 = vmul.f32 %v200, %v1211
  %v1248 = vmul.f32 %v200, %v1215
  %v1249 = vmul.f32 %v200, %v1219
  %v1250 = vmul.f32 %v204, %v1203
  %v1251 = vmul.f32 %v204, %v1207
  %v1252 = vmul.f32 %v204, %v1211
  %v1253 = vmul.f32 %v204, %v1215
  %v1254 = vmul.f32 %v204, %v1219
  %1265 = vrot.lane.b32.xlu0 %v1245, 127
  %v1266 = vpop.permute.xlu0 %1265
  %1267 = vrot.lane.b32.xlu0 %v1246, 127
  %v1268 = vpop.permute.xlu0 %1267
  %1269 = vrot.lane.b32.xlu0 %v1247, 127
  %v1270 = vpop.permute.xlu0 %1269
  %1271 = vrot.lane.b32.xlu0 %v1248, 127
  %v1272 = vpop.permute.xlu0 %1271
  %1273 = vrot.lane.b32.xlu0 %v1249, 127
  %v1274 = vpop.permute.xlu0 %1273
  %1275 = vrot.lane.b32.xlu0 %v1250, 127
  %v1276 = vpop.permute.xlu0 %1275
  %1277 = vrot.lane.b32.xlu0 %v1251, 127
  %v1278 = vpop.permute.xlu0 %1277
  %1279 = vrot.lane.b32.xlu0 %v1252, 127
  %v1280 = vpop.permute.xlu0 %1279
  %1281 = vrot.lane.b32.xlu0 %v1253, 127
  %v1282 = vpop.permute.xlu0 %1281
  %1283 = vrot.lane.b32.xlu0 %v1254, 127
  %v1284 = vpop.permute.xlu0 %1283
  %v1285 = vsel %vm115, %v1266, %v1268
  %v1286 = vsel %vm115, %v1268, %v1270
  %v1287 = vsel %vm115, %v1270, %v1272
  %v1288 = vsel %vm115, %v1272, %v1274
  %v1289 = vsel %vm115, %v1276, %v1278
  %v1290 = vsel %vm115, %v1278, %v1280
  %v1291 = vsel %vm115, %v1280, %v1282
  %v1292 = vsel %vm115, %v1282, %v1284
  %v1303 = vadd.f32 %v1235, %v1285
  %v1304 = vadd.f32 %v1236, %v1286
  %v1305 = vadd.f32 %v1237, %v1287
  %v1306 = vadd.f32 %v1238, %v1288
  %v1307 = vadd.f32 %v1239, %v1274
  %v1308 = vadd.f32 %v1240, %v1289
  %v1309 = vadd.f32 %v1241, %v1290
  %v1310 = vadd.f32 %v1242, %v1291
  %v1311 = vadd.f32 %v1243, %v1292
  %v1312 = vadd.f32 %v1244, %v1284
  %v1313 = vadd.f32 %v1303, %v277
  %v1314 = vadd.f32 %v1304, %v277
  %v1315 = vadd.f32 %v1305, %v277
  %v1316 = vadd.f32 %v1306, %v277
  %v1317 = vadd.f32 %v1307, %v277
  %v1318 = vadd.f32 %v1308, %v282
  %v1319 = vadd.f32 %v1309, %v282
  %v1320 = vadd.f32 %v1310, %v282
  %v1321 = vadd.f32 %v1311, %v282
  %v1322 = vadd.f32 %v1312, %v282
  %v1323 = vmax.f32 %v1313, 0.0
  %v1324 = vmax.f32 %v1314, 0.0
  %v1325 = vmax.f32 %v1315, 0.0
  %v1326 = vmax.f32 %v1316, 0.0
  %v1327 = vmax.f32 %v1317, 0.0
  %v1328 = vmax.f32 %v1318, 0.0
  %v1329 = vmax.f32 %v1319, 0.0
  %v1330 = vmax.f32 %v1320, 0.0
  %v1331 = vmax.f32 %v1321, 0.0
  %v1332 = vmax.f32 %v1322, 0.0
  %v1333 = vmax.f32 %v1109, %v1323
  %v1334 = vmax.f32 %v1110, %v1324
  %v1335 = vmax.f32 %v1111, %v1325
  %v1336 = vmax.f32 %v1112, %v1326
  %v1337 = vmax.f32 %v1113, %v1327
  %v1338 = vmax.f32 %v1114, %v1328
  %v1339 = vmax.f32 %v1115, %v1329
  %v1340 = vmax.f32 %v1116, %v1330
  %v1341 = vmax.f32 %v1117, %v1331
  %v1342 = vmax.f32 %v1118, %v1332
  %1353 = vrot.lane.b32.xlu0 %v1333, 127
  %v1354 = vpop.permute.xlu0 %1353
  %1355 = vrot.lane.b32.xlu0 %v1334, 127
  %v1356 = vpop.permute.xlu0 %1355
  %1357 = vrot.lane.b32.xlu0 %v1335, 127
  %v1358 = vpop.permute.xlu0 %1357
  %1359 = vrot.lane.b32.xlu0 %v1336, 127
  %v1360 = vpop.permute.xlu0 %1359
  %1361 = vrot.lane.b32.xlu0 %v1337, 127
  %v1362 = vpop.permute.xlu0 %1361
  %1363 = vrot.lane.b32.xlu0 %v1338, 127
  %v1364 = vpop.permute.xlu0 %1363
  %1365 = vrot.lane.b32.xlu0 %v1339, 127
  %v1366 = vpop.permute.xlu0 %1365
  %1367 = vrot.lane.b32.xlu0 %v1340, 127
  %v1368 = vpop.permute.xlu0 %1367
  %1369 = vrot.lane.b32.xlu0 %v1341, 127
  %v1370 = vpop.permute.xlu0 %1369
  %1371 = vrot.lane.b32.xlu0 %v1342, 127
  %v1372 = vpop.permute.xlu0 %1371
  %v1373 = vsel %vm115, %v1354, %v1356
  %v1374 = vsel %vm115, %v1356, %v1358
  %v1375 = vsel %vm115, %v1358, %v1360
  %v1376 = vsel %vm115, %v1360, %v1362
  %v1377 = vsel %vm115, %v1364, %v1366
  %v1378 = vsel %vm115, %v1366, %v1368
  %v1379 = vsel %vm115, %v1368, %v1370
  %v1380 = vsel %vm115, %v1370, %v1372
  %v1389 = vmax.f32 %v1333, %v1373
  %v1390 = vmax.f32 %v1334, %v1374
  %v1391 = vmax.f32 %v1335, %v1375
  %v1392 = vmax.f32 %v1336, %v1376
  %v1393 = vmax.f32 %v1338, %v1377
  %v1394 = vmax.f32 %v1339, %v1378
  %v1395 = vmax.f32 %v1340, %v1379
  %v1396 = vmax.f32 %v1341, %v1380
  %1397 = vst [vmem:[%s3 + $0x20] sm:$0xff] %v1389
  %1398 = vst [vmem:[%s3 + $0x28] sm:$0xff] %v1390
  %1399 = vst [vmem:[%s3 + $0x30] sm:$0xff] %v1391
  %1400 = vst [vmem:[%s3 + $0x38] sm:$0xff] %v1392
  %1401 = vst [vmem:[%s3 + $0x68] sm:$0xff] %v1393
  %1402 = vst [vmem:[%s3 + $0x70] sm:$0xff] %v1394
  %1403 = vst [vmem:[%s3 + $0x78] sm:$0xff] %v1395
  %1404 = vst [vmem:[%s3 + $0x80] sm:$0xff] %v1396
  %s1405 = scalar_lea.vmem %s0, 19
  %v1406 = vld [vmem:[%s1405] ss:$4 sm:$0x1f]
  %v1407 = vmul.f32 %v24, %v1203
  %v1408 = vmul.f32 %v24, %v1207
  %v1409 = vmul.f32 %v24, %v1211
  %v1410 = vmul.f32 %v24, %v1215
  %v1411 = vmul.f32 %v24, %v1219
  %v1412 = vmul.f32 %v29, %v1203
  %v1413 = vmul.f32 %v29, %v1207
  %v1414 = vmul.f32 %v29, %v1211
  %v1415 = vmul.f32 %v29, %v1215
  %v1416 = vmul.f32 %v29, %v1219
  %v1417 = vmul.f32 %v69, %v1203
  %v1418 = vmul.f32 %v69, %v1207
  %v1419 = vmul.f32 %v69, %v1211
  %v1420 = vmul.f32 %v69, %v1215
  %v1421 = vmul.f32 %v69, %v1219
  %v1422 = vmul.f32 %v73, %v1203
  %v1423 = vmul.f32 %v73, %v1207
  %v1424 = vmul.f32 %v73, %v1211
  %v1425 = vmul.f32 %v73, %v1215
  %v1426 = vmul.f32 %v73, %v1219
  %1437 = vrot.lane.b32.xlu0 %v1417, 127
  %v1438 = vpop.permute.xlu0 %1437
  %1439 = vrot.lane.b32.xlu0 %v1418, 127
  %v1440 = vpop.permute.xlu0 %1439
  %1441 = vrot.lane.b32.xlu0 %v1419, 127
  %v1442 = vpop.permute.xlu0 %1441
  %1443 = vrot.lane.b32.xlu0 %v1420, 127
  %v1444 = vpop.permute.xlu0 %1443
  %1445 = vrot.lane.b32.xlu0 %v1421, 127
  %v1446 = vpop.permute.xlu0 %1445
  %1447 = vrot.lane.b32.xlu0 %v1422, 127
  %v1448 = vpop.permute.xlu0 %1447
  %1449 = vrot.lane.b32.xlu0 %v1423, 127
  %v1450 = vpop.permute.xlu0 %1449
  %1451 = vrot.lane.b32.xlu0 %v1424, 127
  %v1452 = vpop.permute.xlu0 %1451
  %1453 = vrot.lane.b32.xlu0 %v1425, 127
  %v1454 = vpop.permute.xlu0 %1453
  %1455 = vrot.lane.b32.xlu0 %v1426, 127
  %v1456 = vpop.permute.xlu0 %1455
  %v1457 = vsel %vm115, %v1438, %v1440
  %v1458 = vsel %vm115, %v1440, %v1442
  %v1459 = vsel %vm115, %v1442, %v1444
  %v1460 = vsel %vm115, %v1444, %v1446
  %v1461 = vsel %vm115, %v1448, %v1450
  %v1462 = vsel %vm115, %v1450, %v1452
  %v1463 = vsel %vm115, %v1452, %v1454
  %v1464 = vsel %vm115, %v1454, %v1456
  %v1475 = vadd.f32 %v1407, %v1457
  %v1476 = vadd.f32 %v1408, %v1458
  %v1477 = vadd.f32 %v1409, %v1459
  %v1478 = vadd.f32 %v1410, %v1460
  %v1479 = vadd.f32 %v1411, %v1446
  %v1480 = vadd.f32 %v1412, %v1461
  %v1481 = vadd.f32 %v1413, %v1462
  %v1482 = vadd.f32 %v1414, %v1463
  %v1483 = vadd.f32 %v1415, %v1464
  %v1484 = vadd.f32 %v1416, %v1456
  %v1486 = vlaneseq
  %v1487 = vshrl.u32 %v1486, 7
  %v1488 = vsub.s32 0, %v1487
  %v1489 = vrot.slane %v1406, %v1488
  %v1490 = vlaneseq
  %v1491 = vshrl.u32 %v1490, 7
  %v1492 = vsub.s32 1, %v1491
  %v1493 = vrot.slane %v1406, %v1492
  %v1494 = vlaneseq
  %v1495 = vshrl.u32 %v1494, 7
  %v1496 = vsub.s32 2, %v1495
  %v1497 = vrot.slane %v1406, %v1496
  %v1498 = vlaneseq
  %v1499 = vshrl.u32 %v1498, 7
  %v1500 = vsub.s32 3, %v1499
  %v1501 = vrot.slane %v1406, %v1500
  %v1502 = vlaneseq
  %v1503 = vshrl.u32 %v1502, 7
  %v1504 = vsub.s32 4, %v1503
  %v1505 = vrot.slane %v1406, %v1504
  %v1511 = vmul.f32 %v146, %v1489
  %v1512 = vmul.f32 %v146, %v1493
  %v1513 = vmul.f32 %v146, %v1497
  %v1514 = vmul.f32 %v146, %v1501
  %v1515 = vmul.f32 %v146, %v1505
  %v1516 = vmul.f32 %v150, %v1489
  %v1517 = vmul.f32 %v150, %v1493
  %v1518 = vmul.f32 %v150, %v1497
  %v1519 = vmul.f32 %v150, %v1501
  %v1520 = vmul.f32 %v150, %v1505
  %v1521 = vadd.f32 %v1475, %v1511
  %v1522 = vadd.f32 %v1476, %v1512
  %v1523 = vadd.f32 %v1477, %v1513
  %v1524 = vadd.f32 %v1478, %v1514
  %v1525 = vadd.f32 %v1479, %v1515
  %v1526 = vadd.f32 %v1480, %v1516
  %v1527 = vadd.f32 %v1481, %v1517
  %v1528 = vadd.f32 %v1482, %v1518
  %v1529 = vadd.f32 %v1483, %v1519
  %v1530 = vadd.f32 %v1484, %v1520
  %v1531 = vmul.f32 %v200, %v1489
  %v1532 = vmul.f32 %v200, %v1493
  %v1533 = vmul.f32 %v200, %v1497
  %v1534 = vmul.f32 %v200, %v1501
  %v1535 = vmul.f32 %v200, %v1505
  %v1536 = vmul.f32 %v204, %v1489
  %v1537 = vmul.f32 %v204, %v1493
  %v1538 = vmul.f32 %v204, %v1497
  %v1539 = vmul.f32 %v204, %v1501
  %v1540 = vmul.f32 %v204, %v1505
  %1551 = vrot.lane.b32.xlu0 %v1531, 127
  %v1552 = vpop.permute.xlu0 %1551
  %1553 = vrot.lane.b32.xlu0 %v1532, 127
  %v1554 = vpop.permute.xlu0 %1553
  %1555 = vrot.lane.b32.xlu0 %v1533, 127
  %v1556 = vpop.permute.xlu0 %1555
  %1557 = vrot.lane.b32.xlu0 %v1534, 127
  %v1558 = vpop.permute.xlu0 %1557
  %1559 = vrot.lane.b32.xlu0 %v1535, 127
  %v1560 = vpop.permute.xlu0 %1559
  %1561 = vrot.lane.b32.xlu0 %v1536, 127
  %v1562 = vpop.permute.xlu0 %1561
  %1563 = vrot.lane.b32.xlu0 %v1537, 127
  %v1564 = vpop.permute.xlu0 %1563
  %1565 = vrot.lane.b32.xlu0 %v1538, 127
  %v1566 = vpop.permute.xlu0 %1565
  %1567 = vrot.lane.b32.xlu0 %v1539, 127
  %v1568 = vpop.permute.xlu0 %1567
  %1569 = vrot.lane.b32.xlu0 %v1540, 127
  %v1570 = vpop.permute.xlu0 %1569
  %v1571 = vsel %vm115, %v1552, %v1554
  %v1572 = vsel %vm115, %v1554, %v1556
  %v1573 = vsel %vm115, %v1556, %v1558
  %v1574 = vsel %vm115, %v1558, %v1560
  %v1575 = vsel %vm115, %v1562, %v1564
  %v1576 = vsel %vm115, %v1564, %v1566
  %v1577 = vsel %vm115, %v1566, %v1568
  %v1578 = vsel %vm115, %v1568, %v1570
  %v1589 = vadd.f32 %v1521, %v1571
  %v1590 = vadd.f32 %v1522, %v1572
  %v1591 = vadd.f32 %v1523, %v1573
  %v1592 = vadd.f32 %v1524, %v1574
  %v1593 = vadd.f32 %v1525, %v1560
  %v1594 = vadd.f32 %v1526, %v1575
  %v1595 = vadd.f32 %v1527, %v1576
  %v1596 = vadd.f32 %v1528, %v1577
  %v1597 = vadd.f32 %v1529, %v1578
  %v1598 = vadd.f32 %v1530, %v1570
  %v1599 = vadd.f32 %v1589, %v277
  %v1600 = vadd.f32 %v1590, %v277
  %v1601 = vadd.f32 %v1591, %v277
  %v1602 = vadd.f32 %v1592, %v277
  %v1603 = vadd.f32 %v1593, %v277
  %v1604 = vadd.f32 %v1594, %v282
  %v1605 = vadd.f32 %v1595, %v282
  %v1606 = vadd.f32 %v1596, %v282
  %v1607 = vadd.f32 %v1597, %v282
  %v1608 = vadd.f32 %v1598, %v282
  %v1609 = vmax.f32 %v1599, 0.0
  %v1610 = vmax.f32 %v1600, 0.0
  %v1611 = vmax.f32 %v1601, 0.0
  %v1612 = vmax.f32 %v1602, 0.0
  %v1613 = vmax.f32 %v1603, 0.0
  %v1614 = vmax.f32 %v1604, 0.0
  %v1615 = vmax.f32 %v1605, 0.0
  %v1616 = vmax.f32 %v1606, 0.0
  %v1617 = vmax.f32 %v1607, 0.0
  %v1618 = vmax.f32 %v1608, 0.0
  %v1619 = vmax.f32 %v1323, %v1609
  %v1620 = vmax.f32 %v1324, %v1610
  %v1621 = vmax.f32 %v1325, %v1611
  %v1622 = vmax.f32 %v1326, %v1612
  %v1623 = vmax.f32 %v1327, %v1613
  %v1624 = vmax.f32 %v1328, %v1614
  %v1625 = vmax.f32 %v1329, %v1615
  %v1626 = vmax.f32 %v1330, %v1616
  %v1627 = vmax.f32 %v1331, %v1617
  %v1628 = vmax.f32 %v1332, %v1618
  %1639 = vrot.lane.b32.xlu0 %v1619, 127
  %v1640 = vpop.permute.xlu0 %1639
  %1641 = vrot.lane.b32.xlu0 %v1620, 127
  %v1642 = vpop.permute.xlu0 %1641
  %1643 = vrot.lane.b32.xlu0 %v1621, 127
  %v1644 = vpop.permute.xlu0 %1643
  %1645 = vrot.lane.b32.xlu0 %v1622, 127
  %v1646 = vpop.permute.xlu0 %1645
  %1647 = vrot.lane.b32.xlu0 %v1623, 127
  %v1648 = vpop.permute.xlu0 %1647
  %1649 = vrot.lane.b32.xlu0 %v1624, 127
  %v1650 = vpop.permute.xlu0 %1649
  %1651 = vrot.lane.b32.xlu0 %v1625, 127
  %v1652 = vpop.permute.xlu0 %1651
  %1653 = vrot.lane.b32.xlu0 %v1626, 127
  %v1654 = vpop.permute.xlu0 %1653
  %1655 = vrot.lane.b32.xlu0 %v1627, 127
  %v1656 = vpop.permute.xlu0 %1655
  %1657 = vrot.lane.b32.xlu0 %v1628, 127
  %v1658 = vpop.permute.xlu0 %1657
  %v1659 = vsel %vm115, %v1640, %v1642
  %v1660 = vsel %vm115, %v1642, %v1644
  %v1661 = vsel %vm115, %v1644, %v1646
  %v1662 = vsel %vm115, %v1646, %v1648
  %v1663 = vsel %vm115, %v1650, %v1652
  %v1664 = vsel %vm115, %v1652, %v1654
  %v1665 = vsel %vm115, %v1654, %v1656
  %v1666 = vsel %vm115, %v1656, %v1658
  %v1675 = vmax.f32 %v1619, %v1659
  %v1676 = vmax.f32 %v1620, %v1660
  %v1677 = vmax.f32 %v1621, %v1661
  %v1678 = vmax.f32 %v1622, %v1662
  %v1679 = vmax.f32 %v1624, %v1663
  %v1680 = vmax.f32 %v1625, %v1664
  %v1681 = vmax.f32 %v1626, %v1665
  %v1682 = vmax.f32 %v1627, %v1666
  %1683 = vst [vmem:[%s868 + $0x20] sm:$0xff] %v1675
  %1684 = vst [vmem:[%s868 + $0x28] sm:$0xff] %v1676
  %1685 = vst [vmem:[%s868 + $0x30] sm:$0xff] %v1677
  %1686 = vst [vmem:[%s868 + $0x38] sm:$0xff] %v1678
  %1687 = vst [vmem:[%s868 + $0x68] sm:$0xff] %v1679
  %1688 = vst [vmem:[%s868 + $0x70] sm:$0xff] %v1680
  %1689 = vst [vmem:[%s868 + $0x78] sm:$0xff] %v1681
  %1690 = vst [vmem:[%s868 + $0x80] sm:$0xff] %v1682
  %v1691 = vld [vmem:[%s0 + $0x20] sm:$0x1]
  %v1692 = vld [vmem:[%s0 + $0x21] sm:$0x1]
  %v1693 = vlaneseq
  %v1694 = vshrl.u32 %v1693, 7
  %v1695 = vsub.s32 0, %v1694
  %v1696 = vrot.slane %v1691, %v1695
  %v1697 = vmul.f32 %v24, %v1696
  %v1698 = vmul.f32 %v29, %v1696
  %v1699 = vmul.f32 %v69, %v1696
  %v1700 = vmul.f32 %v73, %v1696
  %1703 = vrot.lane.b32.xlu0 %v1699, 127
  %v1704 = vpop.permute.xlu0 %1703
  %1705 = vrot.lane.b32.xlu0 %v1700, 127
  %v1706 = vpop.permute.xlu0 %1705
  %v1709 = vadd.f32 %v1697, %v1704
  %v1710 = vadd.f32 %v1698, %v1706
  %v1711 = vlaneseq
  %v1712 = vshrl.u32 %v1711, 7
  %v1713 = vsub.s32 0, %v1712
  %v1714 = vrot.slane %v1692, %v1713
  %v1715 = vmul.f32 %v146, %v1714
  %v1716 = vmul.f32 %v150, %v1714
  %v1717 = vadd.f32 %v1709, %v1715
  %v1718 = vadd.f32 %v1710, %v1716
  %v1719 = vmul.f32 %v200, %v1714
  %v1720 = vmul.f32 %v204, %v1714
  %1723 = vrot.lane.b32.xlu0 %v1719, 127
  %v1724 = vpop.permute.xlu0 %1723
  %1725 = vrot.lane.b32.xlu0 %v1720, 127
  %v1726 = vpop.permute.xlu0 %1725
  %v1729 = vadd.f32 %v1717, %v1724
  %v1730 = vadd.f32 %v1718, %v1726
  %v1731 = vadd.f32 %v1729, %v277
  %v1732 = vadd.f32 %v1730, %v282
  %v1733 = vmax.f32 %v1731, 0.0
  %v1734 = vmax.f32 %v1732, 0.0
  %v1735 = vld [vmem:[%s0 + $0x22] sm:$0x1]
  %v1736 = vmul.f32 %v24, %v1714
  %v1737 = vmul.f32 %v29, %v1714
  %v1738 = vmul.f32 %v69, %v1714
  %v1739 = vmul.f32 %v73, %v1714
  %1742 = vrot.lane.b32.xlu0 %v1738, 127
  %v1743 = vpop.permute.xlu0 %1742
  %1744 = vrot.lane.b32.xlu0 %v1739, 127
  %v1745 = vpop.permute.xlu0 %1744
  %v1748 = vadd.f32 %v1736, %v1743
  %v1749 = vadd.f32 %v1737, %v1745
  %v1750 = vlaneseq
  %v1751 = vshrl.u32 %v1750, 7
  %v1752 = vsub.s32 0, %v1751
  %v1753 = vrot.slane %v1735, %v1752
  %v1754 = vmul.f32 %v146, %v1753
  %v1755 = vmul.f32 %v150, %v1753
  %v1756 = vadd.f32 %v1748, %v1754
  %v1757 = vadd.f32 %v1749, %v1755
  %v1758 = vmul.f32 %v200, %v1753
  %v1759 = vmul.f32 %v204, %v1753
  %1762 = vrot.lane.b32.xlu0 %v1758, 127
  %v1763 = vpop.permute.xlu0 %1762
  %1764 = vrot.lane.b32.xlu0 %v1759, 127
  %v1765 = vpop.permute.xlu0 %1764
  %v1768 = vadd.f32 %v1756, %v1763
  %v1769 = vadd.f32 %v1757, %v1765
  %v1770 = vadd.f32 %v1768, %v277
  %v1771 = vadd.f32 %v1769, %v282
  %v1772 = vmax.f32 %v1770, 0.0
  %v1773 = vmax.f32 %v1771, 0.0
  %v1774 = vmax.f32 %v1733, %v1772
  %v1775 = vmax.f32 %v1734, %v1773
  %1778 = vrot.lane.b32.xlu0 %v1774, 127
  %v1779 = vpop.permute.xlu0 %1778
  %1780 = vrot.lane.b32.xlu0 %v1775, 127
  %v1781 = vpop.permute.xlu0 %1780
  %v1784 = vmax.f32 %v1774, %v1779
  %v1785 = vmax.f32 %v1775, %v1781
  %vm1786 = vcmask 949248
  %1787 = vst.msk [vmem:[%s3 + $0x40] sm:$0xff] %vm1786, %v1784
  %1788 = vst.msk [vmem:[%s3 + $0x88] sm:$0xff] %vm1786, %v1785
  %v1789 = vld [vmem:[%s0 + $0x23] sm:$0x1]
  %v1790 = vmul.f32 %v24, %v1753
  %v1791 = vmul.f32 %v29, %v1753
  %v1792 = vmul.f32 %v69, %v1753
  %v1793 = vmul.f32 %v73, %v1753
  %1796 = vrot.lane.b32.xlu0 %v1792, 127
  %v1797 = vpop.permute.xlu0 %1796
  %1798 = vrot.lane.b32.xlu0 %v1793, 127
  %v1799 = vpop.permute.xlu0 %1798
  %v1802 = vadd.f32 %v1790, %v1797
  %v1803 = vadd.f32 %v1791, %v1799
  %v1804 = vlaneseq
  %v1805 = vshrl.u32 %v1804, 7
  %v1806 = vsub.s32 0, %v1805
  %v1807 = vrot.slane %v1789, %v1806
  %v1808 = vmul.f32 %v146, %v1807
  %v1809 = vmul.f32 %v150, %v1807
  %v1810 = vadd.f32 %v1802, %v1808
  %v1811 = vadd.f32 %v1803, %v1809
  %v1812 = vmul.f32 %v200, %v1807
  %v1813 = vmul.f32 %v204, %v1807
  %1816 = vrot.lane.b32.xlu0 %v1812, 127
  %v1817 = vpop.permute.xlu0 %1816
  %1818 = vrot.lane.b32.xlu0 %v1813, 127
  %v1819 = vpop.permute.xlu0 %1818
  %v1822 = vadd.f32 %v1810, %v1817
  %v1823 = vadd.f32 %v1811, %v1819
  %v1824 = vadd.f32 %v1822, %v277
  %v1825 = vadd.f32 %v1823, %v282
  %v1826 = vmax.f32 %v1824, 0.0
  %v1827 = vmax.f32 %v1825, 0.0
  %v1828 = vmax.f32 %v1772, %v1826
  %v1829 = vmax.f32 %v1773, %v1827
  %1832 = vrot.lane.b32.xlu0 %v1828, 127
  %v1833 = vpop.permute.xlu0 %1832
  %1834 = vrot.lane.b32.xlu0 %v1829, 127
  %v1835 = vpop.permute.xlu0 %1834
  %v1838 = vmax.f32 %v1828, %v1833
  %v1839 = vmax.f32 %v1829, %v1835
  %1840 = vst.msk [vmem:[%s868 + $0x40] sm:$0xff] %vm1786, %v1838
  %1841 = vst.msk [vmem:[%s868 + $0x88] sm:$0xff] %vm1786, %v1839
  %s1842 = scalar_lea.vmem %s0, 36
  %v1843 = vld [vmem:[%s1842] ss:$4 sm:$0x1f]
  %s1844 = scalar_lea.vmem %s1842, 1
  %v1845 = vld [vmem:[%s1844] ss:$4 sm:$0x1f]
  %v1847 = vlaneseq
  %v1848 = vshrl.u32 %v1847, 7
  %v1849 = vsub.s32 0, %v1848
  %v1850 = vrot.slane %v1843, %v1849
  %v1851 = vlaneseq
  %v1852 = vshrl.u32 %v1851, 7
  %v1853 = vsub.s32 1, %v1852
  %v1854 = vrot.slane %v1843, %v1853
  %v1855 = vlaneseq
  %v1856 = vshrl.u32 %v1855, 7
  %v1857 = vsub.s32 2, %v1856
  %v1858 = vrot.slane %v1843, %v1857
  %v1859 = vlaneseq
  %v1860 = vshrl.u32 %v1859, 7
  %v1861 = vsub.s32 3, %v1860
  %v1862 = vrot.slane %v1843, %v1861
  %v1863 = vlaneseq
  %v1864 = vshrl.u32 %v1863, 7
  %v1865 = vsub.s32 4, %v1864
  %v1866 = vrot.slane %v1843, %v1865
  %v1872 = vmul.f32 %v24, %v1850
  %v1873 = vmul.f32 %v24, %v1854
  %v1874 = vmul.f32 %v24, %v1858
  %v1875 = vmul.f32 %v24, %v1862
  %v1876 = vmul.f32 %v24, %v1866
  %v1877 = vmul.f32 %v29, %v1850
  %v1878 = vmul.f32 %v29, %v1854
  %v1879 = vmul.f32 %v29, %v1858
  %v1880 = vmul.f32 %v29, %v1862
  %v1881 = vmul.f32 %v29, %v1866
  %v1882 = vmul.f32 %v69, %v1850
  %v1883 = vmul.f32 %v69, %v1854
  %v1884 = vmul.f32 %v69, %v1858
  %v1885 = vmul.f32 %v69, %v1862
  %v1886 = vmul.f32 %v69, %v1866
  %v1887 = vmul.f32 %v73, %v1850
  %v1888 = vmul.f32 %v73, %v1854
  %v1889 = vmul.f32 %v73, %v1858
  %v1890 = vmul.f32 %v73, %v1862
  %v1891 = vmul.f32 %v73, %v1866
  %1902 = vrot.lane.b32.xlu0 %v1882, 127
  %v1903 = vpop.permute.xlu0 %1902
  %1904 = vrot.lane.b32.xlu0 %v1883, 127
  %v1905 = vpop.permute.xlu0 %1904
  %1906 = vrot.lane.b32.xlu0 %v1884, 127
  %v1907 = vpop.permute.xlu0 %1906
  %1908 = vrot.lane.b32.xlu0 %v1885, 127
  %v1909 = vpop.permute.xlu0 %1908
  %1910 = vrot.lane.b32.xlu0 %v1886, 127
  %v1911 = vpop.permute.xlu0 %1910
  %1912 = vrot.lane.b32.xlu0 %v1887, 127
  %v1913 = vpop.permute.xlu0 %1912
  %1914 = vrot.lane.b32.xlu0 %v1888, 127
  %v1915 = vpop.permute.xlu0 %1914
  %1916 = vrot.lane.b32.xlu0 %v1889, 127
  %v1917 = vpop.permute.xlu0 %1916
  %1918 = vrot.lane.b32.xlu0 %v1890, 127
  %v1919 = vpop.permute.xlu0 %1918
  %1920 = vrot.lane.b32.xlu0 %v1891, 127
  %v1921 = vpop.permute.xlu0 %1920
  %v1922 = vsel %vm115, %v1903, %v1905
  %v1923 = vsel %vm115, %v1905, %v1907
  %v1924 = vsel %vm115, %v1907, %v1909
  %v1925 = vsel %vm115, %v1909, %v1911
  %v1926 = vsel %vm115, %v1913, %v1915
  %v1927 = vsel %vm115, %v1915, %v1917
  %v1928 = vsel %vm115, %v1917, %v1919
  %v1929 = vsel %vm115, %v1919, %v1921
  %v1940 = vadd.f32 %v1872, %v1922
  %v1941 = vadd.f32 %v1873, %v1923
  %v1942 = vadd.f32 %v1874, %v1924
  %v1943 = vadd.f32 %v1875, %v1925
  %v1944 = vadd.f32 %v1876, %v1911
  %v1945 = vadd.f32 %v1877, %v1926
  %v1946 = vadd.f32 %v1878, %v1927
  %v1947 = vadd.f32 %v1879, %v1928
  %v1948 = vadd.f32 %v1880, %v1929
  %v1949 = vadd.f32 %v1881, %v1921
  %v1951 = vlaneseq
  %v1952 = vshrl.u32 %v1951, 7
  %v1953 = vsub.s32 0, %v1952
  %v1954 = vrot.slane %v1845, %v1953
  %v1955 = vlaneseq
  %v1956 = vshrl.u32 %v1955, 7
  %v1957 = vsub.s32 1, %v1956
  %v1958 = vrot.slane %v1845, %v1957
  %v1959 = vlaneseq
  %v1960 = vshrl.u32 %v1959, 7
  %v1961 = vsub.s32 2, %v1960
  %v1962 = vrot.slane %v1845, %v1961
  %v1963 = vlaneseq
  %v1964 = vshrl.u32 %v1963, 7
  %v1965 = vsub.s32 3, %v1964
  %v1966 = vrot.slane %v1845, %v1965
  %v1967 = vlaneseq
  %v1968 = vshrl.u32 %v1967, 7
  %v1969 = vsub.s32 4, %v1968
  %v1970 = vrot.slane %v1845, %v1969
  %v1976 = vmul.f32 %v146, %v1954
  %v1977 = vmul.f32 %v146, %v1958
  %v1978 = vmul.f32 %v146, %v1962
  %v1979 = vmul.f32 %v146, %v1966
  %v1980 = vmul.f32 %v146, %v1970
  %v1981 = vmul.f32 %v150, %v1954
  %v1982 = vmul.f32 %v150, %v1958
  %v1983 = vmul.f32 %v150, %v1962
  %v1984 = vmul.f32 %v150, %v1966
  %v1985 = vmul.f32 %v150, %v1970
  %v1986 = vadd.f32 %v1940, %v1976
  %v1987 = vadd.f32 %v1941, %v1977
  %v1988 = vadd.f32 %v1942, %v1978
  %v1989 = vadd.f32 %v1943, %v1979
  %v1990 = vadd.f32 %v1944, %v1980
  %v1991 = vadd.f32 %v1945, %v1981
  %v1992 = vadd.f32 %v1946, %v1982
  %v1993 = vadd.f32 %v1947, %v1983
  %v1994 = vadd.f32 %v1948, %v1984
  %v1995 = vadd.f32 %v1949, %v1985
  %v1996 = vmul.f32 %v200, %v1954
  %v1997 = vmul.f32 %v200, %v1958
  %v1998 = vmul.f32 %v200, %v1962
  %v1999 = vmul.f32 %v200, %v1966
  %v2000 = vmul.f32 %v200, %v1970
  %v2001 = vmul.f32 %v204, %v1954
  %v2002 = vmul.f32 %v204, %v1958
  %v2003 = vmul.f32 %v204, %v1962
  %v2004 = vmul.f32 %v204, %v1966
  %v2005 = vmul.f32 %v204, %v1970
  %2016 = vrot.lane.b32.xlu0 %v1996, 127
  %v2017 = vpop.permute.xlu0 %2016
  %2018 = vrot.lane.b32.xlu0 %v1997, 127
  %v2019 = vpop.permute.xlu0 %2018
  %2020 = vrot.lane.b32.xlu0 %v1998, 127
  %v2021 = vpop.permute.xlu0 %2020
  %2022 = vrot.lane.b32.xlu0 %v1999, 127
  %v2023 = vpop.permute.xlu0 %2022
  %2024 = vrot.lane.b32.xlu0 %v2000, 127
  %v2025 = vpop.permute.xlu0 %2024
  %2026 = vrot.lane.b32.xlu0 %v2001, 127
  %v2027 = vpop.permute.xlu0 %2026
  %2028 = vrot.lane.b32.xlu0 %v2002, 127
  %v2029 = vpop.permute.xlu0 %2028
  %2030 = vrot.lane.b32.xlu0 %v2003, 127
  %v2031 = vpop.permute.xlu0 %2030
  %2032 = vrot.lane.b32.xlu0 %v2004, 127
  %v2033 = vpop.permute.xlu0 %2032
  %2034 = vrot.lane.b32.xlu0 %v2005, 127
  %v2035 = vpop.permute.xlu0 %2034
  %v2036 = vsel %vm115, %v2017, %v2019
  %v2037 = vsel %vm115, %v2019, %v2021
  %v2038 = vsel %vm115, %v2021, %v2023
  %v2039 = vsel %vm115, %v2023, %v2025
  %v2040 = vsel %vm115, %v2027, %v2029
  %v2041 = vsel %vm115, %v2029, %v2031
  %v2042 = vsel %vm115, %v2031, %v2033
  %v2043 = vsel %vm115, %v2033, %v2035
  %v2054 = vadd.f32 %v1986, %v2036
  %v2055 = vadd.f32 %v1987, %v2037
  %v2056 = vadd.f32 %v1988, %v2038
  %v2057 = vadd.f32 %v1989, %v2039
  %v2058 = vadd.f32 %v1990, %v2025
  %v2059 = vadd.f32 %v1991, %v2040
  %v2060 = vadd.f32 %v1992, %v2041
  %v2061 = vadd.f32 %v1993, %v2042
  %v2062 = vadd.f32 %v1994, %v2043
  %v2063 = vadd.f32 %v1995, %v2035
  %v2064 = vadd.f32 %v2054, %v277
  %v2065 = vadd.f32 %v2055, %v277
  %v2066 = vadd.f32 %v2056, %v277
  %v2067 = vadd.f32 %v2057, %v277
  %v2068 = vadd.f32 %v2058, %v277
  %v2069 = vadd.f32 %v2059, %v282
  %v2070 = vadd.f32 %v2060, %v282
  %v2071 = vadd.f32 %v2061, %v282
  %v2072 = vadd.f32 %v2062, %v282
  %v2073 = vadd.f32 %v2063, %v282
  %v2074 = vmax.f32 %v2064, 0.0
  %v2075 = vmax.f32 %v2065, 0.0
  %v2076 = vmax.f32 %v2066, 0.0
  %v2077 = vmax.f32 %v2067, 0.0
  %v2078 = vmax.f32 %v2068, 0.0
  %v2079 = vmax.f32 %v2069, 0.0
  %v2080 = vmax.f32 %v2070, 0.0
  %v2081 = vmax.f32 %v2071, 0.0
  %v2082 = vmax.f32 %v2072, 0.0
  %v2083 = vmax.f32 %v2073, 0.0
  %s2084 = scalar_lea.vmem %s1842, 2
  %v2085 = vld [vmem:[%s2084] ss:$4 sm:$0x1f]
  %v2086 = vmul.f32 %v24, %v1954
  %v2087 = vmul.f32 %v24, %v1958
  %v2088 = vmul.f32 %v24, %v1962
  %v2089 = vmul.f32 %v24, %v1966
  %v2090 = vmul.f32 %v24, %v1970
  %v2091 = vmul.f32 %v29, %v1954
  %v2092 = vmul.f32 %v29, %v1958
  %v2093 = vmul.f32 %v29, %v1962
  %v2094 = vmul.f32 %v29, %v1966
  %v2095 = vmul.f32 %v29, %v1970
  %v2096 = vmul.f32 %v69, %v1954
  %v2097 = vmul.f32 %v69, %v1958
  %v2098 = vmul.f32 %v69, %v1962
  %v2099 = vmul.f32 %v69, %v1966
  %v2100 = vmul.f32 %v69, %v1970
  %v2101 = vmul.f32 %v73, %v1954
  %v2102 = vmul.f32 %v73, %v1958
  %v2103 = vmul.f32 %v73, %v1962
  %v2104 = vmul.f32 %v73, %v1966
  %v2105 = vmul.f32 %v73, %v1970
  %2116 = vrot.lane.b32.xlu0 %v2096, 127
  %v2117 = vpop.permute.xlu0 %2116
  %2118 = vrot.lane.b32.xlu0 %v2097, 127
  %v2119 = vpop.permute.xlu0 %2118
  %2120 = vrot.lane.b32.xlu0 %v2098, 127
  %v2121 = vpop.permute.xlu0 %2120
  %2122 = vrot.lane.b32.xlu0 %v2099, 127
  %v2123 = vpop.permute.xlu0 %2122
  %2124 = vrot.lane.b32.xlu0 %v2100, 127
  %v2125 = vpop.permute.xlu0 %2124
  %2126 = vrot.lane.b32.xlu0 %v2101, 127
  %v2127 = vpop.permute.xlu0 %2126
  %2128 = vrot.lane.b32.xlu0 %v2102, 127
  %v2129 = vpop.permute.xlu0 %2128
  %2130 = vrot.lane.b32.xlu0 %v2103, 127
  %v2131 = vpop.permute.xlu0 %2130
  %2132 = vrot.lane.b32.xlu0 %v2104, 127
  %v2133 = vpop.permute.xlu0 %2132
  %2134 = vrot.lane.b32.xlu0 %v2105, 127
  %v2135 = vpop.permute.xlu0 %2134
  %v2136 = vsel %vm115, %v2117, %v2119
  %v2137 = vsel %vm115, %v2119, %v2121
  %v2138 = vsel %vm115, %v2121, %v2123
  %v2139 = vsel %vm115, %v2123, %v2125
  %v2140 = vsel %vm115, %v2127, %v2129
  %v2141 = vsel %vm115, %v2129, %v2131
  %v2142 = vsel %vm115, %v2131, %v2133
  %v2143 = vsel %vm115, %v2133, %v2135
  %v2154 = vadd.f32 %v2086, %v2136
  %v2155 = vadd.f32 %v2087, %v2137
  %v2156 = vadd.f32 %v2088, %v2138
  %v2157 = vadd.f32 %v2089, %v2139
  %v2158 = vadd.f32 %v2090, %v2125
  %v2159 = vadd.f32 %v2091, %v2140
  %v2160 = vadd.f32 %v2092, %v2141
  %v2161 = vadd.f32 %v2093, %v2142
  %v2162 = vadd.f32 %v2094, %v2143
  %v2163 = vadd.f32 %v2095, %v2135
  %v2165 = vlaneseq
  %v2166 = vshrl.u32 %v2165, 7
  %v2167 = vsub.s32 0, %v2166
  %v2168 = vrot.slane %v2085, %v2167
  %v2169 = vlaneseq
  %v2170 = vshrl.u32 %v2169, 7
  %v2171 = vsub.s32 1, %v2170
  %v2172 = vrot.slane %v2085, %v2171
  %v2173 = vlaneseq
  %v2174 = vshrl.u32 %v2173, 7
  %v2175 = vsub.s32 2, %v2174
  %v2176 = vrot.slane %v2085, %v2175
  %v2177 = vlaneseq
  %v2178 = vshrl.u32 %v2177, 7
  %v2179 = vsub.s32 3, %v2178
  %v2180 = vrot.slane %v2085, %v2179
  %v2181 = vlaneseq
  %v2182 = vshrl.u32 %v2181, 7
  %v2183 = vsub.s32 4, %v2182
  %v2184 = vrot.slane %v2085, %v2183
  %v2190 = vmul.f32 %v146, %v2168
  %v2191 = vmul.f32 %v146, %v2172
  %v2192 = vmul.f32 %v146, %v2176
  %v2193 = vmul.f32 %v146, %v2180
  %v2194 = vmul.f32 %v146, %v2184
  %v2195 = vmul.f32 %v150, %v2168
  %v2196 = vmul.f32 %v150, %v2172
  %v2197 = vmul.f32 %v150, %v2176
  %v2198 = vmul.f32 %v150, %v2180
  %v2199 = vmul.f32 %v150, %v2184
  %v2200 = vadd.f32 %v2154, %v2190
  %v2201 = vadd.f32 %v2155, %v2191
  %v2202 = vadd.f32 %v2156, %v2192
  %v2203 = vadd.f32 %v2157, %v2193
  %v2204 = vadd.f32 %v2158, %v2194
  %v2205 = vadd.f32 %v2159, %v2195
  %v2206 = vadd.f32 %v2160, %v2196
  %v2207 = vadd.f32 %v2161, %v2197
  %v2208 = vadd.f32 %v2162, %v2198
  %v2209 = vadd.f32 %v2163, %v2199
  %v2210 = vmul.f32 %v200, %v2168
  %v2211 = vmul.f32 %v200, %v2172
  %v2212 = vmul.f32 %v200, %v2176
  %v2213 = vmul.f32 %v200, %v2180
  %v2214 = vmul.f32 %v200, %v2184
  %v2215 = vmul.f32 %v204, %v2168
  %v2216 = vmul.f32 %v204, %v2172
  %v2217 = vmul.f32 %v204, %v2176
  %v2218 = vmul.f32 %v204, %v2180
  %v2219 = vmul.f32 %v204, %v2184
  %2230 = vrot.lane.b32.xlu0 %v2210, 127
  %v2231 = vpop.permute.xlu0 %2230
  %2232 = vrot.lane.b32.xlu0 %v2211, 127
  %v2233 = vpop.permute.xlu0 %2232
  %2234 = vrot.lane.b32.xlu0 %v2212, 127
  %v2235 = vpop.permute.xlu0 %2234
  %2236 = vrot.lane.b32.xlu0 %v2213, 127
  %v2237 = vpop.permute.xlu0 %2236
  %2238 = vrot.lane.b32.xlu0 %v2214, 127
  %v2239 = vpop.permute.xlu0 %2238
  %2240 = vrot.lane.b32.xlu0 %v2215, 127
  %v2241 = vpop.permute.xlu0 %2240
  %2242 = vrot.lane.b32.xlu0 %v2216, 127
  %v2243 = vpop.permute.xlu0 %2242
  %2244 = vrot.lane.b32.xlu0 %v2217, 127
  %v2245 = vpop.permute.xlu0 %2244
  %2246 = vrot.lane.b32.xlu0 %v2218, 127
  %v2247 = vpop.permute.xlu0 %2246
  %2248 = vrot.lane.b32.xlu0 %v2219, 127
  %v2249 = vpop.permute.xlu0 %2248
  %v2250 = vsel %vm115, %v2231, %v2233
  %v2251 = vsel %vm115, %v2233, %v2235
  %v2252 = vsel %vm115, %v2235, %v2237
  %v2253 = vsel %vm115, %v2237, %v2239
  %v2254 = vsel %vm115, %v2241, %v2243
  %v2255 = vsel %vm115, %v2243, %v2245
  %v2256 = vsel %vm115, %v2245, %v2247
  %v2257 = vsel %vm115, %v2247, %v2249
  %v2268 = vadd.f32 %v2200, %v2250
  %v2269 = vadd.f32 %v2201, %v2251
  %v2270 = vadd.f32 %v2202, %v2252
  %v2271 = vadd.f32 %v2203, %v2253
  %v2272 = vadd.f32 %v2204, %v2239
  %v2273 = vadd.f32 %v2205, %v2254
  %v2274 = vadd.f32 %v2206, %v2255
  %v2275 = vadd.f32 %v2207, %v2256
  %v2276 = vadd.f32 %v2208, %v2257
  %v2277 = vadd.f32 %v2209, %v2249
  %v2278 = vadd.f32 %v2268, %v277
  %v2279 = vadd.f32 %v2269, %v277
  %v2280 = vadd.f32 %v2270, %v277
  %v2281 = vadd.f32 %v2271, %v277
  %v2282 = vadd.f32 %v2272, %v277
  %v2283 = vadd.f32 %v2273, %v282
  %v2284 = vadd.f32 %v2274, %v282
  %v2285 = vadd.f32 %v2275, %v282
  %v2286 = vadd.f32 %v2276, %v282
  %v2287 = vadd.f32 %v2277, %v282
  %v2288 = vmax.f32 %v2278, 0.0
  %v2289 = vmax.f32 %v2279, 0.0
  %v2290 = vmax.f32 %v2280, 0.0
  %v2291 = vmax.f32 %v2281, 0.0
  %v2292 = vmax.f32 %v2282, 0.0
  %v2293 = vmax.f32 %v2283, 0.0
  %v2294 = vmax.f32 %v2284, 0.0
  %v2295 = vmax.f32 %v2285, 0.0
  %v2296 = vmax.f32 %v2286, 0.0
  %v2297 = vmax.f32 %v2287, 0.0
  %v2298 = vmax.f32 %v2074, %v2288
  %v2299 = vmax.f32 %v2075, %v2289
  %v2300 = vmax.f32 %v2076, %v2290
  %v2301 = vmax.f32 %v2077, %v2291
  %v2302 = vmax.f32 %v2078, %v2292
  %v2303 = vmax.f32 %v2079, %v2293
  %v2304 = vmax.f32 %v2080, %v2294
  %v2305 = vmax.f32 %v2081, %v2295
  %v2306 = vmax.f32 %v2082, %v2296
  %v2307 = vmax.f32 %v2083, %v2297
  %2318 = vrot.lane.b32.xlu0 %v2298, 127
  %v2319 = vpop.permute.xlu0 %2318
  %2320 = vrot.lane.b32.xlu0 %v2299, 127
  %v2321 = vpop.permute.xlu0 %2320
  %2322 = vrot.lane.b32.xlu0 %v2300, 127
  %v2323 = vpop.permute.xlu0 %2322
  %2324 = vrot.lane.b32.xlu0 %v2301, 127
  %v2325 = vpop.permute.xlu0 %2324
  %2326 = vrot.lane.b32.xlu0 %v2302, 127
  %v2327 = vpop.permute.xlu0 %2326
  %2328 = vrot.lane.b32.xlu0 %v2303, 127
  %v2329 = vpop.permute.xlu0 %2328
  %2330 = vrot.lane.b32.xlu0 %v2304, 127
  %v2331 = vpop.permute.xlu0 %2330
  %2332 = vrot.lane.b32.xlu0 %v2305, 127
  %v2333 = vpop.permute.xlu0 %2332
  %2334 = vrot.lane.b32.xlu0 %v2306, 127
  %v2335 = vpop.permute.xlu0 %2334
  %2336 = vrot.lane.b32.xlu0 %v2307, 127
  %v2337 = vpop.permute.xlu0 %2336
  %v2338 = vsel %vm115, %v2319, %v2321
  %v2339 = vsel %vm115, %v2321, %v2323
  %v2340 = vsel %vm115, %v2323, %v2325
  %v2341 = vsel %vm115, %v2325, %v2327
  %v2342 = vsel %vm115, %v2329, %v2331
  %v2343 = vsel %vm115, %v2331, %v2333
  %v2344 = vsel %vm115, %v2333, %v2335
  %v2345 = vsel %vm115, %v2335, %v2337
  %v2354 = vmax.f32 %v2298, %v2338
  %v2355 = vmax.f32 %v2299, %v2339
  %v2356 = vmax.f32 %v2300, %v2340
  %v2357 = vmax.f32 %v2301, %v2341
  %v2358 = vmax.f32 %v2303, %v2342
  %v2359 = vmax.f32 %v2304, %v2343
  %v2360 = vmax.f32 %v2305, %v2344
  %v2361 = vmax.f32 %v2306, %v2345
  %s2362 = scalar_lea.vmem %s3, 288
  %2363 = vst [vmem:[%s2362] sm:$0xff] %v2354
  %2364 = vst [vmem:[%s2362 + $0x8] sm:$0xff] %v2355
  %2365 = vst [vmem:[%s2362 + $0x10] sm:$0xff] %v2356
  %2366 = vst [vmem:[%s2362 + $0x18] sm:$0xff] %v2357
  %2367 = vst [vmem:[%s2362 + $0x48] sm:$0xff] %v2358
  %2368 = vst [vmem:[%s2362 + $0x50] sm:$0xff] %v2359
  %2369 = vst [vmem:[%s2362 + $0x58] sm:$0xff] %v2360
  %2370 = vst [vmem:[%s2362 + $0x60] sm:$0xff] %v2361
  %s2371 = scalar_lea.vmem %s1842, 3
  %v2372 = vld [vmem:[%s2371] ss:$4 sm:$0x1f]
  %v2373 = vmul.f32 %v24, %v2168
  %v2374 = vmul.f32 %v24, %v2172
  %v2375 = vmul.f32 %v24, %v2176
  %v2376 = vmul.f32 %v24, %v2180
  %v2377 = vmul.f32 %v24, %v2184
  %v2378 = vmul.f32 %v29, %v2168
  %v2379 = vmul.f32 %v29, %v2172
  %v2380 = vmul.f32 %v29, %v2176
  %v2381 = vmul.f32 %v29, %v2180
  %v2382 = vmul.f32 %v29, %v2184
  %v2383 = vmul.f32 %v69, %v2168
  %v2384 = vmul.f32 %v69, %v2172
  %v2385 = vmul.f32 %v69, %v2176
  %v2386 = vmul.f32 %v69, %v2180
  %v2387 = vmul.f32 %v69, %v2184
  %v2388 = vmul.f32 %v73, %v2168
  %v2389 = vmul.f32 %v73, %v2172
  %v2390 = vmul.f32 %v73, %v2176
  %v2391 = vmul.f32 %v73, %v2180
  %v2392 = vmul.f32 %v73, %v2184
  %2403 = vrot.lane.b32.xlu0 %v2383, 127
  %v2404 = vpop.permute.xlu0 %2403
  %2405 = vrot.lane.b32.xlu0 %v2384, 127
  %v2406 = vpop.permute.xlu0 %2405
  %2407 = vrot.lane.b32.xlu0 %v2385, 127
  %v2408 = vpop.permute.xlu0 %2407
  %2409 = vrot.lane.b32.xlu0 %v2386, 127
  %v2410 = vpop.permute.xlu0 %2409
  %2411 = vrot.lane.b32.xlu0 %v2387, 127
  %v2412 = vpop.permute.xlu0 %2411
  %2413 = vrot.lane.b32.xlu0 %v2388, 127
  %v2414 = vpop.permute.xlu0 %2413
  %2415 = vrot.lane.b32.xlu0 %v2389, 127
  %v2416 = vpop.permute.xlu0 %2415
  %2417 = vrot.lane.b32.xlu0 %v2390, 127
  %v2418 = vpop.permute.xlu0 %2417
  %2419 = vrot.lane.b32.xlu0 %v2391, 127
  %v2420 = vpop.permute.xlu0 %2419
  %2421 = vrot.lane.b32.xlu0 %v2392, 127
  %v2422 = vpop.permute.xlu0 %2421
  %v2423 = vsel %vm115, %v2404, %v2406
  %v2424 = vsel %vm115, %v2406, %v2408
  %v2425 = vsel %vm115, %v2408, %v2410
  %v2426 = vsel %vm115, %v2410, %v2412
  %v2427 = vsel %vm115, %v2414, %v2416
  %v2428 = vsel %vm115, %v2416, %v2418
  %v2429 = vsel %vm115, %v2418, %v2420
  %v2430 = vsel %vm115, %v2420, %v2422
  %v2441 = vadd.f32 %v2373, %v2423
  %v2442 = vadd.f32 %v2374, %v2424
  %v2443 = vadd.f32 %v2375, %v2425
  %v2444 = vadd.f32 %v2376, %v2426
  %v2445 = vadd.f32 %v2377, %v2412
  %v2446 = vadd.f32 %v2378, %v2427
  %v2447 = vadd.f32 %v2379, %v2428
  %v2448 = vadd.f32 %v2380, %v2429
  %v2449 = vadd.f32 %v2381, %v2430
  %v2450 = vadd.f32 %v2382, %v2422
  %v2452 = vlaneseq
  %v2453 = vshrl.u32 %v2452, 7
  %v2454 = vsub.s32 0, %v2453
  %v2455 = vrot.slane %v2372, %v2454
  %v2456 = vlaneseq
  %v2457 = vshrl.u32 %v2456, 7
  %v2458 = vsub.s32 1, %v2457
  %v2459 = vrot.slane %v2372, %v2458
  %v2460 = vlaneseq
  %v2461 = vshrl.u32 %v2460, 7
  %v2462 = vsub.s32 2, %v2461
  %v2463 = vrot.slane %v2372, %v2462
  %v2464 = vlaneseq
  %v2465 = vshrl.u32 %v2464, 7
  %v2466 = vsub.s32 3, %v2465
  %v2467 = vrot.slane %v2372, %v2466
  %v2468 = vlaneseq
  %v2469 = vshrl.u32 %v2468, 7
  %v2470 = vsub.s32 4, %v2469
  %v2471 = vrot.slane %v2372, %v2470
  %v2477 = vmul.f32 %v146, %v2455
  %v2478 = vmul.f32 %v146, %v2459
  %v2479 = vmul.f32 %v146, %v2463
  %v2480 = vmul.f32 %v146, %v2467
  %v2481 = vmul.f32 %v146, %v2471
  %v2482 = vmul.f32 %v150, %v2455
  %v2483 = vmul.f32 %v150, %v2459
  %v2484 = vmul.f32 %v150, %v2463
  %v2485 = vmul.f32 %v150, %v2467
  %v2486 = vmul.f32 %v150, %v2471
  %v2487 = vadd.f32 %v2441, %v2477
  %v2488 = vadd.f32 %v2442, %v2478
  %v2489 = vadd.f32 %v2443, %v2479
  %v2490 = vadd.f32 %v2444, %v2480
  %v2491 = vadd.f32 %v2445, %v2481
  %v2492 = vadd.f32 %v2446, %v2482
  %v2493 = vadd.f32 %v2447, %v2483
  %v2494 = vadd.f32 %v2448, %v2484
  %v2495 = vadd.f32 %v2449, %v2485
  %v2496 = vadd.f32 %v2450, %v2486
  %v2497 = vmul.f32 %v200, %v2455
  %v2498 = vmul.f32 %v200, %v2459
  %v2499 = vmul.f32 %v200, %v2463
  %v2500 = vmul.f32 %v200, %v2467
  %v2501 = vmul.f32 %v200, %v2471
  %v2502 = vmul.f32 %v204, %v2455
  %v2503 = vmul.f32 %v204, %v2459
  %v2504 = vmul.f32 %v204, %v2463
  %v2505 = vmul.f32 %v204, %v2467
  %v2506 = vmul.f32 %v204, %v2471
  %2517 = vrot.lane.b32.xlu0 %v2497, 127
  %v2518 = vpop.permute.xlu0 %2517
  %2519 = vrot.lane.b32.xlu0 %v2498, 127
  %v2520 = vpop.permute.xlu0 %2519
  %2521 = vrot.lane.b32.xlu0 %v2499, 127
  %v2522 = vpop.permute.xlu0 %2521
  %2523 = vrot.lane.b32.xlu0 %v2500, 127
  %v2524 = vpop.permute.xlu0 %2523
  %2525 = vrot.lane.b32.xlu0 %v2501, 127
  %v2526 = vpop.permute.xlu0 %2525
  %2527 = vrot.lane.b32.xlu0 %v2502, 127
  %v2528 = vpop.permute.xlu0 %2527
  %2529 = vrot.lane.b32.xlu0 %v2503, 127
  %v2530 = vpop.permute.xlu0 %2529
  %2531 = vrot.lane.b32.xlu0 %v2504, 127
  %v2532 = vpop.permute.xlu0 %2531
  %2533 = vrot.lane.b32.xlu0 %v2505, 127
  %v2534 = vpop.permute.xlu0 %2533
  %2535 = vrot.lane.b32.xlu0 %v2506, 127
  %v2536 = vpop.permute.xlu0 %2535
  %v2537 = vsel %vm115, %v2518, %v2520
  %v2538 = vsel %vm115, %v2520, %v2522
  %v2539 = vsel %vm115, %v2522, %v2524
  %v2540 = vsel %vm115, %v2524, %v2526
  %v2541 = vsel %vm115, %v2528, %v2530
  %v2542 = vsel %vm115, %v2530, %v2532
  %v2543 = vsel %vm115, %v2532, %v2534
  %v2544 = vsel %vm115, %v2534, %v2536
  %v2555 = vadd.f32 %v2487, %v2537
  %v2556 = vadd.f32 %v2488, %v2538
  %v2557 = vadd.f32 %v2489, %v2539
  %v2558 = vadd.f32 %v2490, %v2540
  %v2559 = vadd.f32 %v2491, %v2526
  %v2560 = vadd.f32 %v2492, %v2541
  %v2561 = vadd.f32 %v2493, %v2542
  %v2562 = vadd.f32 %v2494, %v2543
  %v2563 = vadd.f32 %v2495, %v2544
  %v2564 = vadd.f32 %v2496, %v2536
  %v2565 = vadd.f32 %v2555, %v277
  %v2566 = vadd.f32 %v2556, %v277
  %v2567 = vadd.f32 %v2557, %v277
  %v2568 = vadd.f32 %v2558, %v277
  %v2569 = vadd.f32 %v2559, %v277
  %v2570 = vadd.f32 %v2560, %v282
  %v2571 = vadd.f32 %v2561, %v282
  %v2572 = vadd.f32 %v2562, %v282
  %v2573 = vadd.f32 %v2563, %v282
  %v2574 = vadd.f32 %v2564, %v282
  %v2575 = vmax.f32 %v2565, 0.0
  %v2576 = vmax.f32 %v2566, 0.0
  %v2577 = vmax.f32 %v2567, 0.0
  %v2578 = vmax.f32 %v2568, 0.0
  %v2579 = vmax.f32 %v2569, 0.0
  %v2580 = vmax.f32 %v2570, 0.0
  %v2581 = vmax.f32 %v2571, 0.0
  %v2582 = vmax.f32 %v2572, 0.0
  %v2583 = vmax.f32 %v2573, 0.0
  %v2584 = vmax.f32 %v2574, 0.0
  %v2585 = vmax.f32 %v2288, %v2575
  %v2586 = vmax.f32 %v2289, %v2576
  %v2587 = vmax.f32 %v2290, %v2577
  %v2588 = vmax.f32 %v2291, %v2578
  %v2589 = vmax.f32 %v2292, %v2579
  %v2590 = vmax.f32 %v2293, %v2580
  %v2591 = vmax.f32 %v2294, %v2581
  %v2592 = vmax.f32 %v2295, %v2582
  %v2593 = vmax.f32 %v2296, %v2583
  %v2594 = vmax.f32 %v2297, %v2584
  %2605 = vrot.lane.b32.xlu0 %v2585, 127
  %v2606 = vpop.permute.xlu0 %2605
  %2607 = vrot.lane.b32.xlu0 %v2586, 127
  %v2608 = vpop.permute.xlu0 %2607
  %2609 = vrot.lane.b32.xlu0 %v2587, 127
  %v2610 = vpop.permute.xlu0 %2609
  %2611 = vrot.lane.b32.xlu0 %v2588, 127
  %v2612 = vpop.permute.xlu0 %2611
  %2613 = vrot.lane.b32.xlu0 %v2589, 127
  %v2614 = vpop.permute.xlu0 %2613
  %2615 = vrot.lane.b32.xlu0 %v2590, 127
  %v2616 = vpop.permute.xlu0 %2615
  %2617 = vrot.lane.b32.xlu0 %v2591, 127
  %v2618 = vpop.permute.xlu0 %2617
  %2619 = vrot.lane.b32.xlu0 %v2592, 127
  %v2620 = vpop.permute.xlu0 %2619
  %2621 = vrot.lane.b32.xlu0 %v2593, 127
  %v2622 = vpop.permute.xlu0 %2621
  %2623 = vrot.lane.b32.xlu0 %v2594, 127
  %v2624 = vpop.permute.xlu0 %2623
  %v2625 = vsel %vm115, %v2606, %v2608
  %v2626 = vsel %vm115, %v2608, %v2610
  %v2627 = vsel %vm115, %v2610, %v2612
  %v2628 = vsel %vm115, %v2612, %v2614
  %v2629 = vsel %vm115, %v2616, %v2618
  %v2630 = vsel %vm115, %v2618, %v2620
  %v2631 = vsel %vm115, %v2620, %v2622
  %v2632 = vsel %vm115, %v2622, %v2624
  %v2641 = vmax.f32 %v2585, %v2625
  %v2642 = vmax.f32 %v2586, %v2626
  %v2643 = vmax.f32 %v2587, %v2627
  %v2644 = vmax.f32 %v2588, %v2628
  %v2645 = vmax.f32 %v2590, %v2629
  %v2646 = vmax.f32 %v2591, %v2630
  %v2647 = vmax.f32 %v2592, %v2631
  %v2648 = vmax.f32 %v2593, %v2632
  %s2649 = scalar_lea.vmem %s3, 432
  %2650 = vst [vmem:[%s2649] sm:$0xff] %v2641
  %2651 = vst [vmem:[%s2649 + $0x8] sm:$0xff] %v2642
  %2652 = vst [vmem:[%s2649 + $0x10] sm:$0xff] %v2643
  %2653 = vst [vmem:[%s2649 + $0x18] sm:$0xff] %v2644
  %2654 = vst [vmem:[%s2649 + $0x48] sm:$0xff] %v2645
  %2655 = vst [vmem:[%s2649 + $0x50] sm:$0xff] %v2646
  %2656 = vst [vmem:[%s2649 + $0x58] sm:$0xff] %v2647
  %2657 = vst [vmem:[%s2649 + $0x60] sm:$0xff] %v2648
  %s2658 = scalar_lea.vmem %s1842, 16
  %v2659 = vld [vmem:[%s2658] ss:$4 sm:$0x1f]
  %s2660 = scalar_lea.vmem %s1842, 17
  %v2661 = vld [vmem:[%s2660] ss:$4 sm:$0x1f]
  %v2663 = vlaneseq
  %v2664 = vshrl.u32 %v2663, 7
  %v2665 = vsub.s32 0, %v2664
  %v2666 = vrot.slane %v2659, %v2665
  %v2667 = vlaneseq
  %v2668 = vshrl.u32 %v2667, 7
  %v2669 = vsub.s32 1, %v2668
  %v2670 = vrot.slane %v2659, %v2669
  %v2671 = vlaneseq
  %v2672 = vshrl.u32 %v2671, 7
  %v2673 = vsub.s32 2, %v2672
  %v2674 = vrot.slane %v2659, %v2673
  %v2675 = vlaneseq
  %v2676 = vshrl.u32 %v2675, 7
  %v2677 = vsub.s32 3, %v2676
  %v2678 = vrot.slane %v2659, %v2677
  %v2679 = vlaneseq
  %v2680 = vshrl.u32 %v2679, 7
  %v2681 = vsub.s32 4, %v2680
  %v2682 = vrot.slane %v2659, %v2681
  %v2688 = vmul.f32 %v24, %v2666
  %v2689 = vmul.f32 %v24, %v2670
  %v2690 = vmul.f32 %v24, %v2674
  %v2691 = vmul.f32 %v24, %v2678
  %v2692 = vmul.f32 %v24, %v2682
  %v2693 = vmul.f32 %v29, %v2666
  %v2694 = vmul.f32 %v29, %v2670
  %v2695 = vmul.f32 %v29, %v2674
  %v2696 = vmul.f32 %v29, %v2678
  %v2697 = vmul.f32 %v29, %v2682
  %v2698 = vmul.f32 %v69, %v2666
  %v2699 = vmul.f32 %v69, %v2670
  %v2700 = vmul.f32 %v69, %v2674
  %v2701 = vmul.f32 %v69, %v2678
  %v2702 = vmul.f32 %v69, %v2682
  %v2703 = vmul.f32 %v73, %v2666
  %v2704 = vmul.f32 %v73, %v2670
  %v2705 = vmul.f32 %v73, %v2674
  %v2706 = vmul.f32 %v73, %v2678
  %v2707 = vmul.f32 %v73, %v2682
  %2718 = vrot.lane.b32.xlu0 %v2698, 127
  %v2719 = vpop.permute.xlu0 %2718
  %2720 = vrot.lane.b32.xlu0 %v2699, 127
  %v2721 = vpop.permute.xlu0 %2720
  %2722 = vrot.lane.b32.xlu0 %v2700, 127
  %v2723 = vpop.permute.xlu0 %2722
  %2724 = vrot.lane.b32.xlu0 %v2701, 127
  %v2725 = vpop.permute.xlu0 %2724
  %2726 = vrot.lane.b32.xlu0 %v2702, 127
  %v2727 = vpop.permute.xlu0 %2726
  %2728 = vrot.lane.b32.xlu0 %v2703, 127
  %v2729 = vpop.permute.xlu0 %2728
  %2730 = vrot.lane.b32.xlu0 %v2704, 127
  %v2731 = vpop.permute.xlu0 %2730
  %2732 = vrot.lane.b32.xlu0 %v2705, 127
  %v2733 = vpop.permute.xlu0 %2732
  %2734 = vrot.lane.b32.xlu0 %v2706, 127
  %v2735 = vpop.permute.xlu0 %2734
  %2736 = vrot.lane.b32.xlu0 %v2707, 127
  %v2737 = vpop.permute.xlu0 %2736
  %v2738 = vsel %vm115, %v2719, %v2721
  %v2739 = vsel %vm115, %v2721, %v2723
  %v2740 = vsel %vm115, %v2723, %v2725
  %v2741 = vsel %vm115, %v2725, %v2727
  %v2742 = vsel %vm115, %v2729, %v2731
  %v2743 = vsel %vm115, %v2731, %v2733
  %v2744 = vsel %vm115, %v2733, %v2735
  %v2745 = vsel %vm115, %v2735, %v2737
  %v2756 = vadd.f32 %v2688, %v2738
  %v2757 = vadd.f32 %v2689, %v2739
  %v2758 = vadd.f32 %v2690, %v2740
  %v2759 = vadd.f32 %v2691, %v2741
  %v2760 = vadd.f32 %v2692, %v2727
  %v2761 = vadd.f32 %v2693, %v2742
  %v2762 = vadd.f32 %v2694, %v2743
  %v2763 = vadd.f32 %v2695, %v2744
  %v2764 = vadd.f32 %v2696, %v2745
  %v2765 = vadd.f32 %v2697, %v2737
  %v2767 = vlaneseq
  %v2768 = vshrl.u32 %v2767, 7
  %v2769 = vsub.s32 0, %v2768
  %v2770 = vrot.slane %v2661, %v2769
  %v2771 = vlaneseq
  %v2772 = vshrl.u32 %v2771, 7
  %v2773 = vsub.s32 1, %v2772
  %v2774 = vrot.slane %v2661, %v2773
  %v2775 = vlaneseq
  %v2776 = vshrl.u32 %v2775, 7
  %v2777 = vsub.s32 2, %v2776
  %v2778 = vrot.slane %v2661, %v2777
  %v2779 = vlaneseq
  %v2780 = vshrl.u32 %v2779, 7
  %v2781 = vsub.s32 3, %v2780
  %v2782 = vrot.slane %v2661, %v2781
  %v2783 = vlaneseq
  %v2784 = vshrl.u32 %v2783, 7
  %v2785 = vsub.s32 4, %v2784
  %v2786 = vrot.slane %v2661, %v2785
  %v2792 = vmul.f32 %v146, %v2770
  %v2793 = vmul.f32 %v146, %v2774
  %v2794 = vmul.f32 %v146, %v2778
  %v2795 = vmul.f32 %v146, %v2782
  %v2796 = vmul.f32 %v146, %v2786
  %v2797 = vmul.f32 %v150, %v2770
  %v2798 = vmul.f32 %v150, %v2774
  %v2799 = vmul.f32 %v150, %v2778
  %v2800 = vmul.f32 %v150, %v2782
  %v2801 = vmul.f32 %v150, %v2786
  %v2802 = vadd.f32 %v2756, %v2792
  %v2803 = vadd.f32 %v2757, %v2793
  %v2804 = vadd.f32 %v2758, %v2794
  %v2805 = vadd.f32 %v2759, %v2795
  %v2806 = vadd.f32 %v2760, %v2796
  %v2807 = vadd.f32 %v2761, %v2797
  %v2808 = vadd.f32 %v2762, %v2798
  %v2809 = vadd.f32 %v2763, %v2799
  %v2810 = vadd.f32 %v2764, %v2800
  %v2811 = vadd.f32 %v2765, %v2801
  %v2812 = vmul.f32 %v200, %v2770
  %v2813 = vmul.f32 %v200, %v2774
  %v2814 = vmul.f32 %v200, %v2778
  %v2815 = vmul.f32 %v200, %v2782
  %v2816 = vmul.f32 %v200, %v2786
  %v2817 = vmul.f32 %v204, %v2770
  %v2818 = vmul.f32 %v204, %v2774
  %v2819 = vmul.f32 %v204, %v2778
  %v2820 = vmul.f32 %v204, %v2782
  %v2821 = vmul.f32 %v204, %v2786
  %2832 = vrot.lane.b32.xlu0 %v2812, 127
  %v2833 = vpop.permute.xlu0 %2832
  %2834 = vrot.lane.b32.xlu0 %v2813, 127
  %v2835 = vpop.permute.xlu0 %2834
  %2836 = vrot.lane.b32.xlu0 %v2814, 127
  %v2837 = vpop.permute.xlu0 %2836
  %2838 = vrot.lane.b32.xlu0 %v2815, 127
  %v2839 = vpop.permute.xlu0 %2838
  %2840 = vrot.lane.b32.xlu0 %v2816, 127
  %v2841 = vpop.permute.xlu0 %2840
  %2842 = vrot.lane.b32.xlu0 %v2817, 127
  %v2843 = vpop.permute.xlu0 %2842
  %2844 = vrot.lane.b32.xlu0 %v2818, 127
  %v2845 = vpop.permute.xlu0 %2844
  %2846 = vrot.lane.b32.xlu0 %v2819, 127
  %v2847 = vpop.permute.xlu0 %2846
  %2848 = vrot.lane.b32.xlu0 %v2820, 127
  %v2849 = vpop.permute.xlu0 %2848
  %2850 = vrot.lane.b32.xlu0 %v2821, 127
  %v2851 = vpop.permute.xlu0 %2850
  %v2852 = vsel %vm115, %v2833, %v2835
  %v2853 = vsel %vm115, %v2835, %v2837
  %v2854 = vsel %vm115, %v2837, %v2839
  %v2855 = vsel %vm115, %v2839, %v2841
  %v2856 = vsel %vm115, %v2843, %v2845
  %v2857 = vsel %vm115, %v2845, %v2847
  %v2858 = vsel %vm115, %v2847, %v2849
  %v2859 = vsel %vm115, %v2849, %v2851
  %v2870 = vadd.f32 %v2802, %v2852
  %v2871 = vadd.f32 %v2803, %v2853
  %v2872 = vadd.f32 %v2804, %v2854
  %v2873 = vadd.f32 %v2805, %v2855
  %v2874 = vadd.f32 %v2806, %v2841
  %v2875 = vadd.f32 %v2807, %v2856
  %v2876 = vadd.f32 %v2808, %v2857
  %v2877 = vadd.f32 %v2809, %v2858
  %v2878 = vadd.f32 %v2810, %v2859
  %v2879 = vadd.f32 %v2811, %v2851
  %v2880 = vadd.f32 %v2870, %v277
  %v2881 = vadd.f32 %v2871, %v277
  %v2882 = vadd.f32 %v2872, %v277
  %v2883 = vadd.f32 %v2873, %v277
  %v2884 = vadd.f32 %v2874, %v277
  %v2885 = vadd.f32 %v2875, %v282
  %v2886 = vadd.f32 %v2876, %v282
  %v2887 = vadd.f32 %v2877, %v282
  %v2888 = vadd.f32 %v2878, %v282
  %v2889 = vadd.f32 %v2879, %v282
  %v2890 = vmax.f32 %v2880, 0.0
  %v2891 = vmax.f32 %v2881, 0.0
  %v2892 = vmax.f32 %v2882, 0.0
  %v2893 = vmax.f32 %v2883, 0.0
  %v2894 = vmax.f32 %v2884, 0.0
  %v2895 = vmax.f32 %v2885, 0.0
  %v2896 = vmax.f32 %v2886, 0.0
  %v2897 = vmax.f32 %v2887, 0.0
  %v2898 = vmax.f32 %v2888, 0.0
  %v2899 = vmax.f32 %v2889, 0.0
  %s2900 = scalar_lea.vmem %s1842, 18
  %v2901 = vld [vmem:[%s2900] ss:$4 sm:$0x1f]
  %v2902 = vmul.f32 %v24, %v2770
  %v2903 = vmul.f32 %v24, %v2774
  %v2904 = vmul.f32 %v24, %v2778
  %v2905 = vmul.f32 %v24, %v2782
  %v2906 = vmul.f32 %v24, %v2786
  %v2907 = vmul.f32 %v29, %v2770
  %v2908 = vmul.f32 %v29, %v2774
  %v2909 = vmul.f32 %v29, %v2778
  %v2910 = vmul.f32 %v29, %v2782
  %v2911 = vmul.f32 %v29, %v2786
  %v2912 = vmul.f32 %v69, %v2770
  %v2913 = vmul.f32 %v69, %v2774
  %v2914 = vmul.f32 %v69, %v2778
  %v2915 = vmul.f32 %v69, %v2782
  %v2916 = vmul.f32 %v69, %v2786
  %v2917 = vmul.f32 %v73, %v2770
  %v2918 = vmul.f32 %v73, %v2774
  %v2919 = vmul.f32 %v73, %v2778
  %v2920 = vmul.f32 %v73, %v2782
  %v2921 = vmul.f32 %v73, %v2786
  %2932 = vrot.lane.b32.xlu0 %v2912, 127
  %v2933 = vpop.permute.xlu0 %2932
  %2934 = vrot.lane.b32.xlu0 %v2913, 127
  %v2935 = vpop.permute.xlu0 %2934
  %2936 = vrot.lane.b32.xlu0 %v2914, 127
  %v2937 = vpop.permute.xlu0 %2936
  %2938 = vrot.lane.b32.xlu0 %v2915, 127
  %v2939 = vpop.permute.xlu0 %2938
  %2940 = vrot.lane.b32.xlu0 %v2916, 127
  %v2941 = vpop.permute.xlu0 %2940
  %2942 = vrot.lane.b32.xlu0 %v2917, 127
  %v2943 = vpop.permute.xlu0 %2942
  %2944 = vrot.lane.b32.xlu0 %v2918, 127
  %v2945 = vpop.permute.xlu0 %2944
  %2946 = vrot.lane.b32.xlu0 %v2919, 127
  %v2947 = vpop.permute.xlu0 %2946
  %2948 = vrot.lane.b32.xlu0 %v2920, 127
  %v2949 = vpop.permute.xlu0 %2948
  %2950 = vrot.lane.b32.xlu0 %v2921, 127
  %v2951 = vpop.permute.xlu0 %2950
  %v2952 = vsel %vm115, %v2933, %v2935
  %v2953 = vsel %vm115, %v2935, %v2937
  %v2954 = vsel %vm115, %v2937, %v2939
  %v2955 = vsel %vm115, %v2939, %v2941
  %v2956 = vsel %vm115, %v2943, %v2945
  %v2957 = vsel %vm115, %v2945, %v2947
  %v2958 = vsel %vm115, %v2947, %v2949
  %v2959 = vsel %vm115, %v2949, %v2951
  %v2970 = vadd.f32 %v2902, %v2952
  %v2971 = vadd.f32 %v2903, %v2953
  %v2972 = vadd.f32 %v2904, %v2954
  %v2973 = vadd.f32 %v2905, %v2955
  %v2974 = vadd.f32 %v2906, %v2941
  %v2975 = vadd.f32 %v2907, %v2956
  %v2976 = vadd.f32 %v2908, %v2957
  %v2977 = vadd.f32 %v2909, %v2958
  %v2978 = vadd.f32 %v2910, %v2959
  %v2979 = vadd.f32 %v2911, %v2951
  %v2981 = vlaneseq
  %v2982 = vshrl.u32 %v2981, 7
  %v2983 = vsub.s32 0, %v2982
  %v2984 = vrot.slane %v2901, %v2983
  %v2985 = vlaneseq
  %v2986 = vshrl.u32 %v2985, 7
  %v2987 = vsub.s32 1, %v2986
  %v2988 = vrot.slane %v2901, %v2987
  %v2989 = vlaneseq
  %v2990 = vshrl.u32 %v2989, 7
  %v2991 = vsub.s32 2, %v2990
  %v2992 = vrot.slane %v2901, %v2991
  %v2993 = vlaneseq
  %v2994 = vshrl.u32 %v2993, 7
  %v2995 = vsub.s32 3, %v2994
  %v2996 = vrot.slane %v2901, %v2995
  %v2997 = vlaneseq
  %v2998 = vshrl.u32 %v2997, 7
  %v2999 = vsub.s32 4, %v2998
  %v3000 = vrot.slane %v2901, %v2999
  %v3006 = vmul.f32 %v146, %v2984
  %v3007 = vmul.f32 %v146, %v2988
  %v3008 = vmul.f32 %v146, %v2992
  %v3009 = vmul.f32 %v146, %v2996
  %v3010 = vmul.f32 %v146, %v3000
  %v3011 = vmul.f32 %v150, %v2984
  %v3012 = vmul.f32 %v150, %v2988
  %v3013 = vmul.f32 %v150, %v2992
  %v3014 = vmul.f32 %v150, %v2996
  %v3015 = vmul.f32 %v150, %v3000
  %v3016 = vadd.f32 %v2970, %v3006
  %v3017 = vadd.f32 %v2971, %v3007
  %v3018 = vadd.f32 %v2972, %v3008
  %v3019 = vadd.f32 %v2973, %v3009
  %v3020 = vadd.f32 %v2974, %v3010
  %v3021 = vadd.f32 %v2975, %v3011
  %v3022 = vadd.f32 %v2976, %v3012
  %v3023 = vadd.f32 %v2977, %v3013
  %v3024 = vadd.f32 %v2978, %v3014
  %v3025 = vadd.f32 %v2979, %v3015
  %v3026 = vmul.f32 %v200, %v2984
  %v3027 = vmul.f32 %v200, %v2988
  %v3028 = vmul.f32 %v200, %v2992
  %v3029 = vmul.f32 %v200, %v2996
  %v3030 = vmul.f32 %v200, %v3000
  %v3031 = vmul.f32 %v204, %v2984
  %v3032 = vmul.f32 %v204, %v2988
  %v3033 = vmul.f32 %v204, %v2992
  %v3034 = vmul.f32 %v204, %v2996
  %v3035 = vmul.f32 %v204, %v3000
  %3046 = vrot.lane.b32.xlu0 %v3026, 127
  %v3047 = vpop.permute.xlu0 %3046
  %3048 = vrot.lane.b32.xlu0 %v3027, 127
  %v3049 = vpop.permute.xlu0 %3048
  %3050 = vrot.lane.b32.xlu0 %v3028, 127
  %v3051 = vpop.permute.xlu0 %3050
  %3052 = vrot.lane.b32.xlu0 %v3029, 127
  %v3053 = vpop.permute.xlu0 %3052
  %3054 = vrot.lane.b32.xlu0 %v3030, 127
  %v3055 = vpop.permute.xlu0 %3054
  %3056 = vrot.lane.b32.xlu0 %v3031, 127
  %v3057 = vpop.permute.xlu0 %3056
  %3058 = vrot.lane.b32.xlu0 %v3032, 127
  %v3059 = vpop.permute.xlu0 %3058
  %3060 = vrot.lane.b32.xlu0 %v3033, 127
  %v3061 = vpop.permute.xlu0 %3060
  %3062 = vrot.lane.b32.xlu0 %v3034, 127
  %v3063 = vpop.permute.xlu0 %3062
  %3064 = vrot.lane.b32.xlu0 %v3035, 127
  %v3065 = vpop.permute.xlu0 %3064
  %v3066 = vsel %vm115, %v3047, %v3049
  %v3067 = vsel %vm115, %v3049, %v3051
  %v3068 = vsel %vm115, %v3051, %v3053
  %v3069 = vsel %vm115, %v3053, %v3055
  %v3070 = vsel %vm115, %v3057, %v3059
  %v3071 = vsel %vm115, %v3059, %v3061
  %v3072 = vsel %vm115, %v3061, %v3063
  %v3073 = vsel %vm115, %v3063, %v3065
  %v3084 = vadd.f32 %v3016, %v3066
  %v3085 = vadd.f32 %v3017, %v3067
  %v3086 = vadd.f32 %v3018, %v3068
  %v3087 = vadd.f32 %v3019, %v3069
  %v3088 = vadd.f32 %v3020, %v3055
  %v3089 = vadd.f32 %v3021, %v3070
  %v3090 = vadd.f32 %v3022, %v3071
  %v3091 = vadd.f32 %v3023, %v3072
  %v3092 = vadd.f32 %v3024, %v3073
  %v3093 = vadd.f32 %v3025, %v3065
  %v3094 = vadd.f32 %v3084, %v277
  %v3095 = vadd.f32 %v3085, %v277
  %v3096 = vadd.f32 %v3086, %v277
  %v3097 = vadd.f32 %v3087, %v277
  %v3098 = vadd.f32 %v3088, %v277
  %v3099 = vadd.f32 %v3089, %v282
  %v3100 = vadd.f32 %v3090, %v282
  %v3101 = vadd.f32 %v3091, %v282
  %v3102 = vadd.f32 %v3092, %v282
  %v3103 = vadd.f32 %v3093, %v282
  %v3104 = vmax.f32 %v3094, 0.0
  %v3105 = vmax.f32 %v3095, 0.0
  %v3106 = vmax.f32 %v3096, 0.0
  %v3107 = vmax.f32 %v3097, 0.0
  %v3108 = vmax.f32 %v3098, 0.0
  %v3109 = vmax.f32 %v3099, 0.0
  %v3110 = vmax.f32 %v3100, 0.0
  %v3111 = vmax.f32 %v3101, 0.0
  %v3112 = vmax.f32 %v3102, 0.0
  %v3113 = vmax.f32 %v3103, 0.0
  %v3114 = vmax.f32 %v2890, %v3104
  %v3115 = vmax.f32 %v2891, %v3105
  %v3116 = vmax.f32 %v2892, %v3106
  %v3117 = vmax.f32 %v2893, %v3107
  %v3118 = vmax.f32 %v2894, %v3108
  %v3119 = vmax.f32 %v2895, %v3109
  %v3120 = vmax.f32 %v2896, %v3110
  %v3121 = vmax.f32 %v2897, %v3111
  %v3122 = vmax.f32 %v2898, %v3112
  %v3123 = vmax.f32 %v2899, %v3113
  %3134 = vrot.lane.b32.xlu0 %v3114, 127
  %v3135 = vpop.permute.xlu0 %3134
  %3136 = vrot.lane.b32.xlu0 %v3115, 127
  %v3137 = vpop.permute.xlu0 %3136
  %3138 = vrot.lane.b32.xlu0 %v3116, 127
  %v3139 = vpop.permute.xlu0 %3138
  %3140 = vrot.lane.b32.xlu0 %v3117, 127
  %v3141 = vpop.permute.xlu0 %3140
  %3142 = vrot.lane.b32.xlu0 %v3118, 127
  %v3143 = vpop.permute.xlu0 %3142
  %3144 = vrot.lane.b32.xlu0 %v3119, 127
  %v3145 = vpop.permute.xlu0 %3144
  %3146 = vrot.lane.b32.xlu0 %v3120, 127
  %v3147 = vpop.permute.xlu0 %3146
  %3148 = vrot.lane.b32.xlu0 %v3121, 127
  %v3149 = vpop.permute.xlu0 %3148
  %3150 = vrot.lane.b32.xlu0 %v3122, 127
  %v3151 = vpop.permute.xlu0 %3150
  %3152 = vrot.lane.b32.xlu0 %v3123, 127
  %v3153 = vpop.permute.xlu0 %3152
  %v3154 = vsel %vm115, %v3135, %v3137
  %v3155 = vsel %vm115, %v3137, %v3139
  %v3156 = vsel %vm115, %v3139, %v3141
  %v3157 = vsel %vm115, %v3141, %v3143
  %v3158 = vsel %vm115, %v3145, %v3147
  %v3159 = vsel %vm115, %v3147, %v3149
  %v3160 = vsel %vm115, %v3149, %v3151
  %v3161 = vsel %vm115, %v3151, %v3153
  %v3170 = vmax.f32 %v3114, %v3154
  %v3171 = vmax.f32 %v3115, %v3155
  %v3172 = vmax.f32 %v3116, %v3156
  %v3173 = vmax.f32 %v3117, %v3157
  %v3174 = vmax.f32 %v3119, %v3158
  %v3175 = vmax.f32 %v3120, %v3159
  %v3176 = vmax.f32 %v3121, %v3160
  %v3177 = vmax.f32 %v3122, %v3161
  %3178 = vst [vmem:[%s2362 + $0x20] sm:$0xff] %v3170
  %3179 = vst [vmem:[%s2362 + $0x28] sm:$0xff] %v3171
  %3180 = vst [vmem:[%s2362 + $0x30] sm:$0xff] %v3172
  %3181 = vst [vmem:[%s2362 + $0x38] sm:$0xff] %v3173
  %3182 = vst [vmem:[%s2362 + $0x68] sm:$0xff] %v3174
  %3183 = vst [vmem:[%s2362 + $0x70] sm:$0xff] %v3175
  %3184 = vst [vmem:[%s2362 + $0x78] sm:$0xff] %v3176
  %3185 = vst [vmem:[%s2362 + $0x80] sm:$0xff] %v3177
  %s3186 = scalar_lea.vmem %s1842, 19
  %v3187 = vld [vmem:[%s3186] ss:$4 sm:$0x1f]
  %v3188 = vmul.f32 %v24, %v2984
  %v3189 = vmul.f32 %v24, %v2988
  %v3190 = vmul.f32 %v24, %v2992
  %v3191 = vmul.f32 %v24, %v2996
  %v3192 = vmul.f32 %v24, %v3000
  %v3193 = vmul.f32 %v29, %v2984
  %v3194 = vmul.f32 %v29, %v2988
  %v3195 = vmul.f32 %v29, %v2992
  %v3196 = vmul.f32 %v29, %v2996
  %v3197 = vmul.f32 %v29, %v3000
  %v3198 = vmul.f32 %v69, %v2984
  %v3199 = vmul.f32 %v69, %v2988
  %v3200 = vmul.f32 %v69, %v2992
  %v3201 = vmul.f32 %v69, %v2996
  %v3202 = vmul.f32 %v69, %v3000
  %v3203 = vmul.f32 %v73, %v2984
  %v3204 = vmul.f32 %v73, %v2988
  %v3205 = vmul.f32 %v73, %v2992
  %v3206 = vmul.f32 %v73, %v2996
  %v3207 = vmul.f32 %v73, %v3000
  %3218 = vrot.lane.b32.xlu0 %v3198, 127
  %v3219 = vpop.permute.xlu0 %3218
  %3220 = vrot.lane.b32.xlu0 %v3199, 127
  %v3221 = vpop.permute.xlu0 %3220
  %3222 = vrot.lane.b32.xlu0 %v3200, 127
  %v3223 = vpop.permute.xlu0 %3222
  %3224 = vrot.lane.b32.xlu0 %v3201, 127
  %v3225 = vpop.permute.xlu0 %3224
  %3226 = vrot.lane.b32.xlu0 %v3202, 127
  %v3227 = vpop.permute.xlu0 %3226
  %3228 = vrot.lane.b32.xlu0 %v3203, 127
  %v3229 = vpop.permute.xlu0 %3228
  %3230 = vrot.lane.b32.xlu0 %v3204, 127
  %v3231 = vpop.permute.xlu0 %3230
  %3232 = vrot.lane.b32.xlu0 %v3205, 127
  %v3233 = vpop.permute.xlu0 %3232
  %3234 = vrot.lane.b32.xlu0 %v3206, 127
  %v3235 = vpop.permute.xlu0 %3234
  %3236 = vrot.lane.b32.xlu0 %v3207, 127
  %v3237 = vpop.permute.xlu0 %3236
  %v3238 = vsel %vm115, %v3219, %v3221
  %v3239 = vsel %vm115, %v3221, %v3223
  %v3240 = vsel %vm115, %v3223, %v3225
  %v3241 = vsel %vm115, %v3225, %v3227
  %v3242 = vsel %vm115, %v3229, %v3231
  %v3243 = vsel %vm115, %v3231, %v3233
  %v3244 = vsel %vm115, %v3233, %v3235
  %v3245 = vsel %vm115, %v3235, %v3237
  %v3256 = vadd.f32 %v3188, %v3238
  %v3257 = vadd.f32 %v3189, %v3239
  %v3258 = vadd.f32 %v3190, %v3240
  %v3259 = vadd.f32 %v3191, %v3241
  %v3260 = vadd.f32 %v3192, %v3227
  %v3261 = vadd.f32 %v3193, %v3242
  %v3262 = vadd.f32 %v3194, %v3243
  %v3263 = vadd.f32 %v3195, %v3244
  %v3264 = vadd.f32 %v3196, %v3245
  %v3265 = vadd.f32 %v3197, %v3237
  %v3267 = vlaneseq
  %v3268 = vshrl.u32 %v3267, 7
  %v3269 = vsub.s32 0, %v3268
  %v3270 = vrot.slane %v3187, %v3269
  %v3271 = vlaneseq
  %v3272 = vshrl.u32 %v3271, 7
  %v3273 = vsub.s32 1, %v3272
  %v3274 = vrot.slane %v3187, %v3273
  %v3275 = vlaneseq
  %v3276 = vshrl.u32 %v3275, 7
  %v3277 = vsub.s32 2, %v3276
  %v3278 = vrot.slane %v3187, %v3277
  %v3279 = vlaneseq
  %v3280 = vshrl.u32 %v3279, 7
  %v3281 = vsub.s32 3, %v3280
  %v3282 = vrot.slane %v3187, %v3281
  %v3283 = vlaneseq
  %v3284 = vshrl.u32 %v3283, 7
  %v3285 = vsub.s32 4, %v3284
  %v3286 = vrot.slane %v3187, %v3285
  %v3292 = vmul.f32 %v146, %v3270
  %v3293 = vmul.f32 %v146, %v3274
  %v3294 = vmul.f32 %v146, %v3278
  %v3295 = vmul.f32 %v146, %v3282
  %v3296 = vmul.f32 %v146, %v3286
  %v3297 = vmul.f32 %v150, %v3270
  %v3298 = vmul.f32 %v150, %v3274
  %v3299 = vmul.f32 %v150, %v3278
  %v3300 = vmul.f32 %v150, %v3282
  %v3301 = vmul.f32 %v150, %v3286
  %v3302 = vadd.f32 %v3256, %v3292
  %v3303 = vadd.f32 %v3257, %v3293
  %v3304 = vadd.f32 %v3258, %v3294
  %v3305 = vadd.f32 %v3259, %v3295
  %v3306 = vadd.f32 %v3260, %v3296
  %v3307 = vadd.f32 %v3261, %v3297
  %v3308 = vadd.f32 %v3262, %v3298
  %v3309 = vadd.f32 %v3263, %v3299
  %v3310 = vadd.f32 %v3264, %v3300
  %v3311 = vadd.f32 %v3265, %v3301
  %v3312 = vmul.f32 %v200, %v3270
  %v3313 = vmul.f32 %v200, %v3274
  %v3314 = vmul.f32 %v200, %v3278
  %v3315 = vmul.f32 %v200, %v3282
  %v3316 = vmul.f32 %v200, %v3286
  %v3317 = vmul.f32 %v204, %v3270
  %v3318 = vmul.f32 %v204, %v3274
  %v3319 = vmul.f32 %v204, %v3278
  %v3320 = vmul.f32 %v204, %v3282
  %v3321 = vmul.f32 %v204, %v3286
  %3332 = vrot.lane.b32.xlu0 %v3312, 127
  %v3333 = vpop.permute.xlu0 %3332
  %3334 = vrot.lane.b32.xlu0 %v3313, 127
  %v3335 = vpop.permute.xlu0 %3334
  %3336 = vrot.lane.b32.xlu0 %v3314, 127
  %v3337 = vpop.permute.xlu0 %3336
  %3338 = vrot.lane.b32.xlu0 %v3315, 127
  %v3339 = vpop.permute.xlu0 %3338
  %3340 = vrot.lane.b32.xlu0 %v3316, 127
  %v3341 = vpop.permute.xlu0 %3340
  %3342 = vrot.lane.b32.xlu0 %v3317, 127
  %v3343 = vpop.permute.xlu0 %3342
  %3344 = vrot.lane.b32.xlu0 %v3318, 127
  %v3345 = vpop.permute.xlu0 %3344
  %3346 = vrot.lane.b32.xlu0 %v3319, 127
  %v3347 = vpop.permute.xlu0 %3346
  %3348 = vrot.lane.b32.xlu0 %v3320, 127
  %v3349 = vpop.permute.xlu0 %3348
  %3350 = vrot.lane.b32.xlu0 %v3321, 127
  %v3351 = vpop.permute.xlu0 %3350
  %v3352 = vsel %vm115, %v3333, %v3335
  %v3353 = vsel %vm115, %v3335, %v3337
  %v3354 = vsel %vm115, %v3337, %v3339
  %v3355 = vsel %vm115, %v3339, %v3341
  %v3356 = vsel %vm115, %v3343, %v3345
  %v3357 = vsel %vm115, %v3345, %v3347
  %v3358 = vsel %vm115, %v3347, %v3349
  %v3359 = vsel %vm115, %v3349, %v3351
  %v3370 = vadd.f32 %v3302, %v3352
  %v3371 = vadd.f32 %v3303, %v3353
  %v3372 = vadd.f32 %v3304, %v3354
  %v3373 = vadd.f32 %v3305, %v3355
  %v3374 = vadd.f32 %v3306, %v3341
  %v3375 = vadd.f32 %v3307, %v3356
  %v3376 = vadd.f32 %v3308, %v3357
  %v3377 = vadd.f32 %v3309, %v3358
  %v3378 = vadd.f32 %v3310, %v3359
  %v3379 = vadd.f32 %v3311, %v3351
  %v3380 = vadd.f32 %v3370, %v277
  %v3381 = vadd.f32 %v3371, %v277
  %v3382 = vadd.f32 %v3372, %v277
  %v3383 = vadd.f32 %v3373, %v277
  %v3384 = vadd.f32 %v3374, %v277
  %v3385 = vadd.f32 %v3375, %v282
  %v3386 = vadd.f32 %v3376, %v282
  %v3387 = vadd.f32 %v3377, %v282
  %v3388 = vadd.f32 %v3378, %v282
  %v3389 = vadd.f32 %v3379, %v282
  %v3390 = vmax.f32 %v3380, 0.0
  %v3391 = vmax.f32 %v3381, 0.0
  %v3392 = vmax.f32 %v3382, 0.0
  %v3393 = vmax.f32 %v3383, 0.0
  %v3394 = vmax.f32 %v3384, 0.0
  %v3395 = vmax.f32 %v3385, 0.0
  %v3396 = vmax.f32 %v3386, 0.0
  %v3397 = vmax.f32 %v3387, 0.0
  %v3398 = vmax.f32 %v3388, 0.0
  %v3399 = vmax.f32 %v3389, 0.0
  %v3400 = vmax.f32 %v3104, %v3390
  %v3401 = vmax.f32 %v3105, %v3391
  %v3402 = vmax.f32 %v3106, %v3392
  %v3403 = vmax.f32 %v3107, %v3393
  %v3404 = vmax.f32 %v3108, %v3394
  %v3405 = vmax.f32 %v3109, %v3395
  %v3406 = vmax.f32 %v3110, %v3396
  %v3407 = vmax.f32 %v3111, %v3397
  %v3408 = vmax.f32 %v3112, %v3398
  %v3409 = vmax.f32 %v3113, %v3399
  %3420 = vrot.lane.b32.xlu0 %v3400, 127
  %v3421 = vpop.permute.xlu0 %3420
  %3422 = vrot.lane.b32.xlu0 %v3401, 127
  %v3423 = vpop.permute.xlu0 %3422
  %3424 = vrot.lane.b32.xlu0 %v3402, 127
  %v3425 = vpop.permute.xlu0 %3424
  %3426 = vrot.lane.b32.xlu0 %v3403, 127
  %v3427 = vpop.permute.xlu0 %3426
  %3428 = vrot.lane.b32.xlu0 %v3404, 127
  %v3429 = vpop.permute.xlu0 %3428
  %3430 = vrot.lane.b32.xlu0 %v3405, 127
  %v3431 = vpop.permute.xlu0 %3430
  %3432 = vrot.lane.b32.xlu0 %v3406, 127
  %v3433 = vpop.permute.xlu0 %3432
  %3434 = vrot.lane.b32.xlu0 %v3407, 127
  %v3435 = vpop.permute.xlu0 %3434
  %3436 = vrot.lane.b32.xlu0 %v3408, 127
  %v3437 = vpop.permute.xlu0 %3436
  %3438 = vrot.lane.b32.xlu0 %v3409, 127
  %v3439 = vpop.permute.xlu0 %3438
  %v3440 = vsel %vm115, %v3421, %v3423
  %v3441 = vsel %vm115, %v3423, %v3425
  %v3442 = vsel %vm115, %v3425, %v3427
  %v3443 = vsel %vm115, %v3427, %v3429
  %v3444 = vsel %vm115, %v3431, %v3433
  %v3445 = vsel %vm115, %v3433, %v3435
  %v3446 = vsel %vm115, %v3435, %v3437
  %v3447 = vsel %vm115, %v3437, %v3439
  %v3456 = vmax.f32 %v3400, %v3440
  %v3457 = vmax.f32 %v3401, %v3441
  %v3458 = vmax.f32 %v3402, %v3442
  %v3459 = vmax.f32 %v3403, %v3443
  %v3460 = vmax.f32 %v3405, %v3444
  %v3461 = vmax.f32 %v3406, %v3445
  %v3462 = vmax.f32 %v3407, %v3446
  %v3463 = vmax.f32 %v3408, %v3447
  %3464 = vst [vmem:[%s2649 + $0x20] sm:$0xff] %v3456
  %3465 = vst [vmem:[%s2649 + $0x28] sm:$0xff] %v3457
  %3466 = vst [vmem:[%s2649 + $0x30] sm:$0xff] %v3458
  %3467 = vst [vmem:[%s2649 + $0x38] sm:$0xff] %v3459
  %3468 = vst [vmem:[%s2649 + $0x68] sm:$0xff] %v3460
  %3469 = vst [vmem:[%s2649 + $0x70] sm:$0xff] %v3461
  %3470 = vst [vmem:[%s2649 + $0x78] sm:$0xff] %v3462
  %3471 = vst [vmem:[%s2649 + $0x80] sm:$0xff] %v3463
  %v3472 = vld [vmem:[%s1842 + $0x20] sm:$0x1]
  %v3473 = vld [vmem:[%s1842 + $0x21] sm:$0x1]
  %v3474 = vlaneseq
  %v3475 = vshrl.u32 %v3474, 7
  %v3476 = vsub.s32 0, %v3475
  %v3477 = vrot.slane %v3472, %v3476
  %v3478 = vmul.f32 %v24, %v3477
  %v3479 = vmul.f32 %v29, %v3477
  %v3480 = vmul.f32 %v69, %v3477
  %v3481 = vmul.f32 %v73, %v3477
  %3484 = vrot.lane.b32.xlu0 %v3480, 127
  %v3485 = vpop.permute.xlu0 %3484
  %3486 = vrot.lane.b32.xlu0 %v3481, 127
  %v3487 = vpop.permute.xlu0 %3486
  %v3490 = vadd.f32 %v3478, %v3485
  %v3491 = vadd.f32 %v3479, %v3487
  %v3492 = vlaneseq
  %v3493 = vshrl.u32 %v3492, 7
  %v3494 = vsub.s32 0, %v3493
  %v3495 = vrot.slane %v3473, %v3494
  %v3496 = vmul.f32 %v146, %v3495
  %v3497 = vmul.f32 %v150, %v3495
  %v3498 = vadd.f32 %v3490, %v3496
  %v3499 = vadd.f32 %v3491, %v3497
  %v3500 = vmul.f32 %v200, %v3495
  %v3501 = vmul.f32 %v204, %v3495
  %3504 = vrot.lane.b32.xlu0 %v3500, 127
  %v3505 = vpop.permute.xlu0 %3504
  %3506 = vrot.lane.b32.xlu0 %v3501, 127
  %v3507 = vpop.permute.xlu0 %3506
  %v3510 = vadd.f32 %v3498, %v3505
  %v3511 = vadd.f32 %v3499, %v3507
  %v3512 = vadd.f32 %v3510, %v277
  %v3513 = vadd.f32 %v3511, %v282
  %v3514 = vmax.f32 %v3512, 0.0
  %v3515 = vmax.f32 %v3513, 0.0
  %v3516 = vld [vmem:[%s1842 + $0x22] sm:$0x1]
  %v3517 = vmul.f32 %v24, %v3495
  %v3518 = vmul.f32 %v29, %v3495
  %v3519 = vmul.f32 %v69, %v3495
  %v3520 = vmul.f32 %v73, %v3495
  %3523 = vrot.lane.b32.xlu0 %v3519, 127
  %v3524 = vpop.permute.xlu0 %3523
  %3525 = vrot.lane.b32.xlu0 %v3520, 127
  %v3526 = vpop.permute.xlu0 %3525
  %v3529 = vadd.f32 %v3517, %v3524
  %v3530 = vadd.f32 %v3518, %v3526
  %v3531 = vlaneseq
  %v3532 = vshrl.u32 %v3531, 7
  %v3533 = vsub.s32 0, %v3532
  %v3534 = vrot.slane %v3516, %v3533
  %v3535 = vmul.f32 %v146, %v3534
  %v3536 = vmul.f32 %v150, %v3534
  %v3537 = vadd.f32 %v3529, %v3535
  %v3538 = vadd.f32 %v3530, %v3536
  %v3539 = vmul.f32 %v200, %v3534
  %v3540 = vmul.f32 %v204, %v3534
  %3543 = vrot.lane.b32.xlu0 %v3539, 127
  %v3544 = vpop.permute.xlu0 %3543
  %3545 = vrot.lane.b32.xlu0 %v3540, 127
  %v3546 = vpop.permute.xlu0 %3545
  %v3549 = vadd.f32 %v3537, %v3544
  %v3550 = vadd.f32 %v3538, %v3546
  %v3551 = vadd.f32 %v3549, %v277
  %v3552 = vadd.f32 %v3550, %v282
  %v3553 = vmax.f32 %v3551, 0.0
  %v3554 = vmax.f32 %v3552, 0.0
  %v3555 = vmax.f32 %v3514, %v3553
  %v3556 = vmax.f32 %v3515, %v3554
  %3559 = vrot.lane.b32.xlu0 %v3555, 127
  %v3560 = vpop.permute.xlu0 %3559
  %3561 = vrot.lane.b32.xlu0 %v3556, 127
  %v3562 = vpop.permute.xlu0 %3561
  %v3565 = vmax.f32 %v3555, %v3560
  %v3566 = vmax.f32 %v3556, %v3562
  %3567 = vst.msk [vmem:[%s2362 + $0x40] sm:$0xff] %vm1786, %v3565
  %3568 = vst.msk [vmem:[%s2362 + $0x88] sm:$0xff] %vm1786, %v3566
  %v3569 = vld [vmem:[%s1842 + $0x23] sm:$0x1]
  %v3570 = vmul.f32 %v24, %v3534
  %v3571 = vmul.f32 %v29, %v3534
  %v3572 = vmul.f32 %v69, %v3534
  %v3573 = vmul.f32 %v73, %v3534
  %3576 = vrot.lane.b32.xlu0 %v3572, 127
  %v3577 = vpop.permute.xlu0 %3576
  %3578 = vrot.lane.b32.xlu0 %v3573, 127
  %v3579 = vpop.permute.xlu0 %3578
  %v3582 = vadd.f32 %v3570, %v3577
  %v3583 = vadd.f32 %v3571, %v3579
  %v3584 = vlaneseq
  %v3585 = vshrl.u32 %v3584, 7
  %v3586 = vsub.s32 0, %v3585
  %v3587 = vrot.slane %v3569, %v3586
  %v3588 = vmul.f32 %v146, %v3587
  %v3589 = vmul.f32 %v150, %v3587
  %v3590 = vadd.f32 %v3582, %v3588
  %v3591 = vadd.f32 %v3583, %v3589
  %v3592 = vmul.f32 %v200, %v3587
  %v3593 = vmul.f32 %v204, %v3587
  %3596 = vrot.lane.b32.xlu0 %v3592, 127
  %v3597 = vpop.permute.xlu0 %3596
  %3598 = vrot.lane.b32.xlu0 %v3593, 127
  %v3599 = vpop.permute.xlu0 %3598
  %v3602 = vadd.f32 %v3590, %v3597
  %v3603 = vadd.f32 %v3591, %v3599
  %v3604 = vadd.f32 %v3602, %v277
  %v3605 = vadd.f32 %v3603, %v282
  %v3606 = vmax.f32 %v3604, 0.0
  %v3607 = vmax.f32 %v3605, 0.0
  %v3608 = vmax.f32 %v3553, %v3606
  %v3609 = vmax.f32 %v3554, %v3607
  %3612 = vrot.lane.b32.xlu0 %v3608, 127
  %v3613 = vpop.permute.xlu0 %3612
  %3614 = vrot.lane.b32.xlu0 %v3609, 127
  %v3615 = vpop.permute.xlu0 %3614
  %v3618 = vmax.f32 %v3608, %v3613
  %v3619 = vmax.f32 %v3609, %v3615
  %3620 = vst.msk [vmem:[%s2649 + $0x40] sm:$0xff] %vm1786, %v3618
  %3621 = vst.msk [vmem:[%s2649 + $0x88] sm:$0xff] %vm1786, %v3619
  // Predicated region
  $region14: #{cnn_forward.1} parent=0 // pred_check
    _
  $region15: #{cnn_forward.1} parent=0 // pred_check_branch
    %3623 = sbr.rel (0) target = $region17
  $region16: #{cnn_forward.1} parent=0 // pred_region
    _
  $region17: #{cnn_forward.1} parent=0 // pred_fallthru
    _
  // Predicated region
  $region18: #{cnn_forward.1} parent=0 // pred_check
    _
  $region19: #{cnn_forward.1} parent=0 // pred_check_branch
    %3625 = sbr.rel (0) target = $region21
  $region20: #{cnn_forward.1} parent=0 // pred_region
    _
  $region21: #{cnn_forward.1} parent=0 // pred_fallthru
    _

</llo_original>
